<compile_context>
chip_gen: v7x
topology: tpu7x:2x2x1
jax: 0.10.0
libtpu: 0.0.40
codegen_flags: <defaults>
</compile_context>

<pallas_src>
import functools

import jax
import jax.numpy as jnp
from jax.experimental import pallas as pl
from jax.experimental.pallas import tpu as pltpu


def _layer_norm(h, gamma, beta, eps=1e-5):
    mu = jnp.mean(h, axis=-1, keepdims=True)
    var = jnp.mean((h - mu) ** 2, axis=-1, keepdims=True)
    return (h - mu) * jax.lax.rsqrt(var + eps) * gamma + beta


def _gelu_exact(x):
    # PyTorch nn.GELU default: 0.5 * x * (1 + erf(x / sqrt(2)))
    return 0.5 * x * (1.0 + jax.lax.erf(x * 0.7071067811865476))


def encoder_layer_kernel(x_ref,
                         g1_ref, be1_ref,
                         wqkv_ref, bqkv_ref,
                         g2_ref, be2_ref,
                         w1_ref, b1_ref, w2_ref, b2_ref,
                         o_ref,
                         attn_ref,
                         *, num_heads, d_k, seq_len, seqs_per_block,
                         compute_dtype, fused_qkv_2d):
    f32 = jnp.float32
    H = num_heads
    M = seqs_per_block * seq_len                       # rows handled by this grid step
    D = x_ref.shape[-1]
    cdt = compute_dtype

    x = x_ref[...].astype(f32)                         # (M, D)

    # ---- LayerNorm 1 (f32) ----
    h1 = _layer_norm(x, g1_ref[...], be1_ref[...])     # (M, D)
    h1c = h1.astype(cdt)

    # ---- Fused Q/K/V projection ----
    if fused_qkv_2d:
        # One full-width matmul: (M, D) x (D, 3D) -> (M, 3D).  Max MXU fill; no H-fold
        # broadcast of the LN output.  Heads are split with static lane slices + a
        # leading-axis stack (copy work only, no extra MXU FLOPs).
        qkv = jnp.dot(h1c, wqkv_ref[...].astype(cdt),
                      preferred_element_type=f32) + bqkv_ref[...]       # (M, 3D) f32

        def split_heads(t2d):                          # (M, D) -> (H, M, d_k)
            return jnp.stack([t2d[:, h * d_k:(h + 1) * d_k] for h in range(H)], axis=0)

        q = split_heads(qkv[:, 0 * D:1 * D])
        k = split_heads(qkv[:, 1 * D:2 * D])
        v = split_heads(qkv[:, 2 * D:3 * D])
    else:
        # Fallback: per-head batched projection with a 3*d_k-wide stacked RHS
        # (previously validated lowering pattern).
        hb = jnp.broadcast_to(h1c[None], (H, M, D))
        qkv = jnp.einsum("hmd,hdf->hmf", hb, wqkv_ref[...].astype(cdt),
                         preferred_element_type=f32) + bqkv_ref[...]    # (H, M, 3*d_k)
        q = qkv[..., 0 * d_k:1 * d_k]
        k = qkv[..., 1 * d_k:2 * d_k]
        v = qkv[..., 2 * d_k:3 * d_k]

    # ---- Attention scores ----
    s = jnp.einsum("hmd,hnd->hmn", q.astype(cdt), k.astype(cdt),
                   preferred_element_type=f32) * (1.0 / (d_k ** 0.5))   # (H, M, M)

    if seqs_per_block > 1:
        # Block-diagonal mask from two 1-D sequence-id vectors (2*M divides, not M*M).
        row = jax.lax.broadcasted_iota(jnp.int32, (M, 1), 0) // seq_len
        col = jax.lax.broadcasted_iota(jnp.int32, (1, M), 1) // seq_len
        s = jnp.where((row == col)[None], s, -1e30)

    # ---- Softmax (normalize AFTER P@V: M/d_k fewer multiplies) ----
    s = s - jnp.max(s, axis=-1, keepdims=True)
    p = jnp.exp(s)
    denom = jnp.sum(p, axis=-1, keepdims=True)                          # (H, M, 1)
    o = jnp.einsum("hmn,hnd->hmd", p.astype(cdt), v.astype(cdt),
                   preferred_element_type=f32)                          # (H, M, d_k)
    o = o * pl.reciprocal(denom, approx=True)                           # EUP reciprocal

    # ---- Head merge: lane-offset stores into an (M, D) VMEM scratch slab ----
    # (concat along features; replaces the old D x D identity-merge matmul)
    for h in range(H):
        attn_ref[:, h * d_k:(h + 1) * d_k] = o[h]
    attn = attn_ref[...]                                                # (M, D) f32

    # ---- residual onto LN1 output, then LayerNorm 2 ----
    h2 = _layer_norm(attn + h1, g2_ref[...], be2_ref[...])              # (M, D)

    # ---- MLP: Linear -> (Dropout) -> GELU -> Linear -> (Dropout) -> GELU ----
    z = jnp.dot(h2.astype(cdt), w1_ref[...].astype(cdt),
                preferred_element_type=f32) + b1_ref[...]
    z = _gelu_exact(z)
    z = jnp.dot(z.astype(cdt), w2_ref[...].astype(cdt),
                preferred_element_type=f32) + b2_ref[...]
    z = _gelu_exact(z)

    o_ref[...] = (z + h2).astype(o_ref.dtype)          # residual onto LN2 output


def prepare_params(params, num_heads, *, use_bf16, fused_qkv_2d):
    """Free (wrapper-side, XLA) re-layout of the weights for the kernel."""
    D = params["wq"].shape[0]
    H = num_heads
    d_k = D // H
    wdt = jnp.bfloat16 if use_bf16 else jnp.float32
    f32 = jnp.float32

    if fused_qkv_2d:
        # Full-width stacked QKV: (D, 3D) / (1, 3D), head-ordered columns inside each
        # of the q/k/v groups (same ordering as the reference head split).
        wqkv = jnp.concatenate([params["wq"], params["wk"], params["wv"]],
                               axis=1).astype(wdt)
        bqkv = jnp.concatenate([params["bq"], params["bk"], params["bv"]],
                               axis=1).astype(f32)
    else:
        def per_head(w):      # (D, D) [in, out] -> (H, D, d_k)
            return jnp.transpose(w.reshape(D, H, d_k), (1, 0, 2))

        wqkv = jnp.concatenate([per_head(params["wq"]), per_head(params["wk"]),
                                per_head(params["wv"])], axis=-1).astype(wdt)
        bqkv = jnp.concatenate([params["bq"].reshape(H, 1, d_k),
                                params["bk"].reshape(H, 1, d_k),
                                params["bv"].reshape(H, 1, d_k)], axis=-1).astype(f32)

    return dict(
        g1=params["g1"].astype(f32), be1=params["be1"].astype(f32),
        wqkv=wqkv, bqkv=bqkv,
        g2=params["g2"].astype(f32), be2=params["be2"].astype(f32),
        w1=params["w1"].astype(wdt), b1=params["b1"].astype(f32),
        w2=params["w2"].astype(wdt), b2=params["b2"].astype(f32),
    )


def _vmem_budget():
    """Generation-aware (VMEM-limit bytes, row-tile target)."""
    try:
        cap = int(pltpu.get_tpu_info().vmem_capacity_bytes)
    except Exception:
        cap = 64 * 1024 * 1024                 # conservative default (v7x-class)
    if cap <= 64 * 1024 * 1024:                # v7x: 64 MiB per TensorCore
        return 48 * 1024 * 1024, 256
    return 96 * 1024 * 1024, 512               # v5e / v6e: 128 MiB


def transformer_encoder_layer(x, params, *, num_heads, use_bf16=False,
                              seqs_per_block=None):
    B, N, D = x.shape
    H = num_heads
    assert D % H == 0, "dsize must be divisible by num_heads"
    d_k = D // H
    dff = params["w1"].shape[1]
    compute_dtype = jnp.bfloat16 if use_bf16 else jnp.float32
    vmem_limit, target_rows = _vmem_budget()

    if seqs_per_block is None:
        # Largest row tile whose (H, M, M) f32 score/prob pair fits in ~1/4 of VMEM.
        m_cap = max(N, int((vmem_limit / 4.0 / (8.0 * H)) ** 0.5))
        rows = min(target_rows, m_cap)
        seqs_per_block = max(1, min(B, rows // N))
        # Keep >= 2 grid steps when possible so both v7x TensorCores get work.
        if B > 1 and pl.cdiv(B, seqs_per_block) < 2:
            seqs_per_block = pl.cdiv(B, 2)
    seqs_per_block = max(1, min(seqs_per_block, B))

    # Pad the batch up to a multiple of seqs_per_block instead of shrinking the row
    # tile for an awkward B; padded sequences are independent (block-diag mask /
    # separate blocks) and their rows are dropped below.
    n_blocks = pl.cdiv(B, seqs_per_block)
    B_pad = n_blocks * seqs_per_block
    M = seqs_per_block * N
    grid = (n_blocks,)

    x_flat = x.reshape(B * N, D)
    if B_pad != B:
        x_flat = jnp.pad(x_flat, ((0, (B_pad - B) * N), (0, 0)))

    wbytes = 2 if use_bf16 else 4
    flops_step = 2 * M * D * (3 * D) + 4 * M * M * D + 4 * M * D * dff
    trans_step = H * M * M + M * (dff + D)
    weight_bytes = wbytes * (3 * D * D + 2 * D * dff) + 4 * (3 * D + dff + 5 * D)
    cost = pl.CostEstimate(
        flops=int(grid[0] * flops_step),
        transcendentals=int(grid[0] * trans_step),
        # Weights are grid-invariant: count them once, plus the streamed x / out rows.
        bytes_accessed=int(2 * B_pad * N * D * x.dtype.itemsize + weight_bytes),
    )

    def build(fused_qkv_2d, single_buffer_weights):
        p = prepare_params(params, H, use_bf16=use_bf16, fused_qkv_2d=fused_qkv_2d)
        wkw = dict(pipeline_mode=pl.Buffered(1)) if single_buffer_weights else {}

        def full(shape):
            # Grid-invariant block: constant index map (+ single buffering if requested).
            return pl.BlockSpec(shape, lambda i: (0,) * len(shape), **wkw)

        wqkv_shape = (D, 3 * D) if fused_qkv_2d else (H, D, 3 * d_k)
        bqkv_shape = (1, 3 * D) if fused_qkv_2d else (H, 1, 3 * d_k)

        kernel = functools.partial(
            encoder_layer_kernel, num_heads=H, d_k=d_k, seq_len=N,
            seqs_per_block=seqs_per_block, compute_dtype=compute_dtype,
            fused_qkv_2d=fused_qkv_2d)

        out = pl.pallas_call(
            kernel,
            out_shape=jax.ShapeDtypeStruct((B_pad * N, D), x.dtype),
            grid_spec=pltpu.PrefetchScalarGridSpec(
                num_scalar_prefetch=0,
                grid=grid,
                in_specs=[
                    pl.BlockSpec((M, D), lambda i: (i, 0)),   # x rows (whole sequences)
                    full((1, D)), full((1, D)),               # ln1 gamma, beta
                    full(wqkv_shape), full(bqkv_shape),       # fused QKV weight / bias
                    full((1, D)), full((1, D)),               # ln2 gamma, beta
                    full((D, dff)), full((1, dff)),           # W1, b1
                    full((dff, D)), full((1, D)),             # W2, b2
                ],
                out_specs=pl.BlockSpec((M, D), lambda i: (i, 0)),
                scratch_shapes=[pltpu.VMEM((M, D), jnp.float32)],   # head-merge slab
            ),
            compiler_params=pltpu.CompilerParams(
                dimension_semantics=("parallel",),
                vmem_limit_bytes=vmem_limit,
            ),
            cost_estimate=cost,
        )(x_flat, p["g1"], p["be1"], p["wqkv"], p["bqkv"],
          p["g2"], p["be2"], p["w1"], p["b1"], p["w2"], p["b2"])
        return jax.block_until_ready(out)

    # Attempt ladder: full-featured first, then progressively more conservative
    # (guarantees a clean run even if pipeline_mode=Buffered(1) or the fused 2-D QKV
    # lowering is unavailable in the installed Pallas/Mosaic).
    attempts = ((True, True), (True, False), (False, False))
    out_flat, err = None, None
    for fused, single_buf in attempts:
        try:
            out_flat = build(fused, single_buf)
            break
        except Exception as e:          # fall back to the next configuration
            err = e
    if out_flat is None:
        raise err

    return out_flat[:B * N].reshape(B, N, D)


def reference(x, params, *, num_heads):
    """Pure-JAX reference with the exact semantics of the PyTorch module."""
    B, N, D = x.shape
    d_k = D // num_heads
    h = _layer_norm(x, params["g1"], params["be1"])
    q = h @ params["wq"] + params["bq"]
    k = h @ params["wk"] + params["bk"]
    v = h @ params["wv"] + params["bv"]
    q = q.reshape(B, N, num_heads, d_k).transpose(0, 2, 1, 3)
    k = k.reshape(B, N, num_heads, d_k).transpose(0, 2, 1, 3)
    v = v.reshape(B, N, num_heads, d_k).transpose(0, 2, 1, 3)
    attn = jnp.einsum("bhnd,bhmd->bhnm", q, k) / (d_k ** 0.5)
    attn = jax.nn.softmax(attn, axis=-1)
    o = jnp.einsum("bhnm,bhmd->bhnd", attn, v).transpose(0, 2, 1, 3).reshape(B, N, D)
    h = o + h
    h2 = _layer_norm(h, params["g2"], params["be2"])
    z = _gelu_exact(h2 @ params["w1"] + params["b1"])
    z = _gelu_exact(z @ params["w2"] + params["b2"])
    return z + h2


if __name__ == "__main__":
    # Small shapes consistent with the module: B=2, N(seq)=8, dsize=32, heads=4, dff=64
    B, N, D, H, DFF = 2, 8, 32, 4, 64
    key = jax.random.PRNGKey(0)
    ks = jax.random.split(key, 10)

    params = {
        "g1": jnp.ones((1, D), jnp.float32) + 0.01 * jax.random.normal(ks[0], (1, D)),
        "be1": jnp.zeros((1, D), jnp.float32),
        "g2": jnp.ones((1, D), jnp.float32) + 0.01 * jax.random.normal(ks[1], (1, D)),
        "be2": jnp.zeros((1, D), jnp.float32),
        # Attention projections, stored as (in, out) so y = x @ W + b.
        "wq": 0.05 * jax.random.normal(ks[2], (D, D), jnp.float32),
        "bq": jnp.zeros((1, D), jnp.float32),
        "wk": 0.05 * jax.random.normal(ks[3], (D, D), jnp.float32),
        "bk": jnp.zeros((1, D), jnp.float32),
        "wv": 0.05 * jax.random.normal(ks[4], (D, D), jnp.float32),
        "bv": jnp.zeros((1, D), jnp.float32),
        # MLP
        "w1": 0.05 * jax.random.normal(ks[5], (D, DFF), jnp.float32),
        "b1": 0.01 * jax.random.normal(ks[6], (1, DFF), jnp.float32),
        "w2": 0.05 * jax.random.normal(ks[7], (DFF, D), jnp.float32),
        "b2": jnp.zeros((1, D), jnp.float32),
    }

    x = jax.random.normal(ks[8], (B, N, D), jnp.float32)
    ref = reference(x, params, num_heads=H)

    # f32 path (default heuristics): strict check (approx softmax reciprocal only).
    out = transformer_encoder_layer(x, params, num_heads=H)
    out = jax.block_until_ready(out)
    assert out.shape == (B, N, D)
    assert jnp.allclose(out, ref, rtol=5e-3, atol=5e-3), "f32 kernel mismatch vs reference"

    # Multi-sequence row tile: exercises the block-diagonal mask path.
    out_blk = transformer_encoder_layer(x, params, num_heads=H, seqs_per_block=2)
    out_blk = jax.block_until_ready(out_blk)
    assert jnp.allclose(out_blk, ref, rtol=5e-3, atol=5e-3), "block-diag path mismatch"

    # Awkward batch size: exercises the batch-padding path.
    x3 = jax.random.normal(ks[9], (3, N, D), jnp.float32)
    ref3 = reference(x3, params, num_heads=H)
    out3 = transformer_encoder_layer(x3, params, num_heads=H)
    out3 = jax.block_until_ready(out3)
    assert jnp.allclose(out3, ref3, rtol=5e-3, atol=5e-3), "padded-batch path mismatch"

    # bf16-MXU path (v6e / v7x recommendation): looser tolerance for bf16 operands.
    out_bf16 = transformer_encoder_layer(x, params, num_heads=H, use_bf16=True)
    out_bf16 = jax.block_until_ready(out_bf16)
    assert jnp.allclose(out_bf16, ref, rtol=1e-1, atol=1e-1), "bf16 kernel mismatch vs reference"

    print("KERNEL_OK")
</pallas_src>

<mosaic_0001>
module attributes {stable_mosaic.version = 11 : i64} {
  func.func @encoder_layer_kernel(%arg0: i32, %arg1: memref<8x32xf32, #tpu.memory_space<vmem>>, %arg2: memref<1x32xf32, #tpu.memory_space<vmem>>, %arg3: memref<1x32xf32, #tpu.memory_space<vmem>>, %arg4: memref<32x96xf32, #tpu.memory_space<vmem>>, %arg5: memref<1x96xf32, #tpu.memory_space<vmem>>, %arg6: memref<1x32xf32, #tpu.memory_space<vmem>>, %arg7: memref<1x32xf32, #tpu.memory_space<vmem>>, %arg8: memref<32x64xf32, #tpu.memory_space<vmem>>, %arg9: memref<1x64xf32, #tpu.memory_space<vmem>>, %arg10: memref<64x32xf32, #tpu.memory_space<vmem>>, %arg11: memref<1x32xf32, #tpu.memory_space<vmem>>, %arg12: memref<8x32xf32, #tpu.memory_space<vmem>>, %arg13: memref<8x32xf32, #tpu.memory_space<vmem>>) attributes {dimension_semantics = [#tpu.dimension_semantics<parallel>], iteration_bounds = array<i64: 2>, scalar_prefetch = 0 : i64, scratch_operands = 1 : i64, tpu.core_type = #tpu.core_type<tc>, window_params = [{transform_indices = @transform_0, window_bounds = array<i64: 8, 32>}, {pipeline_mode = #tpu.pipeline_mode<synchronous>, transform_indices = @transform_1, window_bounds = array<i64: 1, 32>}, {pipeline_mode = #tpu.pipeline_mode<synchronous>, transform_indices = @transform_2, window_bounds = array<i64: 1, 32>}, {pipeline_mode = #tpu.pipeline_mode<synchronous>, transform_indices = @transform_3, window_bounds = array<i64: 32, 96>}, {pipeline_mode = #tpu.pipeline_mode<synchronous>, transform_indices = @transform_4, window_bounds = array<i64: 1, 96>}, {pipeline_mode = #tpu.pipeline_mode<synchronous>, transform_indices = @transform_5, window_bounds = array<i64: 1, 32>}, {pipeline_mode = #tpu.pipeline_mode<synchronous>, transform_indices = @transform_6, window_bounds = array<i64: 1, 32>}, {pipeline_mode = #tpu.pipeline_mode<synchronous>, transform_indices = @transform_7, window_bounds = array<i64: 32, 64>}, {pipeline_mode = #tpu.pipeline_mode<synchronous>, transform_indices = @transform_8, window_bounds = array<i64: 1, 64>}, {pipeline_mode = #tpu.pipeline_mode<synchronous>, transform_indices = @transform_9, window_bounds = array<i64: 64, 32>}, {pipeline_mode = #tpu.pipeline_mode<synchronous>, transform_indices = @transform_10, window_bounds = array<i64: 1, 32>}, {transform_indices = @transform_11, window_bounds = array<i64: 8, 32>}]} {
    %c0 = arith.constant 0 : index
    %c0_0 = arith.constant 0 : index
    %0 = vector.load %arg1[%c0, %c0_0] : memref<8x32xf32, #tpu.memory_space<vmem>>, vector<8x32xf32>
    %c0_1 = arith.constant 0 : index
    %c0_2 = arith.constant 0 : index
    %1 = vector.load %arg2[%c0_1, %c0_2] : memref<1x32xf32, #tpu.memory_space<vmem>>, vector<1x32xf32>
    %c0_3 = arith.constant 0 : index
    %c0_4 = arith.constant 0 : index
    %2 = vector.load %arg3[%c0_3, %c0_4] : memref<1x32xf32, #tpu.memory_space<vmem>>, vector<1x32xf32>
    %cst = arith.constant dense<0.000000e+00> : vector<8xf32>
    %3 = vector.multi_reduction <add>, %0, %cst [1] : vector<8x32xf32> to vector<8xf32>
    %4 = vector.shape_cast %3 : vector<8xf32> to vector<8x1xf32>
    %cst_5 = arith.constant 3.200000e+01 : f32
    %5 = vector.broadcast %cst_5 : f32 to vector<8x1xf32>
    %6 = arith.divf %4, %5 : vector<8x1xf32>
    %7 = vector.broadcast %6 : vector<8x1xf32> to vector<8x32xf32>
    %8 = arith.subf %0, %7 : vector<8x32xf32>
    %9 = arith.mulf %8, %8 : vector<8x32xf32>
    %cst_6 = arith.constant dense<0.000000e+00> : vector<8xf32>
    %10 = vector.multi_reduction <add>, %9, %cst_6 [1] : vector<8x32xf32> to vector<8xf32>
    %11 = vector.shape_cast %10 : vector<8xf32> to vector<8x1xf32>
    %cst_7 = arith.constant 3.200000e+01 : f32
    %12 = vector.broadcast %cst_7 : f32 to vector<8x1xf32>
    %13 = arith.divf %11, %12 : vector<8x1xf32>
    %14 = vector.broadcast %6 : vector<8x1xf32> to vector<8x32xf32>
    %15 = arith.subf %0, %14 : vector<8x32xf32>
    %cst_8 = arith.constant 9.99999974E-6 : f32
    %16 = vector.broadcast %cst_8 : f32 to vector<8x1xf32>
    %17 = arith.addf %13, %16 : vector<8x1xf32>
    %18 = math.rsqrt %17 : vector<8x1xf32>
    %19 = vector.broadcast %18 : vector<8x1xf32> to vector<8x32xf32>
    %20 = arith.mulf %15, %19 : vector<8x32xf32>
    %21 = vector.broadcast %1 : vector<1x32xf32> to vector<8x32xf32>
    %22 = arith.mulf %20, %21 : vector<8x32xf32>
    %23 = vector.broadcast %2 : vector<1x32xf32> to vector<8x32xf32>
    %24 = arith.addf %22, %23 : vector<8x32xf32>
    %c0_9 = arith.constant 0 : index
    %c0_10 = arith.constant 0 : index
    %25 = vector.load %arg4[%c0_9, %c0_10] : memref<32x96xf32, #tpu.memory_space<vmem>>, vector<32x96xf32>
    %cst_11 = arith.constant dense<0.000000e+00> : vector<8x96xf32>
    %26 = tpu.matmul %24, %25, %cst_11 {dimension_numbers = #tpu.dot_dimension_numbers<[1], [0], [0], [1], [0, 0, 1, 1], [], []>} : vector<8x32xf32>, vector<32x96xf32>, vector<8x96xf32> -> vector<8x96xf32>
    %c0_12 = arith.constant 0 : index
    %c0_13 = arith.constant 0 : index
    %27 = vector.load %arg5[%c0_12, %c0_13] : memref<1x96xf32, #tpu.memory_space<vmem>>, vector<1x96xf32>
    %28 = vector.broadcast %27 : vector<1x96xf32> to vector<8x96xf32>
    %29 = arith.addf %26, %28 : vector<8x96xf32>
    %30 = vector.extract_strided_slice %29 {offsets = [0, 0], sizes = [8, 32], strides = [1, 1]} : vector<8x96xf32> to vector<8x32xf32>
    %31 = vector.extract_strided_slice %30 {offsets = [0, 0], sizes = [8, 8], strides = [1, 1]} : vector<8x32xf32> to vector<8x8xf32>
    %32 = vector.extract_strided_slice %30 {offsets = [0, 8], sizes = [8, 8], strides = [1, 1]} : vector<8x32xf32> to vector<8x8xf32>
    %33 = vector.extract_strided_slice %30 {offsets = [0, 16], sizes = [8, 8], strides = [1, 1]} : vector<8x32xf32> to vector<8x8xf32>
    %34 = vector.extract_strided_slice %30 {offsets = [0, 24], sizes = [8, 8], strides = [1, 1]} : vector<8x32xf32> to vector<8x8xf32>
    %35 = vector.shape_cast %31 : vector<8x8xf32> to vector<1x8x8xf32>
    %36 = vector.shape_cast %32 : vector<8x8xf32> to vector<1x8x8xf32>
    %37 = vector.shape_cast %33 : vector<8x8xf32> to vector<1x8x8xf32>
    %38 = vector.shape_cast %34 : vector<8x8xf32> to vector<1x8x8xf32>
    %39 = tpu.concatenate %35, %36, %37, %38 in 0 : vector<1x8x8xf32>, vector<1x8x8xf32>, vector<1x8x8xf32>, vector<1x8x8xf32> -> vector<4x8x8xf32>
    %40 = vector.extract_strided_slice %29 {offsets = [0, 32], sizes = [8, 32], strides = [1, 1]} : vector<8x96xf32> to vector<8x32xf32>
    %41 = vector.extract_strided_slice %40 {offsets = [0, 0], sizes = [8, 8], strides = [1, 1]} : vector<8x32xf32> to vector<8x8xf32>
    %42 = vector.extract_strided_slice %40 {offsets = [0, 8], sizes = [8, 8], strides = [1, 1]} : vector<8x32xf32> to vector<8x8xf32>
    %43 = vector.extract_strided_slice %40 {offsets = [0, 16], sizes = [8, 8], strides = [1, 1]} : vector<8x32xf32> to vector<8x8xf32>
    %44 = vector.extract_strided_slice %40 {offsets = [0, 24], sizes = [8, 8], strides = [1, 1]} : vector<8x32xf32> to vector<8x8xf32>
    %45 = vector.shape_cast %41 : vector<8x8xf32> to vector<1x8x8xf32>
    %46 = vector.shape_cast %42 : vector<8x8xf32> to vector<1x8x8xf32>
    %47 = vector.shape_cast %43 : vector<8x8xf32> to vector<1x8x8xf32>
    %48 = vector.shape_cast %44 : vector<8x8xf32> to vector<1x8x8xf32>
    %49 = tpu.concatenate %45, %46, %47, %48 in 0 : vector<1x8x8xf32>, vector<1x8x8xf32>, vector<1x8x8xf32>, vector<1x8x8xf32> -> vector<4x8x8xf32>
    %50 = vector.extract_strided_slice %29 {offsets = [0, 64], sizes = [8, 32], strides = [1, 1]} : vector<8x96xf32> to vector<8x32xf32>
    %51 = vector.extract_strided_slice %50 {offsets = [0, 0], sizes = [8, 8], strides = [1, 1]} : vector<8x32xf32> to vector<8x8xf32>
    %52 = vector.extract_strided_slice %50 {offsets = [0, 8], sizes = [8, 8], strides = [1, 1]} : vector<8x32xf32> to vector<8x8xf32>
    %53 = vector.extract_strided_slice %50 {offsets = [0, 16], sizes = [8, 8], strides = [1, 1]} : vector<8x32xf32> to vector<8x8xf32>
    %54 = vector.extract_strided_slice %50 {offsets = [0, 24], sizes = [8, 8], strides = [1, 1]} : vector<8x32xf32> to vector<8x8xf32>
    %55 = vector.shape_cast %51 : vector<8x8xf32> to vector<1x8x8xf32>
    %56 = vector.shape_cast %52 : vector<8x8xf32> to vector<1x8x8xf32>
    %57 = vector.shape_cast %53 : vector<8x8xf32> to vector<1x8x8xf32>
    %58 = vector.shape_cast %54 : vector<8x8xf32> to vector<1x8x8xf32>
    %59 = tpu.concatenate %55, %56, %57, %58 in 0 : vector<1x8x8xf32>, vector<1x8x8xf32>, vector<1x8x8xf32>, vector<1x8x8xf32> -> vector<4x8x8xf32>
    "tpu.trace_start"() <{level = 10 : i32, message = "hmd,hnd->hmn"}> : () -> ()
    %cst_14 = arith.constant dense<0.000000e+00> : vector<4x8x8xf32>
    %60 = tpu.matmul %39, %49, %cst_14 {dimension_numbers = #tpu.dot_dimension_numbers<[2], [2], [1], [1], [0, 0, 0, 1, 1, 1], [0], [0]>} : vector<4x8x8xf32>, vector<4x8x8xf32>, vector<4x8x8xf32> -> vector<4x8x8xf32>
    "tpu.trace_stop"() : () -> ()
    %cst_15 = arith.constant 0.353553385 : f32
    %61 = vector.broadcast %cst_15 : f32 to vector<4x8x8xf32>
    %62 = arith.mulf %60, %61 : vector<4x8x8xf32>
    %cst_16 = arith.constant dense<0xFF800000> : vector<4x8xf32>
    %63 = vector.multi_reduction <maximumf>, %62, %cst_16 [2] : vector<4x8x8xf32> to vector<4x8xf32>
    %64 = vector.shape_cast %63 : vector<4x8xf32> to vector<4x8x1xf32>
    %65 = vector.broadcast %64 : vector<4x8x1xf32> to vector<4x8x8xf32>
    %66 = arith.subf %62, %65 : vector<4x8x8xf32>
    %67 = math.exp %66 : vector<4x8x8xf32>
    %cst_17 = arith.constant dense<0.000000e+00> : vector<4x8xf32>
    %68 = vector.multi_reduction <add>, %67, %cst_17 [2] : vector<4x8x8xf32> to vector<4x8xf32>
    %69 = vector.shape_cast %68 : vector<4x8xf32> to vector<4x8x1xf32>
    "tpu.trace_start"() <{level = 10 : i32, message = "hmn,hnd->hmd"}> : () -> ()
    %cst_18 = arith.constant dense<0.000000e+00> : vector<4x8x8xf32>
    %70 = tpu.matmul %67, %59, %cst_18 {dimension_numbers = #tpu.dot_dimension_numbers<[2], [1], [1], [2], [0, 0, 0, 1, 1, 2], [0], [0]>} : vector<4x8x8xf32>, vector<4x8x8xf32>, vector<4x8x8xf32> -> vector<4x8x8xf32>
    "tpu.trace_stop"() : () -> ()
    %71 = tpu.reciprocal %69 {approx = true} : vector<4x8x1xf32> -> vector<4x8x1xf32>
    %72 = vector.broadcast %71 : vector<4x8x1xf32> to vector<4x8x8xf32>
    %73 = arith.mulf %70, %72 : vector<4x8x8xf32>
    %74 = vector.extract_strided_slice %73 {offsets = [0, 0, 0], sizes = [1, 8, 8], strides = [1, 1, 1]} : vector<4x8x8xf32> to vector<1x8x8xf32>
    %75 = vector.shape_cast %74 : vector<1x8x8xf32> to vector<8x8xf32>
    %c0_19 = arith.constant 0 : index
    %c0_20 = arith.constant 0 : index
    %76 = vector.load %arg13[%c0_19, %c0_20] : memref<8x32xf32, #tpu.memory_space<vmem>>, vector<8x8xf32>
    tpu.vector_store %arg13[%c0_19, %c0_20], %75 {strides = array<i32>} : memref<8x32xf32, #tpu.memory_space<vmem>>, vector<8x8xf32>,
    %77 = vector.extract_strided_slice %73 {offsets = [1, 0, 0], sizes = [1, 8, 8], strides = [1, 1, 1]} : vector<4x8x8xf32> to vector<1x8x8xf32>
    %78 = vector.shape_cast %77 : vector<1x8x8xf32> to vector<8x8xf32>
    %c0_21 = arith.constant 0 : index
    %c8 = arith.constant 8 : index
    %79 = vector.load %arg13[%c0_21, %c8] : memref<8x32xf32, #tpu.memory_space<vmem>>, vector<8x8xf32>
    tpu.vector_store %arg13[%c0_21, %c8], %78 {strides = array<i32>} : memref<8x32xf32, #tpu.memory_space<vmem>>, vector<8x8xf32>,
    %80 = vector.extract_strided_slice %73 {offsets = [2, 0, 0], sizes = [1, 8, 8], strides = [1, 1, 1]} : vector<4x8x8xf32> to vector<1x8x8xf32>
    %81 = vector.shape_cast %80 : vector<1x8x8xf32> to vector<8x8xf32>
    %c0_22 = arith.constant 0 : index
    %c16 = arith.constant 16 : index
    %82 = vector.load %arg13[%c0_22, %c16] : memref<8x32xf32, #tpu.memory_space<vmem>>, vector<8x8xf32>
    tpu.vector_store %arg13[%c0_22, %c16], %81 {strides = array<i32>} : memref<8x32xf32, #tpu.memory_space<vmem>>, vector<8x8xf32>,
    %83 = vector.extract_strided_slice %73 {offsets = [3, 0, 0], sizes = [1, 8, 8], strides = [1, 1, 1]} : vector<4x8x8xf32> to vector<1x8x8xf32>
    %84 = vector.shape_cast %83 : vector<1x8x8xf32> to vector<8x8xf32>
    %c0_23 = arith.constant 0 : index
    %c24 = arith.constant 24 : index
    %85 = vector.load %arg13[%c0_23, %c24] : memref<8x32xf32, #tpu.memory_space<vmem>>, vector<8x8xf32>
    tpu.vector_store %arg13[%c0_23, %c24], %84 {strides = array<i32>} : memref<8x32xf32, #tpu.memory_space<vmem>>, vector<8x8xf32>,
    %c0_24 = arith.constant 0 : index
    %c0_25 = arith.constant 0 : index
    %86 = vector.load %arg13[%c0_24, %c0_25] : memref<8x32xf32, #tpu.memory_space<vmem>>, vector<8x32xf32>
    %87 = arith.addf %86, %24 : vector<8x32xf32>
    %c0_26 = arith.constant 0 : index
    %c0_27 = arith.constant 0 : index
    %88 = vector.load %arg6[%c0_26, %c0_27] : memref<1x32xf32, #tpu.memory_space<vmem>>, vector<1x32xf32>
    %c0_28 = arith.constant 0 : index
    %c0_29 = arith.constant 0 : index
    %89 = vector.load %arg7[%c0_28, %c0_29] : memref<1x32xf32, #tpu.memory_space<vmem>>, vector<1x32xf32>
    %cst_30 = arith.constant dense<0.000000e+00> : vector<8xf32>
    %90 = vector.multi_reduction <add>, %87, %cst_30 [1] : vector<8x32xf32> to vector<8xf32>
    %91 = vector.shape_cast %90 : vector<8xf32> to vector<8x1xf32>
    %cst_31 = arith.constant 3.200000e+01 : f32
    %92 = vector.broadcast %cst_31 : f32 to vector<8x1xf32>
    %93 = arith.divf %91, %92 : vector<8x1xf32>
    %94 = vector.broadcast %93 : vector<8x1xf32> to vector<8x32xf32>
    %95 = arith.subf %87, %94 : vector<8x32xf32>
    %96 = arith.mulf %95, %95 : vector<8x32xf32>
    %cst_32 = arith.constant dense<0.000000e+00> : vector<8xf32>
    %97 = vector.multi_reduction <add>, %96, %cst_32 [1] : vector<8x32xf32> to vector<8xf32>
    %98 = vector.shape_cast %97 : vector<8xf32> to vector<8x1xf32>
    %cst_33 = arith.constant 3.200000e+01 : f32
    %99 = vector.broadcast %cst_33 : f32 to vector<8x1xf32>
    %100 = arith.divf %98, %99 : vector<8x1xf32>
    %101 = vector.broadcast %93 : vector<8x1xf32> to vector<8x32xf32>
    %102 = arith.subf %87, %101 : vector<8x32xf32>
    %cst_34 = arith.constant 9.99999974E-6 : f32
    %103 = vector.broadcast %cst_34 : f32 to vector<8x1xf32>
    %104 = arith.addf %100, %103 : vector<8x1xf32>
    %105 = math.rsqrt %104 : vector<8x1xf32>
    %106 = vector.broadcast %105 : vector<8x1xf32> to vector<8x32xf32>
    %107 = arith.mulf %102, %106 : vector<8x32xf32>
    %108 = vector.broadcast %88 : vector<1x32xf32> to vector<8x32xf32>
    %109 = arith.mulf %107, %108 : vector<8x32xf32>
    %110 = vector.broadcast %89 : vector<1x32xf32> to vector<8x32xf32>
    %111 = arith.addf %109, %110 : vector<8x32xf32>
    %c0_35 = arith.constant 0 : index
    %c0_36 = arith.constant 0 : index
    %112 = vector.load %arg8[%c0_35, %c0_36] : memref<32x64xf32, #tpu.memory_space<vmem>>, vector<32x64xf32>
    %cst_37 = arith.constant dense<0.000000e+00> : vector<8x64xf32>
    %113 = tpu.matmul %111, %112, %cst_37 {dimension_numbers = #tpu.dot_dimension_numbers<[1], [0], [0], [1], [0, 0, 1, 1], [], []>} : vector<8x32xf32>, vector<32x64xf32>, vector<8x64xf32> -> vector<8x64xf32>
    %c0_38 = arith.constant 0 : index
    %c0_39 = arith.constant 0 : index
    %114 = vector.load %arg9[%c0_38, %c0_39] : memref<1x64xf32, #tpu.memory_space<vmem>>, vector<1x64xf32>
    %115 = vector.broadcast %114 : vector<1x64xf32> to vector<8x64xf32>
    %116 = arith.addf %113, %115 : vector<8x64xf32>
    %cst_40 = arith.constant 5.000000e-01 : f32
    %117 = vector.broadcast %cst_40 : f32 to vector<8x64xf32>
    %118 = arith.mulf %117, %116 : vector<8x64xf32>
    %cst_41 = arith.constant 0.707106769 : f32
    %119 = vector.broadcast %cst_41 : f32 to vector<8x64xf32>
    %120 = arith.mulf %116, %119 : vector<8x64xf32>
    %121 = math.erf %120 : vector<8x64xf32>
    %cst_42 = arith.constant 1.000000e+00 : f32
    %122 = vector.broadcast %cst_42 : f32 to vector<8x64xf32>
    %123 = arith.addf %122, %121 : vector<8x64xf32>
    %124 = arith.mulf %118, %123 : vector<8x64xf32>
    %c0_43 = arith.constant 0 : index
    %c0_44 = arith.constant 0 : index
    %125 = vector.load %arg10[%c0_43, %c0_44] : memref<64x32xf32, #tpu.memory_space<vmem>>, vector<64x32xf32>
    %cst_45 = arith.constant dense<0.000000e+00> : vector<8x32xf32>
    %126 = tpu.matmul %124, %125, %cst_45 {dimension_numbers = #tpu.dot_dimension_numbers<[1], [0], [0], [1], [0, 0, 1, 1], [], []>} : vector<8x64xf32>, vector<64x32xf32>, vector<8x32xf32> -> vector<8x32xf32>
    %c0_46 = arith.constant 0 : index
    %c0_47 = arith.constant 0 : index
    %127 = vector.load %arg11[%c0_46, %c0_47] : memref<1x32xf32, #tpu.memory_space<vmem>>, vector<1x32xf32>
    %128 = vector.broadcast %127 : vector<1x32xf32> to vector<8x32xf32>
    %129 = arith.addf %126, %128 : vector<8x32xf32>
    %cst_48 = arith.constant 5.000000e-01 : f32
    %130 = vector.broadcast %cst_48 : f32 to vector<8x32xf32>
    %131 = arith.mulf %130, %129 : vector<8x32xf32>
    %cst_49 = arith.constant 0.707106769 : f32
    %132 = vector.broadcast %cst_49 : f32 to vector<8x32xf32>
    %133 = arith.mulf %129, %132 : vector<8x32xf32>
    %134 = math.erf %133 : vector<8x32xf32>
    %cst_50 = arith.constant 1.000000e+00 : f32
    %135 = vector.broadcast %cst_50 : f32 to vector<8x32xf32>
    %136 = arith.addf %135, %134 : vector<8x32xf32>
    %137 = arith.mulf %131, %136 : vector<8x32xf32>
    %138 = arith.addf %137, %111 : vector<8x32xf32>
    %c0_51 = arith.constant 0 : index
    %c0_52 = arith.constant 0 : index
    %139 = vector.load %arg12[%c0_51, %c0_52] : memref<8x32xf32, #tpu.memory_space<vmem>>, vector<8x32xf32>
    tpu.vector_store %arg12[%c0_51, %c0_52], %138 {strides = array<i32>} : memref<8x32xf32, #tpu.memory_space<vmem>>, vector<8x32xf32>,
    return
  }
  func.func @transform_0(%arg0: i32) -> (i32, i32) {
    %c0_i32 = arith.constant 0 : i32
    %c0_i32_0 = arith.constant 0 : i32
    return %arg0, %c0_i32 : i32, i32
  }
  func.func @transform_1(%arg0: i32) -> (i32, i32) {
    %c0_i32 = arith.constant 0 : i32
    %c0_i32_0 = arith.constant 0 : i32
    %c0_i32_1 = arith.constant 0 : i32
    return %c0_i32, %c0_i32_0 : i32, i32
  }
  func.func @transform_2(%arg0: i32) -> (i32, i32) {
    %c0_i32 = arith.constant 0 : i32
    %c0_i32_0 = arith.constant 0 : i32
    %c0_i32_1 = arith.constant 0 : i32
    return %c0_i32, %c0_i32_0 : i32, i32
  }
  func.func @transform_3(%arg0: i32) -> (i32, i32) {
    %c0_i32 = arith.constant 0 : i32
    %c0_i32_0 = arith.constant 0 : i32
    %c0_i32_1 = arith.constant 0 : i32
    return %c0_i32, %c0_i32_0 : i32, i32
  }
  func.func @transform_4(%arg0: i32) -> (i32, i32) {
    %c0_i32 = arith.constant 0 : i32
    %c0_i32_0 = arith.constant 0 : i32
    %c0_i32_1 = arith.constant 0 : i32
    return %c0_i32, %c0_i32_0 : i32, i32
  }
  func.func @transform_5(%arg0: i32) -> (i32, i32) {
    %c0_i32 = arith.constant 0 : i32
    %c0_i32_0 = arith.constant 0 : i32
    %c0_i32_1 = arith.constant 0 : i32
    return %c0_i32, %c0_i32_0 : i32, i32
  }
  func.func @transform_6(%arg0: i32) -> (i32, i32) {
    %c0_i32 = arith.constant 0 : i32
    %c0_i32_0 = arith.constant 0 : i32
    %c0_i32_1 = arith.constant 0 : i32
    return %c0_i32, %c0_i32_0 : i32, i32
  }
  func.func @transform_7(%arg0: i32) -> (i32, i32) {
    %c0_i32 = arith.constant 0 : i32
    %c0_i32_0 = arith.constant 0 : i32
    %c0_i32_1 = arith.constant 0 : i32
    return %c0_i32, %c0_i32_0 : i32, i32
  }
  func.func @transform_8(%arg0: i32) -> (i32, i32) {
    %c0_i32 = arith.constant 0 : i32
    %c0_i32_0 = arith.constant 0 : i32
    %c0_i32_1 = arith.constant 0 : i32
    return %c0_i32, %c0_i32_0 : i32, i32
  }
  func.func @transform_9(%arg0: i32) -> (i32, i32) {
    %c0_i32 = arith.constant 0 : i32
    %c0_i32_0 = arith.constant 0 : i32
    %c0_i32_1 = arith.constant 0 : i32
    return %c0_i32, %c0_i32_0 : i32, i32
  }
  func.func @transform_10(%arg0: i32) -> (i32, i32) {
    %c0_i32 = arith.constant 0 : i32
    %c0_i32_0 = arith.constant 0 : i32
    %c0_i32_1 = arith.constant 0 : i32
    return %c0_i32, %c0_i32_0 : i32, i32
  }
  func.func @transform_11(%arg0: i32) -> (i32, i32) {
    %c0_i32 = arith.constant 0 : i32
    %c0_i32_0 = arith.constant 0 : i32
    return %arg0, %c0_i32 : i32, i32
  }
}

module attributes {stable_mosaic.version = 11 : i64} {
  func.func @encoder_layer_kernel(%arg0: i32, %arg1: memref<8x32xf32, #tpu.memory_space<vmem>>, %arg2: memref<1x32xf32, #tpu.memory_space<vmem>>, %arg3: memref<1x32xf32, #tpu.memory_space<vmem>>, %arg4: memref<32x96xf32, #tpu.memory_space<vmem>>, %arg5: memref<1x96xf32, #tpu.memory_space<vmem>>, %arg6: memref<1x32xf32, #tpu.memory_space<vmem>>, %arg7: memref<1x32xf32, #tpu.memory_space<vmem>>, %arg8: memref<32x64xf32, #tpu.memory_space<vmem>>, %arg9: memref<1x64xf32, #tpu.memory_space<vmem>>, %arg10: memref<64x32xf32, #tpu.memory_space<vmem>>, %arg11: memref<1x32xf32, #tpu.memory_space<vmem>>, %arg12: memref<8x32xf32, #tpu.memory_space<vmem>>, %arg13: memref<8x32xf32, #tpu.memory_space<vmem>>) attributes {dimension_semantics = [#tpu.dimension_semantics<parallel>], iteration_bounds = array<i64: 2>, scalar_prefetch = 0 : i64, scratch_operands = 1 : i64, tpu.core_type = #tpu.core_type<tc>, window_params = [{transform_indices = @transform_0, window_bounds = array<i64: 8, 32>}, {pipeline_mode = #tpu.pipeline_mode<synchronous>, transform_indices = @transform_1, window_bounds = array<i64: 1, 32>}, {pipeline_mode = #tpu.pipeline_mode<synchronous>, transform_indices = @transform_2, window_bounds = array<i64: 1, 32>}, {pipeline_mode = #tpu.pipeline_mode<synchronous>, transform_indices = @transform_3, window_bounds = array<i64: 32, 96>}, {pipeline_mode = #tpu.pipeline_mode<synchronous>, transform_indices = @transform_4, window_bounds = array<i64: 1, 96>}, {pipeline_mode = #tpu.pipeline_mode<synchronous>, transform_indices = @transform_5, window_bounds = array<i64: 1, 32>}, {pipeline_mode = #tpu.pipeline_mode<synchronous>, transform_indices = @transform_6, window_bounds = array<i64: 1, 32>}, {pipeline_mode = #tpu.pipeline_mode<synchronous>, transform_indices = @transform_7, window_bounds = array<i64: 32, 64>}, {pipeline_mode = #tpu.pipeline_mode<synchronous>, transform_indices = @transform_8, window_bounds = array<i64: 1, 64>}, {pipeline_mode = #tpu.pipeline_mode<synchronous>, transform_indices = @transform_9, window_bounds = array<i64: 64, 32>}, {pipeline_mode = #tpu.pipeline_mode<synchronous>, transform_indices = @transform_10, window_bounds = array<i64: 1, 32>}, {transform_indices = @transform_11, window_bounds = array<i64: 8, 32>}]} {
    %c0 = arith.constant 0 : index
    %c0_0 = arith.constant 0 : index
    %0 = vector.load %arg1[%c0, %c0_0] : memref<8x32xf32, #tpu.memory_space<vmem>>, vector<8x32xf32>
    %c0_1 = arith.constant 0 : index
    %c0_2 = arith.constant 0 : index
    %1 = vector.load %arg2[%c0_1, %c0_2] : memref<1x32xf32, #tpu.memory_space<vmem>>, vector<1x32xf32>
    %c0_3 = arith.constant 0 : index
    %c0_4 = arith.constant 0 : index
    %2 = vector.load %arg3[%c0_3, %c0_4] : memref<1x32xf32, #tpu.memory_space<vmem>>, vector<1x32xf32>
    %cst = arith.constant dense<0.000000e+00> : vector<8xf32>
    %3 = vector.multi_reduction <add>, %0, %cst [1] : vector<8x32xf32> to vector<8xf32>
    %4 = vector.shape_cast %3 : vector<8xf32> to vector<8x1xf32>
    %cst_5 = arith.constant 3.200000e+01 : f32
    %5 = vector.broadcast %cst_5 : f32 to vector<8x1xf32>
    %6 = arith.divf %4, %5 : vector<8x1xf32>
    %7 = vector.broadcast %6 : vector<8x1xf32> to vector<8x32xf32>
    %8 = arith.subf %0, %7 : vector<8x32xf32>
    %9 = arith.mulf %8, %8 : vector<8x32xf32>
    %cst_6 = arith.constant dense<0.000000e+00> : vector<8xf32>
    %10 = vector.multi_reduction <add>, %9, %cst_6 [1] : vector<8x32xf32> to vector<8xf32>
    %11 = vector.shape_cast %10 : vector<8xf32> to vector<8x1xf32>
    %cst_7 = arith.constant 3.200000e+01 : f32
    %12 = vector.broadcast %cst_7 : f32 to vector<8x1xf32>
    %13 = arith.divf %11, %12 : vector<8x1xf32>
    %14 = vector.broadcast %6 : vector<8x1xf32> to vector<8x32xf32>
    %15 = arith.subf %0, %14 : vector<8x32xf32>
    %cst_8 = arith.constant 9.99999974E-6 : f32
    %16 = vector.broadcast %cst_8 : f32 to vector<8x1xf32>
    %17 = arith.addf %13, %16 : vector<8x1xf32>
    %18 = math.rsqrt %17 : vector<8x1xf32>
    %19 = vector.broadcast %18 : vector<8x1xf32> to vector<8x32xf32>
    %20 = arith.mulf %15, %19 : vector<8x32xf32>
    %21 = vector.broadcast %1 : vector<1x32xf32> to vector<8x32xf32>
    %22 = arith.mulf %20, %21 : vector<8x32xf32>
    %23 = vector.broadcast %2 : vector<1x32xf32> to vector<8x32xf32>
    %24 = arith.addf %22, %23 : vector<8x32xf32>
    %c0_9 = arith.constant 0 : index
    %c0_10 = arith.constant 0 : index
    %25 = vector.load %arg4[%c0_9, %c0_10] : memref<32x96xf32, #tpu.memory_space<vmem>>, vector<32x96xf32>
    %cst_11 = arith.constant dense<0.000000e+00> : vector<8x96xf32>
    %26 = tpu.matmul %24, %25, %cst_11 {dimension_numbers = #tpu.dot_dimension_numbers<[1], [0], [0], [1], [0, 0, 1, 1], [], []>} : vector<8x32xf32>, vector<32x96xf32>, vector<8x96xf32> -> vector<8x96xf32>
    %c0_12 = arith.constant 0 : index
    %c0_13 = arith.constant 0 : index
    %27 = vector.load %arg5[%c0_12, %c0_13] : memref<1x96xf32, #tpu.memory_space<vmem>>, vector<1x96xf32>
    %28 = vector.broadcast %27 : vector<1x96xf32> to vector<8x96xf32>
    %29 = arith.addf %26, %28 : vector<8x96xf32>
    %30 = vector.extract_strided_slice %29 {offsets = [0, 0], sizes = [8, 32], strides = [1, 1]} : vector<8x96xf32> to vector<8x32xf32>
    %31 = vector.extract_strided_slice %30 {offsets = [0, 0], sizes = [8, 8], strides = [1, 1]} : vector<8x32xf32> to vector<8x8xf32>
    %32 = vector.extract_strided_slice %30 {offsets = [0, 8], sizes = [8, 8], strides = [1, 1]} : vector<8x32xf32> to vector<8x8xf32>
    %33 = vector.extract_strided_slice %30 {offsets = [0, 16], sizes = [8, 8], strides = [1, 1]} : vector<8x32xf32> to vector<8x8xf32>
    %34 = vector.extract_strided_slice %30 {offsets = [0, 24], sizes = [8, 8], strides = [1, 1]} : vector<8x32xf32> to vector<8x8xf32>
    %35 = vector.shape_cast %31 : vector<8x8xf32> to vector<1x8x8xf32>
    %36 = vector.shape_cast %32 : vector<8x8xf32> to vector<1x8x8xf32>
    %37 = vector.shape_cast %33 : vector<8x8xf32> to vector<1x8x8xf32>
    %38 = vector.shape_cast %34 : vector<8x8xf32> to vector<1x8x8xf32>
    %39 = tpu.concatenate %35, %36, %37, %38 in 0 : vector<1x8x8xf32>, vector<1x8x8xf32>, vector<1x8x8xf32>, vector<1x8x8xf32> -> vector<4x8x8xf32>
    %40 = vector.extract_strided_slice %29 {offsets = [0, 32], sizes = [8, 32], strides = [1, 1]} : vector<8x96xf32> to vector<8x32xf32>
    %41 = vector.extract_strided_slice %40 {offsets = [0, 0], sizes = [8, 8], strides = [1, 1]} : vector<8x32xf32> to vector<8x8xf32>
    %42 = vector.extract_strided_slice %40 {offsets = [0, 8], sizes = [8, 8], strides = [1, 1]} : vector<8x32xf32> to vector<8x8xf32>
    %43 = vector.extract_strided_slice %40 {offsets = [0, 16], sizes = [8, 8], strides = [1, 1]} : vector<8x32xf32> to vector<8x8xf32>
    %44 = vector.extract_strided_slice %40 {offsets = [0, 24], sizes = [8, 8], strides = [1, 1]} : vector<8x32xf32> to vector<8x8xf32>
    %45 = vector.shape_cast %41 : vector<8x8xf32> to vector<1x8x8xf32>
    %46 = vector.shape_cast %42 : vector<8x8xf32> to vector<1x8x8xf32>
    %47 = vector.shape_cast %43 : vector<8x8xf32> to vector<1x8x8xf32>
    %48 = vector.shape_cast %44 : vector<8x8xf32> to vector<1x8x8xf32>
    %49 = tpu.concatenate %45, %46, %47, %48 in 0 : vector<1x8x8xf32>, vector<1x8x8xf32>, vector<1x8x8xf32>, vector<1x8x8xf32> -> vector<4x8x8xf32>
    %50 = vector.extract_strided_slice %29 {offsets = [0, 64], sizes = [8, 32], strides = [1, 1]} : vector<8x96xf32> to vector<8x32xf32>
    %51 = vector.extract_strided_slice %50 {offsets = [0, 0], sizes = [8, 8], strides = [1, 1]} : vector<8x32xf32> to vector<8x8xf32>
    %52 = vector.extract_strided_slice %50 {offsets = [0, 8], sizes = [8, 8], strides = [1, 1]} : vector<8x32xf32> to vector<8x8xf32>
    %53 = vector.extract_strided_slice %50 {offsets = [0, 16], sizes = [8, 8], strides = [1, 1]} : vector<8x32xf32> to vector<8x8xf32>
    %54 = vector.extract_strided_slice %50 {offsets = [0, 24], sizes = [8, 8], strides = [1, 1]} : vector<8x32xf32> to vector<8x8xf32>
    %55 = vector.shape_cast %51 : vector<8x8xf32> to vector<1x8x8xf32>
    %56 = vector.shape_cast %52 : vector<8x8xf32> to vector<1x8x8xf32>
    %57 = vector.shape_cast %53 : vector<8x8xf32> to vector<1x8x8xf32>
    %58 = vector.shape_cast %54 : vector<8x8xf32> to vector<1x8x8xf32>
    %59 = tpu.concatenate %55, %56, %57, %58 in 0 : vector<1x8x8xf32>, vector<1x8x8xf32>, vector<1x8x8xf32>, vector<1x8x8xf32> -> vector<4x8x8xf32>
    "tpu.trace_start"() <{level = 10 : i32, message = "hmd,hnd->hmn"}> : () -> ()
    %cst_14 = arith.constant dense<0.000000e+00> : vector<4x8x8xf32>
    %60 = tpu.matmul %39, %49, %cst_14 {dimension_numbers = #tpu.dot_dimension_numbers<[2], [2], [1], [1], [0, 0, 0, 1, 1, 1], [0], [0]>} : vector<4x8x8xf32>, vector<4x8x8xf32>, vector<4x8x8xf32> -> vector<4x8x8xf32>
    "tpu.trace_stop"() : () -> ()
    %cst_15 = arith.constant 0.353553385 : f32
    %61 = vector.broadcast %cst_15 : f32 to vector<4x8x8xf32>
    %62 = arith.mulf %60, %61 : vector<4x8x8xf32>
    %cst_16 = arith.constant dense<0xFF800000> : vector<4x8xf32>
    %63 = vector.multi_reduction <maximumf>, %62, %cst_16 [2] : vector<4x8x8xf32> to vector<4x8xf32>
    %64 = vector.shape_cast %63 : vector<4x8xf32> to vector<4x8x1xf32>
    %65 = vector.broadcast %64 : vector<4x8x1xf32> to vector<4x8x8xf32>
    %66 = arith.subf %62, %65 : vector<4x8x8xf32>
    %67 = math.exp %66 : vector<4x8x8xf32>
    %cst_17 = arith.constant dense<0.000000e+00> : vector<4x8xf32>
    %68 = vector.multi_reduction <add>, %67, %cst_17 [2] : vector<4x8x8xf32> to vector<4x8xf32>
    %69 = vector.shape_cast %68 : vector<4x8xf32> to vector<4x8x1xf32>
    "tpu.trace_start"() <{level = 10 : i32, message = "hmn,hnd->hmd"}> : () -> ()
    %cst_18 = arith.constant dense<0.000000e+00> : vector<4x8x8xf32>
    %70 = tpu.matmul %67, %59, %cst_18 {dimension_numbers = #tpu.dot_dimension_numbers<[2], [1], [1], [2], [0, 0, 0, 1, 1, 2], [0], [0]>} : vector<4x8x8xf32>, vector<4x8x8xf32>, vector<4x8x8xf32> -> vector<4x8x8xf32>
    "tpu.trace_stop"() : () -> ()
    %71 = tpu.reciprocal %69 {approx = true} : vector<4x8x1xf32> -> vector<4x8x1xf32>
    %72 = vector.broadcast %71 : vector<4x8x1xf32> to vector<4x8x8xf32>
    %73 = arith.mulf %70, %72 : vector<4x8x8xf32>
    %74 = vector.extract_strided_slice %73 {offsets = [0, 0, 0], sizes = [1, 8, 8], strides = [1, 1, 1]} : vector<4x8x8xf32> to vector<1x8x8xf32>
    %75 = vector.shape_cast %74 : vector<1x8x8xf32> to vector<8x8xf32>
    %c0_19 = arith.constant 0 : index
    %c0_20 = arith.constant 0 : index
    %76 = vector.load %arg13[%c0_19, %c0_20] : memref<8x32xf32, #tpu.memory_space<vmem>>, vector<8x8xf32>
    tpu.vector_store %arg13[%c0_19, %c0_20], %75 {strides = array<i32>} : memref<8x32xf32, #tpu.memory_space<vmem>>, vector<8x8xf32>,
    %77 = vector.extract_strided_slice %73 {offsets = [1, 0, 0], sizes = [1, 8, 8], strides = [1, 1, 1]} : vector<4x8x8xf32> to vector<1x8x8xf32>
    %78 = vector.shape_cast %77 : vector<1x8x8xf32> to vector<8x8xf32>
    %c0_21 = arith.constant 0 : index
    %c8 = arith.constant 8 : index
    %79 = vector.load %arg13[%c0_21, %c8] : memref<8x32xf32, #tpu.memory_space<vmem>>, vector<8x8xf32>
    tpu.vector_store %arg13[%c0_21, %c8], %78 {strides = array<i32>} : memref<8x32xf32, #tpu.memory_space<vmem>>, vector<8x8xf32>,
    %80 = vector.extract_strided_slice %73 {offsets = [2, 0, 0], sizes = [1, 8, 8], strides = [1, 1, 1]} : vector<4x8x8xf32> to vector<1x8x8xf32>
    %81 = vector.shape_cast %80 : vector<1x8x8xf32> to vector<8x8xf32>
    %c0_22 = arith.constant 0 : index
    %c16 = arith.constant 16 : index
    %82 = vector.load %arg13[%c0_22, %c16] : memref<8x32xf32, #tpu.memory_space<vmem>>, vector<8x8xf32>
    tpu.vector_store %arg13[%c0_22, %c16], %81 {strides = array<i32>} : memref<8x32xf32, #tpu.memory_space<vmem>>, vector<8x8xf32>,
    %83 = vector.extract_strided_slice %73 {offsets = [3, 0, 0], sizes = [1, 8, 8], strides = [1, 1, 1]} : vector<4x8x8xf32> to vector<1x8x8xf32>
    %84 = vector.shape_cast %83 : vector<1x8x8xf32> to vector<8x8xf32>
    %c0_23 = arith.constant 0 : index
    %c24 = arith.constant 24 : index
    %85 = vector.load %arg13[%c0_23, %c24] : memref<8x32xf32, #tpu.memory_space<vmem>>, vector<8x8xf32>
    tpu.vector_store %arg13[%c0_23, %c24], %84 {strides = array<i32>} : memref<8x32xf32, #tpu.memory_space<vmem>>, vector<8x8xf32>,
    %c0_24 = arith.constant 0 : index
    %c0_25 = arith.constant 0 : index
    %86 = vector.load %arg13[%c0_24, %c0_25] : memref<8x32xf32, #tpu.memory_space<vmem>>, vector<8x32xf32>
    %87 = arith.addf %86, %24 : vector<8x32xf32>
    %c0_26 = arith.constant 0 : index
    %c0_27 = arith.constant 0 : index
    %88 = vector.load %arg6[%c0_26, %c0_27] : memref<1x32xf32, #tpu.memory_space<vmem>>, vector<1x32xf32>
    %c0_28 = arith.constant 0 : index
    %c0_29 = arith.constant 0 : index
    %89 = vector.load %arg7[%c0_28, %c0_29] : memref<1x32xf32, #tpu.memory_space<vmem>>, vector<1x32xf32>
    %cst_30 = arith.constant dense<0.000000e+00> : vector<8xf32>
    %90 = vector.multi_reduction <add>, %87, %cst_30 [1] : vector<8x32xf32> to vector<8xf32>
    %91 = vector.shape_cast %90 : vector<8xf32> to vector<8x1xf32>
    %cst_31 = arith.constant 3.200000e+01 : f32
    %92 = vector.broadcast %cst_31 : f32 to vector<8x1xf32>
    %93 = arith.divf %91, %92 : vector<8x1xf32>
    %94 = vector.broadcast %93 : vector<8x1xf32> to vector<8x32xf32>
    %95 = arith.subf %87, %94 : vector<8x32xf32>
    %96 = arith.mulf %95, %95 : vector<8x32xf32>
    %cst_32 = arith.constant dense<0.000000e+00> : vector<8xf32>
    %97 = vector.multi_reduction <add>, %96, %cst_32 [1] : vector<8x32xf32> to vector<8xf32>
    %98 = vector.shape_cast %97 : vector<8xf32> to vector<8x1xf32>
    %cst_33 = arith.constant 3.200000e+01 : f32
    %99 = vector.broadcast %cst_33 : f32 to vector<8x1xf32>
    %100 = arith.divf %98, %99 : vector<8x1xf32>
    %101 = vector.broadcast %93 : vector<8x1xf32> to vector<8x32xf32>
    %102 = arith.subf %87, %101 : vector<8x32xf32>
    %cst_34 = arith.constant 9.99999974E-6 : f32
    %103 = vector.broadcast %cst_34 : f32 to vector<8x1xf32>
    %104 = arith.addf %100, %103 : vector<8x1xf32>
    %105 = math.rsqrt %104 : vector<8x1xf32>
    %106 = vector.broadcast %105 : vector<8x1xf32> to vector<8x32xf32>
    %107 = arith.mulf %102, %106 : vector<8x32xf32>
    %108 = vector.broadcast %88 : vector<1x32xf32> to vector<8x32xf32>
    %109 = arith.mulf %107, %108 : vector<8x32xf32>
    %110 = vector.broadcast %89 : vector<1x32xf32> to vector<8x32xf32>
    %111 = arith.addf %109, %110 : vector<8x32xf32>
    %c0_35 = arith.constant 0 : index
    %c0_36 = arith.constant 0 : index
    %112 = vector.load %arg8[%c0_35, %c0_36] : memref<32x64xf32, #tpu.memory_space<vmem>>, vector<32x64xf32>
    %cst_37 = arith.constant dense<0.000000e+00> : vector<8x64xf32>
    %113 = tpu.matmul %111, %112, %cst_37 {dimension_numbers = #tpu.dot_dimension_numbers<[1], [0], [0], [1], [0, 0, 1, 1], [], []>} : vector<8x32xf32>, vector<32x64xf32>, vector<8x64xf32> -> vector<8x64xf32>
    %c0_38 = arith.constant 0 : index
    %c0_39 = arith.constant 0 : index
    %114 = vector.load %arg9[%c0_38, %c0_39] : memref<1x64xf32, #tpu.memory_space<vmem>>, vector<1x64xf32>
    %115 = vector.broadcast %114 : vector<1x64xf32> to vector<8x64xf32>
    %116 = arith.addf %113, %115 : vector<8x64xf32>
    %cst_40 = arith.constant 5.000000e-01 : f32
    %117 = vector.broadcast %cst_40 : f32 to vector<8x64xf32>
    %118 = arith.mulf %117, %116 : vector<8x64xf32>
    %cst_41 = arith.constant 0.707106769 : f32
    %119 = vector.broadcast %cst_41 : f32 to vector<8x64xf32>
    %120 = arith.mulf %116, %119 : vector<8x64xf32>
    %121 = math.erf %120 : vector<8x64xf32>
    %cst_42 = arith.constant 1.000000e+00 : f32
    %122 = vector.broadcast %cst_42 : f32 to vector<8x64xf32>
    %123 = arith.addf %122, %121 : vector<8x64xf32>
    %124 = arith.mulf %118, %123 : vector<8x64xf32>
    %c0_43 = arith.constant 0 : index
    %c0_44 = arith.constant 0 : index
    %125 = vector.load %arg10[%c0_43, %c0_44] : memref<64x32xf32, #tpu.memory_space<vmem>>, vector<64x32xf32>
    %cst_45 = arith.constant dense<0.000000e+00> : vector<8x32xf32>
    %126 = tpu.matmul %124, %125, %cst_45 {dimension_numbers = #tpu.dot_dimension_numbers<[1], [0], [0], [1], [0, 0, 1, 1], [], []>} : vector<8x64xf32>, vector<64x32xf32>, vector<8x32xf32> -> vector<8x32xf32>
    %c0_46 = arith.constant 0 : index
    %c0_47 = arith.constant 0 : index
    %127 = vector.load %arg11[%c0_46, %c0_47] : memref<1x32xf32, #tpu.memory_space<vmem>>, vector<1x32xf32>
    %128 = vector.broadcast %127 : vector<1x32xf32> to vector<8x32xf32>
    %129 = arith.addf %126, %128 : vector<8x32xf32>
    %cst_48 = arith.constant 5.000000e-01 : f32
    %130 = vector.broadcast %cst_48 : f32 to vector<8x32xf32>
    %131 = arith.mulf %130, %129 : vector<8x32xf32>
    %cst_49 = arith.constant 0.707106769 : f32
    %132 = vector.broadcast %cst_49 : f32 to vector<8x32xf32>
    %133 = arith.mulf %129, %132 : vector<8x32xf32>
    %134 = math.erf %133 : vector<8x32xf32>
    %cst_50 = arith.constant 1.000000e+00 : f32
    %135 = vector.broadcast %cst_50 : f32 to vector<8x32xf32>
    %136 = arith.addf %135, %134 : vector<8x32xf32>
    %137 = arith.mulf %131, %136 : vector<8x32xf32>
    %138 = arith.addf %137, %111 : vector<8x32xf32>
    %c0_51 = arith.constant 0 : index
    %c0_52 = arith.constant 0 : index
    %139 = vector.load %arg12[%c0_51, %c0_52] : memref<8x32xf32, #tpu.memory_space<vmem>>, vector<8x32xf32>
    tpu.vector_store %arg12[%c0_51, %c0_52], %138 {strides = array<i32>} : memref<8x32xf32, #tpu.memory_space<vmem>>, vector<8x32xf32>,
    return
  }
  func.func @transform_0(%arg0: i32) -> (i32, i32) {
    %c0_i32 = arith.constant 0 : i32
    %c0_i32_0 = arith.constant 0 : i32
    return %arg0, %c0_i32 : i32, i32
  }
  func.func @transform_1(%arg0: i32) -> (i32, i32) {
    %c0_i32 = arith.constant 0 : i32
    %c0_i32_0 = arith.constant 0 : i32
    %c0_i32_1 = arith.constant 0 : i32
    return %c0_i32, %c0_i32_0 : i32, i32
  }
  func.func @transform_2(%arg0: i32) -> (i32, i32) {
    %c0_i32 = arith.constant 0 : i32
    %c0_i32_0 = arith.constant 0 : i32
    %c0_i32_1 = arith.constant 0 : i32
    return %c0_i32, %c0_i32_0 : i32, i32
  }
  func.func @transform_3(%arg0: i32) -> (i32, i32) {
    %c0_i32 = arith.constant 0 : i32
    %c0_i32_0 = arith.constant 0 : i32
    %c0_i32_1 = arith.constant 0 : i32
    return %c0_i32, %c0_i32_0 : i32, i32
  }
  func.func @transform_4(%arg0: i32) -> (i32, i32) {
    %c0_i32 = arith.constant 0 : i32
    %c0_i32_0 = arith.constant 0 : i32
    %c0_i32_1 = arith.constant 0 : i32
    return %c0_i32, %c0_i32_0 : i32, i32
  }
  func.func @transform_5(%arg0: i32) -> (i32, i32) {
    %c0_i32 = arith.constant 0 : i32
    %c0_i32_0 = arith.constant 0 : i32
    %c0_i32_1 = arith.constant 0 : i32
    return %c0_i32, %c0_i32_0 : i32, i32
  }
  func.func @transform_6(%arg0: i32) -> (i32, i32) {
    %c0_i32 = arith.constant 0 : i32
    %c0_i32_0 = arith.constant 0 : i32
    %c0_i32_1 = arith.constant 0 : i32
    return %c0_i32, %c0_i32_0 : i32, i32
  }
  func.func @transform_7(%arg0: i32) -> (i32, i32) {
    %c0_i32 = arith.constant 0 : i32
    %c0_i32_0 = arith.constant 0 : i32
    %c0_i32_1 = arith.constant 0 : i32
    return %c0_i32, %c0_i32_0 : i32, i32
  }
  func.func @transform_8(%arg0: i32) -> (i32, i32) {
    %c0_i32 = arith.constant 0 : i32
    %c0_i32_0 = arith.constant 0 : i32
    %c0_i32_1 = arith.constant 0 : i32
    return %c0_i32, %c0_i32_0 : i32, i32
  }
  func.func @transform_9(%arg0: i32) -> (i32, i32) {
    %c0_i32 = arith.constant 0 : i32
    %c0_i32_0 = arith.constant 0 : i32
    %c0_i32_1 = arith.constant 0 : i32
    return %c0_i32, %c0_i32_0 : i32, i32
  }
  func.func @transform_10(%arg0: i32) -> (i32, i32) {
    %c0_i32 = arith.constant 0 : i32
    %c0_i32_0 = arith.constant 0 : i32
    %c0_i32_1 = arith.constant 0 : i32
    return %c0_i32, %c0_i32_0 : i32, i32
  }
  func.func @transform_11(%arg0: i32) -> (i32, i32) {
    %c0_i32 = arith.constant 0 : i32
    %c0_i32_0 = arith.constant 0 : i32
    return %arg0, %c0_i32 : i32, i32
  }
}

module attributes {stable_mosaic.version = 11 : i64} {
  func.func @encoder_layer_kernel(%arg0: i32, %arg1: memref<8x32xf32, #tpu.memory_space<vmem>>, %arg2: memref<1x32xf32, #tpu.memory_space<vmem>>, %arg3: memref<1x32xf32, #tpu.memory_space<vmem>>, %arg4: memref<4x32x24xf32, #tpu.memory_space<vmem>>, %arg5: memref<4x1x24xf32, #tpu.memory_space<vmem>>, %arg6: memref<1x32xf32, #tpu.memory_space<vmem>>, %arg7: memref<1x32xf32, #tpu.memory_space<vmem>>, %arg8: memref<32x64xf32, #tpu.memory_space<vmem>>, %arg9: memref<1x64xf32, #tpu.memory_space<vmem>>, %arg10: memref<64x32xf32, #tpu.memory_space<vmem>>, %arg11: memref<1x32xf32, #tpu.memory_space<vmem>>, %arg12: memref<8x32xf32, #tpu.memory_space<vmem>>, %arg13: memref<8x32xf32, #tpu.memory_space<vmem>>) attributes {dimension_semantics = [#tpu.dimension_semantics<parallel>], iteration_bounds = array<i64: 2>, scalar_prefetch = 0 : i64, scratch_operands = 1 : i64, tpu.core_type = #tpu.core_type<tc>, window_params = [{transform_indices = @transform_0, window_bounds = array<i64: 8, 32>}, {pipeline_mode = #tpu.pipeline_mode<synchronous>, transform_indices = @transform_1, window_bounds = array<i64: 1, 32>}, {pipeline_mode = #tpu.pipeline_mode<synchronous>, transform_indices = @transform_2, window_bounds = array<i64: 1, 32>}, {pipeline_mode = #tpu.pipeline_mode<synchronous>, transform_indices = @transform_3, window_bounds = array<i64: 4, 32, 24>}, {pipeline_mode = #tpu.pipeline_mode<synchronous>, transform_indices = @transform_4, window_bounds = array<i64: 4, 1, 24>}, {pipeline_mode = #tpu.pipeline_mode<synchronous>, transform_indices = @transform_5, window_bounds = array<i64: 1, 32>}, {pipeline_mode = #tpu.pipeline_mode<synchronous>, transform_indices = @transform_6, window_bounds = array<i64: 1, 32>}, {pipeline_mode = #tpu.pipeline_mode<synchronous>, transform_indices = @transform_7, window_bounds = array<i64: 32, 64>}, {pipeline_mode = #tpu.pipeline_mode<synchronous>, transform_indices = @transform_8, window_bounds = array<i64: 1, 64>}, {pipeline_mode = #tpu.pipeline_mode<synchronous>, transform_indices = @transform_9, window_bounds = array<i64: 64, 32>}, {pipeline_mode = #tpu.pipeline_mode<synchronous>, transform_indices = @transform_10, window_bounds = array<i64: 1, 32>}, {transform_indices = @transform_11, window_bounds = array<i64: 8, 32>}]} {
    %c0 = arith.constant 0 : index
    %c0_0 = arith.constant 0 : index
    %0 = vector.load %arg1[%c0, %c0_0] : memref<8x32xf32, #tpu.memory_space<vmem>>, vector<8x32xf32>
    %c0_1 = arith.constant 0 : index
    %c0_2 = arith.constant 0 : index
    %1 = vector.load %arg2[%c0_1, %c0_2] : memref<1x32xf32, #tpu.memory_space<vmem>>, vector<1x32xf32>
    %c0_3 = arith.constant 0 : index
    %c0_4 = arith.constant 0 : index
    %2 = vector.load %arg3[%c0_3, %c0_4] : memref<1x32xf32, #tpu.memory_space<vmem>>, vector<1x32xf32>
    %cst = arith.constant dense<0.000000e+00> : vector<8xf32>
    %3 = vector.multi_reduction <add>, %0, %cst [1] : vector<8x32xf32> to vector<8xf32>
    %4 = vector.shape_cast %3 : vector<8xf32> to vector<8x1xf32>
    %cst_5 = arith.constant 3.200000e+01 : f32
    %5 = vector.broadcast %cst_5 : f32 to vector<8x1xf32>
    %6 = arith.divf %4, %5 : vector<8x1xf32>
    %7 = vector.broadcast %6 : vector<8x1xf32> to vector<8x32xf32>
    %8 = arith.subf %0, %7 : vector<8x32xf32>
    %9 = arith.mulf %8, %8 : vector<8x32xf32>
    %cst_6 = arith.constant dense<0.000000e+00> : vector<8xf32>
    %10 = vector.multi_reduction <add>, %9, %cst_6 [1] : vector<8x32xf32> to vector<8xf32>
    %11 = vector.shape_cast %10 : vector<8xf32> to vector<8x1xf32>
    %cst_7 = arith.constant 3.200000e+01 : f32
    %12 = vector.broadcast %cst_7 : f32 to vector<8x1xf32>
    %13 = arith.divf %11, %12 : vector<8x1xf32>
    %14 = vector.broadcast %6 : vector<8x1xf32> to vector<8x32xf32>
    %15 = arith.subf %0, %14 : vector<8x32xf32>
    %cst_8 = arith.constant 9.99999974E-6 : f32
    %16 = vector.broadcast %cst_8 : f32 to vector<8x1xf32>
    %17 = arith.addf %13, %16 : vector<8x1xf32>
    %18 = math.rsqrt %17 : vector<8x1xf32>
    %19 = vector.broadcast %18 : vector<8x1xf32> to vector<8x32xf32>
    %20 = arith.mulf %15, %19 : vector<8x32xf32>
    %21 = vector.broadcast %1 : vector<1x32xf32> to vector<8x32xf32>
    %22 = arith.mulf %20, %21 : vector<8x32xf32>
    %23 = vector.broadcast %2 : vector<1x32xf32> to vector<8x32xf32>
    %24 = arith.addf %22, %23 : vector<8x32xf32>
    %25 = vector.shape_cast %24 : vector<8x32xf32> to vector<1x8x32xf32>
    %26 = vector.shape_cast %25 : vector<1x8x32xf32> to vector<1x8x32xf32>
    %27 = vector.broadcast %26 : vector<1x8x32xf32> to vector<4x8x32xf32>
    %c0_9 = arith.constant 0 : index
    %c0_10 = arith.constant 0 : index
    %c0_11 = arith.constant 0 : index
    %28 = vector.load %arg4[%c0_9, %c0_10, %c0_11] : memref<4x32x24xf32, #tpu.memory_space<vmem>>, vector<4x32x24xf32>
    "tpu.trace_start"() <{level = 10 : i32, message = "hmd,hdf->hmf"}> : () -> ()
    %cst_12 = arith.constant dense<0.000000e+00> : vector<4x8x24xf32>
    %29 = tpu.matmul %27, %28, %cst_12 {dimension_numbers = #tpu.dot_dimension_numbers<[2], [1], [1], [2], [0, 0, 0, 1, 1, 2], [0], [0]>} : vector<4x8x32xf32>, vector<4x32x24xf32>, vector<4x8x24xf32> -> vector<4x8x24xf32>
    "tpu.trace_stop"() : () -> ()
    %c0_13 = arith.constant 0 : index
    %c0_14 = arith.constant 0 : index
    %c0_15 = arith.constant 0 : index
    %30 = vector.load %arg5[%c0_13, %c0_14, %c0_15] : memref<4x1x24xf32, #tpu.memory_space<vmem>>, vector<4x1x24xf32>
    %31 = vector.broadcast %30 : vector<4x1x24xf32> to vector<4x8x24xf32>
    %32 = arith.addf %29, %31 : vector<4x8x24xf32>
    %33 = vector.extract_strided_slice %32 {offsets = [0, 0, 0], sizes = [4, 8, 8], strides = [1, 1, 1]} : vector<4x8x24xf32> to vector<4x8x8xf32>
    %34 = vector.extract_strided_slice %32 {offsets = [0, 0, 8], sizes = [4, 8, 8], strides = [1, 1, 1]} : vector<4x8x24xf32> to vector<4x8x8xf32>
    %35 = vector.extract_strided_slice %32 {offsets = [0, 0, 16], sizes = [4, 8, 8], strides = [1, 1, 1]} : vector<4x8x24xf32> to vector<4x8x8xf32>
    "tpu.trace_start"() <{level = 10 : i32, message = "hmd,hnd->hmn"}> : () -> ()
    %cst_16 = arith.constant dense<0.000000e+00> : vector<4x8x8xf32>
    %36 = tpu.matmul %33, %34, %cst_16 {dimension_numbers = #tpu.dot_dimension_numbers<[2], [2], [1], [1], [0, 0, 0, 1, 1, 1], [0], [0]>} : vector<4x8x8xf32>, vector<4x8x8xf32>, vector<4x8x8xf32> -> vector<4x8x8xf32>
    "tpu.trace_stop"() : () -> ()
    %cst_17 = arith.constant 0.353553385 : f32
    %37 = vector.broadcast %cst_17 : f32 to vector<4x8x8xf32>
    %38 = arith.mulf %36, %37 : vector<4x8x8xf32>
    %cst_18 = arith.constant dense<0xFF800000> : vector<4x8xf32>
    %39 = vector.multi_reduction <maximumf>, %38, %cst_18 [2] : vector<4x8x8xf32> to vector<4x8xf32>
    %40 = vector.shape_cast %39 : vector<4x8xf32> to vector<4x8x1xf32>
    %41 = vector.broadcast %40 : vector<4x8x1xf32> to vector<4x8x8xf32>
    %42 = arith.subf %38, %41 : vector<4x8x8xf32>
    %43 = math.exp %42 : vector<4x8x8xf32>
    %cst_19 = arith.constant dense<0.000000e+00> : vector<4x8xf32>
    %44 = vector.multi_reduction <add>, %43, %cst_19 [2] : vector<4x8x8xf32> to vector<4x8xf32>
    %45 = vector.shape_cast %44 : vector<4x8xf32> to vector<4x8x1xf32>
    "tpu.trace_start"() <{level = 10 : i32, message = "hmn,hnd->hmd"}> : () -> ()
    %cst_20 = arith.constant dense<0.000000e+00> : vector<4x8x8xf32>
    %46 = tpu.matmul %43, %35, %cst_20 {dimension_numbers = #tpu.dot_dimension_numbers<[2], [1], [1], [2], [0, 0, 0, 1, 1, 2], [0], [0]>} : vector<4x8x8xf32>, vector<4x8x8xf32>, vector<4x8x8xf32> -> vector<4x8x8xf32>
    "tpu.trace_stop"() : () -> ()
    %47 = tpu.reciprocal %45 {approx = true} : vector<4x8x1xf32> -> vector<4x8x1xf32>
    %48 = vector.broadcast %47 : vector<4x8x1xf32> to vector<4x8x8xf32>
    %49 = arith.mulf %46, %48 : vector<4x8x8xf32>
    %50 = vector.extract_strided_slice %49 {offsets = [0, 0, 0], sizes = [1, 8, 8], strides = [1, 1, 1]} : vector<4x8x8xf32> to vector<1x8x8xf32>
    %51 = vector.shape_cast %50 : vector<1x8x8xf32> to vector<8x8xf32>
    %c0_21 = arith.constant 0 : index
    %c0_22 = arith.constant 0 : index
    %52 = vector.load %arg13[%c0_21, %c0_22] : memref<8x32xf32, #tpu.memory_space<vmem>>, vector<8x8xf32>
    tpu.vector_store %arg13[%c0_21, %c0_22], %51 {strides = array<i32>} : memref<8x32xf32, #tpu.memory_space<vmem>>, vector<8x8xf32>,
    %53 = vector.extract_strided_slice %49 {offsets = [1, 0, 0], sizes = [1, 8, 8], strides = [1, 1, 1]} : vector<4x8x8xf32> to vector<1x8x8xf32>
    %54 = vector.shape_cast %53 : vector<1x8x8xf32> to vector<8x8xf32>
    %c0_23 = arith.constant 0 : index
    %c8 = arith.constant 8 : index
    %55 = vector.load %arg13[%c0_23, %c8] : memref<8x32xf32, #tpu.memory_space<vmem>>, vector<8x8xf32>
    tpu.vector_store %arg13[%c0_23, %c8], %54 {strides = array<i32>} : memref<8x32xf32, #tpu.memory_space<vmem>>, vector<8x8xf32>,
    %56 = vector.extract_strided_slice %49 {offsets = [2, 0, 0], sizes = [1, 8, 8], strides = [1, 1, 1]} : vector<4x8x8xf32> to vector<1x8x8xf32>
    %57 = vector.shape_cast %56 : vector<1x8x8xf32> to vector<8x8xf32>
    %c0_24 = arith.constant 0 : index
    %c16 = arith.constant 16 : index
    %58 = vector.load %arg13[%c0_24, %c16] : memref<8x32xf32, #tpu.memory_space<vmem>>, vector<8x8xf32>
    tpu.vector_store %arg13[%c0_24, %c16], %57 {strides = array<i32>} : memref<8x32xf32, #tpu.memory_space<vmem>>, vector<8x8xf32>,
    %59 = vector.extract_strided_slice %49 {offsets = [3, 0, 0], sizes = [1, 8, 8], strides = [1, 1, 1]} : vector<4x8x8xf32> to vector<1x8x8xf32>
    %60 = vector.shape_cast %59 : vector<1x8x8xf32> to vector<8x8xf32>
    %c0_25 = arith.constant 0 : index
    %c24 = arith.constant 24 : index
    %61 = vector.load %arg13[%c0_25, %c24] : memref<8x32xf32, #tpu.memory_space<vmem>>, vector<8x8xf32>
    tpu.vector_store %arg13[%c0_25, %c24], %60 {strides = array<i32>} : memref<8x32xf32, #tpu.memory_space<vmem>>, vector<8x8xf32>,
    %c0_26 = arith.constant 0 : index
    %c0_27 = arith.constant 0 : index
    %62 = vector.load %arg13[%c0_26, %c0_27] : memref<8x32xf32, #tpu.memory_space<vmem>>, vector<8x32xf32>
    %63 = arith.addf %62, %24 : vector<8x32xf32>
    %c0_28 = arith.constant 0 : index
    %c0_29 = arith.constant 0 : index
    %64 = vector.load %arg6[%c0_28, %c0_29] : memref<1x32xf32, #tpu.memory_space<vmem>>, vector<1x32xf32>
    %c0_30 = arith.constant 0 : index
    %c0_31 = arith.constant 0 : index
    %65 = vector.load %arg7[%c0_30, %c0_31] : memref<1x32xf32, #tpu.memory_space<vmem>>, vector<1x32xf32>
    %cst_32 = arith.constant dense<0.000000e+00> : vector<8xf32>
    %66 = vector.multi_reduction <add>, %63, %cst_32 [1] : vector<8x32xf32> to vector<8xf32>
    %67 = vector.shape_cast %66 : vector<8xf32> to vector<8x1xf32>
    %cst_33 = arith.constant 3.200000e+01 : f32
    %68 = vector.broadcast %cst_33 : f32 to vector<8x1xf32>
    %69 = arith.divf %67, %68 : vector<8x1xf32>
    %70 = vector.broadcast %69 : vector<8x1xf32> to vector<8x32xf32>
    %71 = arith.subf %63, %70 : vector<8x32xf32>
    %72 = arith.mulf %71, %71 : vector<8x32xf32>
    %cst_34 = arith.constant dense<0.000000e+00> : vector<8xf32>
    %73 = vector.multi_reduction <add>, %72, %cst_34 [1] : vector<8x32xf32> to vector<8xf32>
    %74 = vector.shape_cast %73 : vector<8xf32> to vector<8x1xf32>
    %cst_35 = arith.constant 3.200000e+01 : f32
    %75 = vector.broadcast %cst_35 : f32 to vector<8x1xf32>
    %76 = arith.divf %74, %75 : vector<8x1xf32>
    %77 = vector.broadcast %69 : vector<8x1xf32> to vector<8x32xf32>
    %78 = arith.subf %63, %77 : vector<8x32xf32>
    %cst_36 = arith.constant 9.99999974E-6 : f32
    %79 = vector.broadcast %cst_36 : f32 to vector<8x1xf32>
    %80 = arith.addf %76, %79 : vector<8x1xf32>
    %81 = math.rsqrt %80 : vector<8x1xf32>
    %82 = vector.broadcast %81 : vector<8x1xf32> to vector<8x32xf32>
    %83 = arith.mulf %78, %82 : vector<8x32xf32>
    %84 = vector.broadcast %64 : vector<1x32xf32> to vector<8x32xf32>
    %85 = arith.mulf %83, %84 : vector<8x32xf32>
    %86 = vector.broadcast %65 : vector<1x32xf32> to vector<8x32xf32>
    %87 = arith.addf %85, %86 : vector<8x32xf32>
    %c0_37 = arith.constant 0 : index
    %c0_38 = arith.constant 0 : index
    %88 = vector.load %arg8[%c0_37, %c0_38] : memref<32x64xf32, #tpu.memory_space<vmem>>, vector<32x64xf32>
    %cst_39 = arith.constant dense<0.000000e+00> : vector<8x64xf32>
    %89 = tpu.matmul %87, %88, %cst_39 {dimension_numbers = #tpu.dot_dimension_numbers<[1], [0], [0], [1], [0, 0, 1, 1], [], []>} : vector<8x32xf32>, vector<32x64xf32>, vector<8x64xf32> -> vector<8x64xf32>
    %c0_40 = arith.constant 0 : index
    %c0_41 = arith.constant 0 : index
    %90 = vector.load %arg9[%c0_40, %c0_41] : memref<1x64xf32, #tpu.memory_space<vmem>>, vector<1x64xf32>
    %91 = vector.broadcast %90 : vector<1x64xf32> to vector<8x64xf32>
    %92 = arith.addf %89, %91 : vector<8x64xf32>
    %cst_42 = arith.constant 5.000000e-01 : f32
    %93 = vector.broadcast %cst_42 : f32 to vector<8x64xf32>
    %94 = arith.mulf %93, %92 : vector<8x64xf32>
    %cst_43 = arith.constant 0.707106769 : f32
    %95 = vector.broadcast %cst_43 : f32 to vector<8x64xf32>
    %96 = arith.mulf %92, %95 : vector<8x64xf32>
    %97 = math.erf %96 : vector<8x64xf32>
    %cst_44 = arith.constant 1.000000e+00 : f32
    %98 = vector.broadcast %cst_44 : f32 to vector<8x64xf32>
    %99 = arith.addf %98, %97 : vector<8x64xf32>
    %100 = arith.mulf %94, %99 : vector<8x64xf32>
    %c0_45 = arith.constant 0 : index
    %c0_46 = arith.constant 0 : index
    %101 = vector.load %arg10[%c0_45, %c0_46] : memref<64x32xf32, #tpu.memory_space<vmem>>, vector<64x32xf32>
    %cst_47 = arith.constant dense<0.000000e+00> : vector<8x32xf32>
    %102 = tpu.matmul %100, %101, %cst_47 {dimension_numbers = #tpu.dot_dimension_numbers<[1], [0], [0], [1], [0, 0, 1, 1], [], []>} : vector<8x64xf32>, vector<64x32xf32>, vector<8x32xf32> -> vector<8x32xf32>
    %c0_48 = arith.constant 0 : index
    %c0_49 = arith.constant 0 : index
    %103 = vector.load %arg11[%c0_48, %c0_49] : memref<1x32xf32, #tpu.memory_space<vmem>>, vector<1x32xf32>
    %104 = vector.broadcast %103 : vector<1x32xf32> to vector<8x32xf32>
    %105 = arith.addf %102, %104 : vector<8x32xf32>
    %cst_50 = arith.constant 5.000000e-01 : f32
    %106 = vector.broadcast %cst_50 : f32 to vector<8x32xf32>
    %107 = arith.mulf %106, %105 : vector<8x32xf32>
    %cst_51 = arith.constant 0.707106769 : f32
    %108 = vector.broadcast %cst_51 : f32 to vector<8x32xf32>
    %109 = arith.mulf %105, %108 : vector<8x32xf32>
    %110 = math.erf %109 : vector<8x32xf32>
    %cst_52 = arith.constant 1.000000e+00 : f32
    %111 = vector.broadcast %cst_52 : f32 to vector<8x32xf32>
    %112 = arith.addf %111, %110 : vector<8x32xf32>
    %113 = arith.mulf %107, %112 : vector<8x32xf32>
    %114 = arith.addf %113, %87 : vector<8x32xf32>
    %c0_53 = arith.constant 0 : index
    %c0_54 = arith.constant 0 : index
    %115 = vector.load %arg12[%c0_53, %c0_54] : memref<8x32xf32, #tpu.memory_space<vmem>>, vector<8x32xf32>
    tpu.vector_store %arg12[%c0_53, %c0_54], %114 {strides = array<i32>} : memref<8x32xf32, #tpu.memory_space<vmem>>, vector<8x32xf32>,
    return
  }
  func.func @transform_0(%arg0: i32) -> (i32, i32) {
    %c0_i32 = arith.constant 0 : i32
    %c0_i32_0 = arith.constant 0 : i32
    return %arg0, %c0_i32 : i32, i32
  }
  func.func @transform_1(%arg0: i32) -> (i32, i32) {
    %c0_i32 = arith.constant 0 : i32
    %c0_i32_0 = arith.constant 0 : i32
    %c0_i32_1 = arith.constant 0 : i32
    return %c0_i32, %c0_i32_0 : i32, i32
  }
  func.func @transform_2(%arg0: i32) -> (i32, i32) {
    %c0_i32 = arith.constant 0 : i32
    %c0_i32_0 = arith.constant 0 : i32
    %c0_i32_1 = arith.constant 0 : i32
    return %c0_i32, %c0_i32_0 : i32, i32
  }
  func.func @transform_3(%arg0: i32) -> (i32, i32, i32) {
    %c0_i32 = arith.constant 0 : i32
    %c0_i32_0 = arith.constant 0 : i32
    %c0_i32_1 = arith.constant 0 : i32
    %c0_i32_2 = arith.constant 0 : i32
    return %c0_i32, %c0_i32_0, %c0_i32_1 : i32, i32, i32
  }
  func.func @transform_4(%arg0: i32) -> (i32, i32, i32) {
    %c0_i32 = arith.constant 0 : i32
    %c0_i32_0 = arith.constant 0 : i32
    %c0_i32_1 = arith.constant 0 : i32
    %c0_i32_2 = arith.constant 0 : i32
    return %c0_i32, %c0_i32_0, %c0_i32_1 : i32, i32, i32
  }
  func.func @transform_5(%arg0: i32) -> (i32, i32) {
    %c0_i32 = arith.constant 0 : i32
    %c0_i32_0 = arith.constant 0 : i32
    %c0_i32_1 = arith.constant 0 : i32
    return %c0_i32, %c0_i32_0 : i32, i32
  }
  func.func @transform_6(%arg0: i32) -> (i32, i32) {
    %c0_i32 = arith.constant 0 : i32
    %c0_i32_0 = arith.constant 0 : i32
    %c0_i32_1 = arith.constant 0 : i32
    return %c0_i32, %c0_i32_0 : i32, i32
  }
  func.func @transform_7(%arg0: i32) -> (i32, i32) {
    %c0_i32 = arith.constant 0 : i32
    %c0_i32_0 = arith.constant 0 : i32
    %c0_i32_1 = arith.constant 0 : i32
    return %c0_i32, %c0_i32_0 : i32, i32
  }
  func.func @transform_8(%arg0: i32) -> (i32, i32) {
    %c0_i32 = arith.constant 0 : i32
    %c0_i32_0 = arith.constant 0 : i32
    %c0_i32_1 = arith.constant 0 : i32
    return %c0_i32, %c0_i32_0 : i32, i32
  }
  func.func @transform_9(%arg0: i32) -> (i32, i32) {
    %c0_i32 = arith.constant 0 : i32
    %c0_i32_0 = arith.constant 0 : i32
    %c0_i32_1 = arith.constant 0 : i32
    return %c0_i32, %c0_i32_0 : i32, i32
  }
  func.func @transform_10(%arg0: i32) -> (i32, i32) {
    %c0_i32 = arith.constant 0 : i32
    %c0_i32_0 = arith.constant 0 : i32
    %c0_i32_1 = arith.constant 0 : i32
    return %c0_i32, %c0_i32_0 : i32, i32
  }
  func.func @transform_11(%arg0: i32) -> (i32, i32) {
    %c0_i32 = arith.constant 0 : i32
    %c0_i32_0 = arith.constant 0 : i32
    return %arg0, %c0_i32 : i32, i32
  }
}

</mosaic_0001>

<llo_original>
// kernel: tpu_custom_call.1
$region0: #{tpu_custom_call.1}
  #allocation0 [shape = 'u32[]', space=smem, size = 0x4, offset = 0x4, fixed_abs, tag = 'smem constant byte address 0x4 - core index']
  #allocation1 [shape = 'u32[144,128]{1,0:T(1,128)}', space=vmem, size = 0x12000, scoped, tag = 'internal scratch']
  #allocation2 [shape = 'f32[8,32]{1,0:T(8,128)}', space=vmem, size = 0x1000, scoped, tag = 'scratch operand']
  %s0 = inlined_call_operand.vmem [shape: f32[16,32], index: 0, kind: input, shape index: {}]
  %s1 = inlined_call_operand.vmem [shape: f32[1,32], index: 1, kind: input, shape index: {}]
  %s2 = inlined_call_operand.vmem [shape: f32[1,32], index: 2, kind: input, shape index: {}]
  %s3 = inlined_call_operand.vmem [shape: f32[32,96], index: 3, kind: input, shape index: {}]
  %s4 = inlined_call_operand.vmem [shape: f32[1,96], index: 4, kind: input, shape index: {}]
  %s5 = inlined_call_operand.vmem [shape: f32[1,32], index: 5, kind: input, shape index: {}]
  %s6 = inlined_call_operand.vmem [shape: f32[1,32], index: 6, kind: input, shape index: {}]
  %s7 = inlined_call_operand.vmem [shape: f32[32,64], index: 7, kind: input, shape index: {}]
  %s8 = inlined_call_operand.vmem [shape: f32[1,64], index: 8, kind: input, shape index: {}]
  %s9 = inlined_call_operand.vmem [shape: f32[64,32], index: 9, kind: input, shape index: {}]
  %s10 = inlined_call_operand.vmem [shape: f32[1,32], index: 10, kind: input, shape index: {}]
  %s11 = inlined_call_operand.hbm [shape: f32[16,32], index: 11, kind: output, shape index: {}]
  %s12 = sld [smem:[#allocation0]]
  $region77: #{tpu_custom_call.1} parent=0
    _
  %s14 = ssub.s32 1, %s12
  %s15 = scalar_select 0, %s14, %s12
  $region1: #{tpu_custom_call.1} parent=0
    #allocation3 [shape = 'u8[8192]{0}', space=vmem, size = 0x2000, scoped, tag = 'output window, operand 0']
    #allocation4 [shape = 's32[2]{0}', space=sflag, size = 0x8, scoped, tag = 'scoped memory for tpu_custom_call.1']
    %16 = vsyncpa [#allocation4], 0
    %s17 = scalar_lea.sflag [#allocation4], 1
    %18 = vsyncpa %s17, 0
    loop: start=0, step=1, limit=4
    $region2: #{tpu_custom_call.1} parent=1 // loop_pre_header
      _
    $region3: #{tpu_custom_call.1} parent=1 // loop_header
      %s20 = sphi 0, %s24
      %p21 = scmp.ge.s32.totalorder %s20, 4
      %s30 = sphi 0, %s32
      %s33 = sphi 0, %s30
      %s34 = sphi 0, %s33
      %s50 = sphi 0, %s34
      %s54 = sphi 0, %s54
      %s56 = sphi 0, %s54
      %s57 = sphi 0, %s56
      %s71 = sphi 0, %s57
      %s75 = sphi 0, %s75
      %s77 = sphi 0, %s75
      %s78 = sphi 0, %s77
      %s92 = sphi 0, %s78
      %s96 = sphi 0, %s96
      %s98 = sphi 0, %s96
      %s99 = sphi 0, %s98
      %s113 = sphi 0, %s99
      %s117 = sphi 0, %s117
      %s119 = sphi 0, %s117
      %s120 = sphi 0, %s119
      %s134 = sphi 0, %s120
      %s138 = sphi 0, %s138
      %s140 = sphi 0, %s138
      %s141 = sphi 0, %s140
      %s155 = sphi 0, %s141
      %s159 = sphi 0, %s159
      %s161 = sphi 0, %s159
      %s162 = sphi 0, %s161
      %s176 = sphi 0, %s162
      %s180 = sphi 0, %s180
      %s182 = sphi 0, %s180
      %s183 = sphi 0, %s182
      %s197 = sphi 0, %s183
      %s201 = sphi 0, %s201
      %s203 = sphi 0, %s201
      %s204 = sphi 0, %s203
      %s218 = sphi 0, %s204
      %s222 = sphi 0, %s222
      %s224 = sphi 0, %s222
      %s225 = sphi 0, %s224
      %s239 = sphi 0, %s225
      %s243 = sphi 0, %s243
      %s245 = sphi 0, %s243
      %s246 = sphi 0, %s245
      %s260 = sphi 0, %s246
      %s266 = sphi 0, %s268
      %s269 = sphi 0, %s266
      %s270 = sphi 0, %s269
      %s286 = sphi 0, %s270
    $region4: #{tpu_custom_call.1} parent=1 // loop_header_branch
      %23 = sbr.rel (%p21) target = $region8
    $region5: #{tpu_custom_call.1} parent=1 // loop_body
      %s25 = ssub.s32 %s20, 1
      %s26 = ssub.s32 %s20, 2
      %s27 = sadd.s32 %s20, 1
      %s28 = ssub.s32 %s20, %s27
      %p29 = scmp.eq.s32.totalorder %s28, 0
      %s31 = sadd.s32 %s30, 1
      %s32 = scalar_select %p29, %s30, %s31
      %p35 = pneg %p29
      %p36 = scmp.eq.s32.totalorder %s20, 1
      %p37 = por %p35, %p36
      %p38 = scmp.ne.s32.totalorder %s30, %s33
      %p39 = scmp.eq.s32.totalorder %s20, 0
      %p40 = por %p38, %p39
      %p41 = scmp.ne.s32.totalorder %s30, %s33
      %p42 = scmp.eq.s32.totalorder %s25, 1
      %p43 = por %p41, %p42
      %p44 = scmp.ne.s32.totalorder %s33, %s34
      %p45 = scmp.eq.s32.totalorder %s25, 0
      %p46 = por %p44, %p45
      %p47 = scmp.ne.s32.totalorder %s33, %s34
      %p48 = scmp.eq.s32.totalorder %s26, 1
      %p49 = por %p47, %p48
      %p51 = scmp.ne.s32.totalorder %s34, %s50
      %p52 = scmp.eq.s32.totalorder %s26, 0
      %p53 = por %p51, %p52
      %s55 = sadd.s32 %s54, 1
      %p58 = scmp.eq.s32.totalorder %s20, 1
      %p59 = scmp.ne.s32.totalorder %s54, %s56
      %p60 = scmp.eq.s32.totalorder %s20, 0
      %p61 = por %p59, %p60
      %p62 = scmp.ne.s32.totalorder %s54, %s56
      %p63 = scmp.eq.s32.totalorder %s25, 1
      %p64 = por %p62, %p63
      %p65 = scmp.ne.s32.totalorder %s56, %s57
      %p66 = scmp.eq.s32.totalorder %s25, 0
      %p67 = por %p65, %p66
      %p68 = scmp.ne.s32.totalorder %s56, %s57
      %p69 = scmp.eq.s32.totalorder %s26, 1
      %p70 = por %p68, %p69
      %p72 = scmp.ne.s32.totalorder %s57, %s71
      %p73 = scmp.eq.s32.totalorder %s26, 0
      %p74 = por %p72, %p73
      %s76 = sadd.s32 %s75, 1
      %p79 = scmp.eq.s32.totalorder %s20, 1
      %p80 = scmp.ne.s32.totalorder %s75, %s77
      %p81 = scmp.eq.s32.totalorder %s20, 0
      %p82 = por %p80, %p81
      %p83 = scmp.ne.s32.totalorder %s75, %s77
      %p84 = scmp.eq.s32.totalorder %s25, 1
      %p85 = por %p83, %p84
      %p86 = scmp.ne.s32.totalorder %s77, %s78
      %p87 = scmp.eq.s32.totalorder %s25, 0
      %p88 = por %p86, %p87
      %p89 = scmp.ne.s32.totalorder %s77, %s78
      %p90 = scmp.eq.s32.totalorder %s26, 1
      %p91 = por %p89, %p90
      %p93 = scmp.ne.s32.totalorder %s78, %s92
      %p94 = scmp.eq.s32.totalorder %s26, 0
      %p95 = por %p93, %p94
      %s97 = sadd.s32 %s96, 1
      %p100 = scmp.eq.s32.totalorder %s20, 1
      %p101 = scmp.ne.s32.totalorder %s96, %s98
      %p102 = scmp.eq.s32.totalorder %s20, 0
      %p103 = por %p101, %p102
      %p104 = scmp.ne.s32.totalorder %s96, %s98
      %p105 = scmp.eq.s32.totalorder %s25, 1
      %p106 = por %p104, %p105
      %p107 = scmp.ne.s32.totalorder %s98, %s99
      %p108 = scmp.eq.s32.totalorder %s25, 0
      %p109 = por %p107, %p108
      %p110 = scmp.ne.s32.totalorder %s98, %s99
      %p111 = scmp.eq.s32.totalorder %s26, 1
      %p112 = por %p110, %p111
      %p114 = scmp.ne.s32.totalorder %s99, %s113
      %p115 = scmp.eq.s32.totalorder %s26, 0
      %p116 = por %p114, %p115
      %s118 = sadd.s32 %s117, 1
      %p121 = scmp.eq.s32.totalorder %s20, 1
      %p122 = scmp.ne.s32.totalorder %s117, %s119
      %p123 = scmp.eq.s32.totalorder %s20, 0
      %p124 = por %p122, %p123
      %p125 = scmp.ne.s32.totalorder %s117, %s119
      %p126 = scmp.eq.s32.totalorder %s25, 1
      %p127 = por %p125, %p126
      %p128 = scmp.ne.s32.totalorder %s119, %s120
      %p129 = scmp.eq.s32.totalorder %s25, 0
      %p130 = por %p128, %p129
      %p131 = scmp.ne.s32.totalorder %s119, %s120
      %p132 = scmp.eq.s32.totalorder %s26, 1
      %p133 = por %p131, %p132
      %p135 = scmp.ne.s32.totalorder %s120, %s134
      %p136 = scmp.eq.s32.totalorder %s26, 0
      %p137 = por %p135, %p136
      %s139 = sadd.s32 %s138, 1
      %p142 = scmp.eq.s32.totalorder %s20, 1
      %p143 = scmp.ne.s32.totalorder %s138, %s140
      %p144 = scmp.eq.s32.totalorder %s20, 0
      %p145 = por %p143, %p144
      %p146 = scmp.ne.s32.totalorder %s138, %s140
      %p147 = scmp.eq.s32.totalorder %s25, 1
      %p148 = por %p146, %p147
      %p149 = scmp.ne.s32.totalorder %s140, %s141
      %p150 = scmp.eq.s32.totalorder %s25, 0
      %p151 = por %p149, %p150
      %p152 = scmp.ne.s32.totalorder %s140, %s141
      %p153 = scmp.eq.s32.totalorder %s26, 1
      %p154 = por %p152, %p153
      %p156 = scmp.ne.s32.totalorder %s141, %s155
      %p157 = scmp.eq.s32.totalorder %s26, 0
      %p158 = por %p156, %p157
      %s160 = sadd.s32 %s159, 1
      %p163 = scmp.eq.s32.totalorder %s20, 1
      %p164 = scmp.ne.s32.totalorder %s159, %s161
      %p165 = scmp.eq.s32.totalorder %s20, 0
      %p166 = por %p164, %p165
      %p167 = scmp.ne.s32.totalorder %s159, %s161
      %p168 = scmp.eq.s32.totalorder %s25, 1
      %p169 = por %p167, %p168
      %p170 = scmp.ne.s32.totalorder %s161, %s162
      %p171 = scmp.eq.s32.totalorder %s25, 0
      %p172 = por %p170, %p171
      %p173 = scmp.ne.s32.totalorder %s161, %s162
      %p174 = scmp.eq.s32.totalorder %s26, 1
      %p175 = por %p173, %p174
      %p177 = scmp.ne.s32.totalorder %s162, %s176
      %p178 = scmp.eq.s32.totalorder %s26, 0
      %p179 = por %p177, %p178
      %s181 = sadd.s32 %s180, 1
      %p184 = scmp.eq.s32.totalorder %s20, 1
      %p185 = scmp.ne.s32.totalorder %s180, %s182
      %p186 = scmp.eq.s32.totalorder %s20, 0
      %p187 = por %p185, %p186
      %p188 = scmp.ne.s32.totalorder %s180, %s182
      %p189 = scmp.eq.s32.totalorder %s25, 1
      %p190 = por %p188, %p189
      %p191 = scmp.ne.s32.totalorder %s182, %s183
      %p192 = scmp.eq.s32.totalorder %s25, 0
      %p193 = por %p191, %p192
      %p194 = scmp.ne.s32.totalorder %s182, %s183
      %p195 = scmp.eq.s32.totalorder %s26, 1
      %p196 = por %p194, %p195
      %p198 = scmp.ne.s32.totalorder %s183, %s197
      %p199 = scmp.eq.s32.totalorder %s26, 0
      %p200 = por %p198, %p199
      %s202 = sadd.s32 %s201, 1
      %p205 = scmp.eq.s32.totalorder %s20, 1
      %p206 = scmp.ne.s32.totalorder %s201, %s203
      %p207 = scmp.eq.s32.totalorder %s20, 0
      %p208 = por %p206, %p207
      %p209 = scmp.ne.s32.totalorder %s201, %s203
      %p210 = scmp.eq.s32.totalorder %s25, 1
      %p211 = por %p209, %p210
      %p212 = scmp.ne.s32.totalorder %s203, %s204
      %p213 = scmp.eq.s32.totalorder %s25, 0
      %p214 = por %p212, %p213
      %p215 = scmp.ne.s32.totalorder %s203, %s204
      %p216 = scmp.eq.s32.totalorder %s26, 1
      %p217 = por %p215, %p216
      %p219 = scmp.ne.s32.totalorder %s204, %s218
      %p220 = scmp.eq.s32.totalorder %s26, 0
      %p221 = por %p219, %p220
      %s223 = sadd.s32 %s222, 1
      %p226 = scmp.eq.s32.totalorder %s20, 1
      %p227 = scmp.ne.s32.totalorder %s222, %s224
      %p228 = scmp.eq.s32.totalorder %s20, 0
      %p229 = por %p227, %p228
      %p230 = scmp.ne.s32.totalorder %s222, %s224
      %p231 = scmp.eq.s32.totalorder %s25, 1
      %p232 = por %p230, %p231
      %p233 = scmp.ne.s32.totalorder %s224, %s225
      %p234 = scmp.eq.s32.totalorder %s25, 0
      %p235 = por %p233, %p234
      %p236 = scmp.ne.s32.totalorder %s224, %s225
      %p237 = scmp.eq.s32.totalorder %s26, 1
      %p238 = por %p236, %p237
      %p240 = scmp.ne.s32.totalorder %s225, %s239
      %p241 = scmp.eq.s32.totalorder %s26, 0
      %p242 = por %p240, %p241
      %s244 = sadd.s32 %s243, 1
      %p247 = scmp.eq.s32.totalorder %s20, 1
      %p248 = scmp.ne.s32.totalorder %s243, %s245
      %p249 = scmp.eq.s32.totalorder %s20, 0
      %p250 = por %p248, %p249
      %p251 = scmp.ne.s32.totalorder %s243, %s245
      %p252 = scmp.eq.s32.totalorder %s25, 1
      %p253 = por %p251, %p252
      %p254 = scmp.ne.s32.totalorder %s245, %s246
      %p255 = scmp.eq.s32.totalorder %s25, 0
      %p256 = por %p254, %p255
      %p257 = scmp.ne.s32.totalorder %s245, %s246
      %p258 = scmp.eq.s32.totalorder %s26, 1
      %p259 = por %p257, %p258
      %p261 = scmp.ne.s32.totalorder %s246, %s260
      %p262 = scmp.eq.s32.totalorder %s26, 0
      %p263 = por %p261, %p262
      %s264 = ssub.s32 %s20, %s27
      %p265 = scmp.eq.s32.totalorder %s264, 0
      %s267 = sadd.s32 %s266, 1
      %s268 = scalar_select %p265, %s266, %s267
      %p271 = pneg %p265
      %p272 = scmp.eq.s32.totalorder %s20, 1
      %p273 = por %p271, %p272
      %p274 = scmp.ne.s32.totalorder %s266, %s269
      %p275 = scmp.eq.s32.totalorder %s20, 0
      %p276 = por %p274, %p275
      %p277 = scmp.ne.s32.totalorder %s266, %s269
      %p278 = scmp.eq.s32.totalorder %s25, 1
      %p279 = por %p277, %p278
      %p280 = scmp.ne.s32.totalorder %s269, %s270
      %p281 = scmp.eq.s32.totalorder %s25, 0
      %p282 = por %p280, %p281
      %p283 = scmp.ne.s32.totalorder %s269, %s270
      %p284 = scmp.eq.s32.totalorder %s26, 1
      %p285 = por %p283, %p284
      %p287 = scmp.ne.s32.totalorder %s270, %s286
      %p288 = scmp.eq.s32.totalorder %s26, 0
      %p289 = por %p287, %p288
      %p290 = scmp.le.s32.totalorder 1, %s20
      %p291 = scmp.lt.s32.totalorder %s20, 3
      %p292 = pnand %p290, %p291
      %p293 = pneg %p292
      // Predicated region
      $region9: #{tpu_custom_call.1} parent=5 // pred_check
        _
      $region10: #{tpu_custom_call.1} parent=5 // pred_check_branch
        %295 = sbr.rel (%p292) target = $region12
      $region11: #{tpu_custom_call.1} parent=5 // pred_region
        %s296 = ssub.s32 %s20, 1
        // Predicated region
        $region13: #{tpu_custom_call.1} parent=11 // pred_check
          %p297 = pneg %p67
        $region14: #{tpu_custom_call.1} parent=11 // pred_check_branch
          %299 = sbr.rel (%p297) target = $region16
        $region15: #{tpu_custom_call.1} parent=11 // pred_region
          _
        $region16: #{tpu_custom_call.1} parent=11 // pred_fallthru
          _
        // Predicated region
        $region17: #{tpu_custom_call.1} parent=11 // pred_check
          %p300 = pneg %p88
        $region18: #{tpu_custom_call.1} parent=11 // pred_check_branch
          %302 = sbr.rel (%p300) target = $region20
        $region19: #{tpu_custom_call.1} parent=11 // pred_region
          _
        $region20: #{tpu_custom_call.1} parent=11 // pred_fallthru
          _
        // Predicated region
        $region21: #{tpu_custom_call.1} parent=11 // pred_check
          %p303 = pneg %p109
        $region22: #{tpu_custom_call.1} parent=11 // pred_check_branch
          %305 = sbr.rel (%p303) target = $region24
        $region23: #{tpu_custom_call.1} parent=11 // pred_region
          _
        $region24: #{tpu_custom_call.1} parent=11 // pred_fallthru
          _
        // Predicated region
        $region25: #{tpu_custom_call.1} parent=11 // pred_check
          %p306 = pneg %p130
        $region26: #{tpu_custom_call.1} parent=11 // pred_check_branch
          %308 = sbr.rel (%p306) target = $region28
        $region27: #{tpu_custom_call.1} parent=11 // pred_region
          _
        $region28: #{tpu_custom_call.1} parent=11 // pred_fallthru
          _
        // Predicated region
        $region29: #{tpu_custom_call.1} parent=11 // pred_check
          %p309 = pneg %p151
        $region30: #{tpu_custom_call.1} parent=11 // pred_check_branch
          %311 = sbr.rel (%p309) target = $region32
        $region31: #{tpu_custom_call.1} parent=11 // pred_region
          _
        $region32: #{tpu_custom_call.1} parent=11 // pred_fallthru
          _
        // Predicated region
        $region33: #{tpu_custom_call.1} parent=11 // pred_check
          %p312 = pneg %p172
        $region34: #{tpu_custom_call.1} parent=11 // pred_check_branch
          %314 = sbr.rel (%p312) target = $region36
        $region35: #{tpu_custom_call.1} parent=11 // pred_region
          _
        $region36: #{tpu_custom_call.1} parent=11 // pred_fallthru
          _
        // Predicated region
        $region37: #{tpu_custom_call.1} parent=11 // pred_check
          %p315 = pneg %p193
        $region38: #{tpu_custom_call.1} parent=11 // pred_check_branch
          %317 = sbr.rel (%p315) target = $region40
        $region39: #{tpu_custom_call.1} parent=11 // pred_region
          _
        $region40: #{tpu_custom_call.1} parent=11 // pred_fallthru
          _
        // Predicated region
        $region41: #{tpu_custom_call.1} parent=11 // pred_check
          %p318 = pneg %p214
        $region42: #{tpu_custom_call.1} parent=11 // pred_check_branch
          %320 = sbr.rel (%p318) target = $region44
        $region43: #{tpu_custom_call.1} parent=11 // pred_region
          _
        $region44: #{tpu_custom_call.1} parent=11 // pred_fallthru
          _
        // Predicated region
        $region45: #{tpu_custom_call.1} parent=11 // pred_check
          %p321 = pneg %p235
        $region46: #{tpu_custom_call.1} parent=11 // pred_check_branch
          %323 = sbr.rel (%p321) target = $region48
        $region47: #{tpu_custom_call.1} parent=11 // pred_region
          _
        $region48: #{tpu_custom_call.1} parent=11 // pred_fallthru
          _
        // Predicated region
        $region49: #{tpu_custom_call.1} parent=11 // pred_check
          %p324 = pneg %p256
        $region50: #{tpu_custom_call.1} parent=11 // pred_check_branch
          %326 = sbr.rel (%p324) target = $region52
        $region51: #{tpu_custom_call.1} parent=11 // pred_region
          _
        $region52: #{tpu_custom_call.1} parent=11 // pred_fallthru
          _
      $region12: #{tpu_custom_call.1} parent=5 // pred_fallthru
        _
      %p327 = scmp.lt.s32.totalorder %s20, 2
      // Predicated region
      $region53: #{tpu_custom_call.1} parent=5 // pred_check
        %p328 = pneg %p327
      $region54: #{tpu_custom_call.1} parent=5 // pred_check_branch
        %330 = sbr.rel (%p328) target = $region56
      $region55: #{tpu_custom_call.1} parent=5 // pred_region
        // Predicated region
        $region57: #{tpu_custom_call.1} parent=55 // pred_check
          %p331 = pneg %p40
        $region58: #{tpu_custom_call.1} parent=55 // pred_check_branch
          %333 = sbr.rel (%p331) target = $region60
        $region59: #{tpu_custom_call.1} parent=55 // pred_region
          %p334 = scmp.lt.s32.totalorder %s20, 1
          %s335 = scalar_select %p334, %s20, 1
          %s336 = smul.addr %s335, 8
          %s337 = scalar_lea.vmem %s0, %s336
        $region60: #{tpu_custom_call.1} parent=55 // pred_fallthru
          _
      $region56: #{tpu_custom_call.1} parent=5 // pred_fallthru
        _
      %p338 = scmp.le.s32.totalorder 1, %s20
      %p339 = scmp.lt.s32.totalorder %s20, 3
      %p340 = pnand %p338, %p339
      %p341 = pneg %p340
      // Predicated region
      $region61: #{tpu_custom_call.1} parent=5 // pred_check
        _
      $region62: #{tpu_custom_call.1} parent=5 // pred_check_branch
        %343 = sbr.rel (%p340) target = $region64
      $region63: #{tpu_custom_call.1} parent=5 // pred_region
        %s344 = ssub.s32 %s20, 1
        %p345 = scmp.lt.s32.totalorder %s25, 1
        %s346 = scalar_select %p345, %s25, 1
        %s347 = smul.addr %s346, 8
        %s348 = scalar_lea.vmem %s0, %s347
        %p349 = pneg %p46
        %p350 = pneg %p43
        %p351 = pneg %p67
        %p352 = pneg %p64
        %p353 = pneg %p88
        %p354 = pneg %p85
        %p355 = pneg %p109
        %p356 = pneg %p106
        %p357 = pneg %p130
        %p358 = pneg %p127
        %p359 = pneg %p151
        %p360 = pneg %p148
        %p361 = pneg %p172
        %p362 = pneg %p169
        %p363 = pneg %p193
        %p364 = pneg %p190
        %p365 = pneg %p214
        %p366 = pneg %p211
        %p367 = pneg %p235
        %p368 = pneg %p232
        %p369 = pneg %p256
        %p370 = pneg %p253
        %p371 = pneg %p282
        %p372 = pneg %p279
        %s373 = sand.u32 %s269, 1
        %s374 = scalar_lea.sflag [#allocation4], %s373
        %s375 = sand.u32 %s269, 1
        %s376 = smul.addr %s375, 8
        %s377 = scalar_lea.vmem [#allocation3], %s376
        %p378 = scmp.lt.s32.totalorder %s25, 1
        %s379 = scalar_select %p378, %s25, 1
        %s380 = smul.addr %s379, 8
        %s381 = scalar_lea.vmem %s0, %s380
        %v382 = vld [vmem:[%s381] sm:$0xff]
        %v383 = vld [vmem:[%s1] sm:$0x1]
        %v384 = vld [vmem:[%s2] sm:$0x1]
        %vm385 = vcmask 261120
        %v386 = vsel %vm385, %v382, 0.0
        %387 = vadd.xlane.f32.xlu0 %v386
        %v388 = vpop.xlane.xlu0 %387
        %v389 = vrcp.pop 32.0
        %v390 = vmul.f32 %v388, %v389
        %v391 = vsub.f32 %v382, %v390
        %v392 = vmul.f32 %v391, %v391
        %v393 = vsel %vm385, %v392, 0.0
        %394 = vadd.xlane.f32.xlu0 %v393
        %v395 = vpop.xlane.xlu0 %394
        %v396 = vmul.f32 %v395, %v389
        %v397 = vadd.f32 %v396, 1e-05
        %v398 = vrsqrt.pop %v397
        %v399 = vmul.f32 %v391, %v398
        %v401 = vlaneseq
        %v402 = vshrl.u32 %v401, 7
        %v403 = vsub.s32 0, %v402
        %v404 = vrot.slane %v383, %v403
        %v406 = vmul.f32 %v399, %v404
        %v408 = vlaneseq
        %v409 = vshrl.u32 %v408, 7
        %v410 = vsub.s32 0, %v409
        %v411 = vrot.slane %v384, %v410
        %v413 = vadd.f32 %v406, %v411
        %v414 = vld [vmem:[%s3] sm:$0xff]
        %v415 = vld [vmem:[%s3 + $0x8] sm:$0xff]
        %v416 = vld [vmem:[%s3 + $0x10] sm:$0xff]
        %v417 = vld [vmem:[%s3 + $0x18] sm:$0xff]
        %v418 = vld [vmem:[%s4] sm:$0x1]
        %v420 = vlaneseq
        %v421 = vshrl.u32 %v420, 7
        %v422 = vsub.s32 0, %v421
        %v423 = vrot.slane %v418, %v422
        %v426 = vsel %vm385, %v413, 0
        %428 = vmatprep.subr.mxu0 0.0
        %429 = vmatpush1.msra.mxu0 %v414
        %430 = vmatprep.subr.mxu0 0.0
        %431 = vmatpush1.msra.mxu0 %v415
        %432 = vmatprep.subr.mxu0 0.0
        %433 = vmatpush1.msra.mxu0 %v416
        %434 = vmatprep.subr.mxu0 0.0
        %435 = vmatpush1.msra.mxu0 %v417
        %436 = vmatprep.subr.mxu0 0.0
        %437 = vmatpush1.msra.mxu0 0.0
        %438 = vmatprep.subr.mxu0 0.0
        %439 = vmatpush1.msra.mxu0 0.0
        %440 = vmatprep.subr.mxu0 0.0
        %441 = vmatpush1.msra.mxu0 0.0
        %442 = vmatprep.subr.mxu0 0.0
        %443 = vmatpush1.msra.mxu0 0.0
        %444 = vmatprep.subr.mxu0 0.0
        %445 = vmatpush1.msra.mxu0 0.0
        %446 = vmatprep.subr.mxu0 0.0
        %447 = vmatpush1.msra.mxu0 0.0
        %448 = vmatprep.subr.mxu0 0.0
        %449 = vmatpush1.msra.mxu0 0.0
        %450 = vmatprep.subr.mxu0 0.0
        %451 = vmatpush1.msra.mxu0 0.0
        %452 = vmatprep.subr.mxu0 0.0
        %453 = vmatpush1.msra.mxu0 0.0
        %454 = vmatprep.subr.mxu0 0.0
        %455 = vmatpush1.msra.mxu0 0.0
        %456 = vmatprep.subr.mxu0 0.0
        %457 = vmatpush1.msra.mxu0 0.0
        %458 = vmatprep.subr.mxu0 0.0
        %459 = vmatpush1.msra.mxu0 0.0
        %460 = vmatprep.subr.mxu0 0.0
        %461 = vmatpush1.msra.mxu0 0.0
        %462 = vmatprep.subr.mxu0 0.0
        %463 = vmatpush1.msra.mxu0 0.0
        %464 = vmatprep.subr.mxu0 0.0
        %465 = vmatpush1.msra.mxu0 0.0
        %466 = vmatprep.subr.mxu0 0.0
        %467 = vmatpush1.msra.mxu0 0.0
        %468 = vmatprep.subr.mxu0 0.0
        %469 = vmatpush1.msra.mxu0 0.0
        %470 = vmatprep.subr.mxu0 0.0
        %471 = vmatpush1.msra.mxu0 0.0
        %472 = vmatprep.subr.mxu0 0.0
        %473 = vmatpush1.msra.mxu0 0.0
        %474 = vmatprep.subr.mxu0 0.0
        %475 = vmatpush1.msra.mxu0 0.0
        %476 = vmatprep.subr.mxu0 0.0
        %477 = vmatpush1.msra.mxu0 0.0
        %478 = vmatprep.subr.mxu0 0.0
        %479 = vmatpush1.msra.mxu0 0.0
        %480 = vmatprep.subr.mxu0 0.0
        %481 = vmatpush1.msra.mxu0 0.0
        %482 = vmatprep.subr.mxu0 0.0
        %483 = vmatpush1.msra.mxu0 0.0
        %484 = vmatprep.subr.mxu0 0.0
        %485 = vmatpush1.msra.mxu0 0.0
        %486 = vmatprep.subr.mxu0 0.0
        %487 = vmatpush1.msra.mxu0 0.0
        %488 = vmatprep.subr.mxu0 0.0
        %489 = vmatpush1.msra.mxu0 0.0
        %490 = vmatprep.subr.mxu0 0.0
        %491 = vmatpush1.msra.mxu0 0.0
        %492 = vmatprep.mubr.f32.mxu0 0.0
        %493 = vmatmul.mubr.f32.gmra.mrb[0].mxu0 %v426
        %v494 = vpop.f32.mrb[0].mxu0
        %v495 = vadd.f32 %v423, %v494
        %v496 = vpop.f32.mrb[0].mxu0
        %497 = vdwg.mxu0
        %499 = vrot.lane.b32.xlu0 %v495, 120
        %v500 = vpop.permute.xlu0 %499
        %501 = vrot.lane.b32.xlu0 %v495, 112
        %v502 = vpop.permute.xlu0 %501
        %503 = vrot.lane.b32.xlu0 %v495, 104
        %v504 = vpop.permute.xlu0 %503
        %505 = vrot.lane.b32.xlu0 %v495, 96
        %v506 = vpop.permute.xlu0 %505
        %vm507 = vcmask 64512
        %v508 = vsel %vm507, %v495, 0
        %v510 = vsel %vm507, %v506, 0
        %512 = vmatprep.subr.mxu0 0.0
        %513 = vmatpush1.xpose.msra.mxu0 %v510
        %514 = vmatprep.subr.mxu0 0.0
        %515 = vmatpush1.xpose.msra.mxu0 0.0
        %516 = vmatprep.subr.mxu0 0.0
        %517 = vmatpush1.xpose.msra.mxu0 0.0
        %518 = vmatprep.subr.mxu0 0.0
        %519 = vmatpush1.xpose.msra.mxu0 0.0
        %520 = vmatprep.subr.mxu0 0.0
        %521 = vmatpush1.xpose.msra.mxu0 0.0
        %522 = vmatprep.subr.mxu0 0.0
        %523 = vmatpush1.xpose.msra.mxu0 0.0
        %524 = vmatprep.subr.mxu0 0.0
        %525 = vmatpush1.xpose.msra.mxu0 0.0
        %526 = vmatprep.subr.mxu0 0.0
        %527 = vmatpush1.xpose.msra.mxu0 0.0
        %528 = vmatprep.subr.mxu0 0.0
        %529 = vmatpush1.xpose.msra.mxu0 0.0
        %530 = vmatprep.subr.mxu0 0.0
        %531 = vmatpush1.xpose.msra.mxu0 0.0
        %532 = vmatprep.subr.mxu0 0.0
        %533 = vmatpush1.xpose.msra.mxu0 0.0
        %534 = vmatprep.subr.mxu0 0.0
        %535 = vmatpush1.xpose.msra.mxu0 0.0
        %536 = vmatprep.subr.mxu0 0.0
        %537 = vmatpush1.xpose.msra.mxu0 0.0
        %538 = vmatprep.subr.mxu0 0.0
        %539 = vmatpush1.xpose.msra.mxu0 0.0
        %540 = vmatprep.subr.mxu0 0.0
        %541 = vmatpush1.xpose.msra.mxu0 0.0
        %542 = vmatprep.subr.mxu0 0.0
        %543 = vmatpush1.xpose.msra.mxu0 0.0
        %544 = vmatprep.subr.mxu0 0.0
        %545 = vmatpush1.xpose.msra.mxu0 0.0
        %546 = vmatprep.subr.mxu0 0.0
        %547 = vmatpush1.xpose.msra.mxu0 0.0
        %548 = vmatprep.subr.mxu0 0.0
        %549 = vmatpush1.xpose.msra.mxu0 0.0
        %550 = vmatprep.subr.mxu0 0.0
        %551 = vmatpush1.xpose.msra.mxu0 0.0
        %552 = vmatprep.subr.mxu0 0.0
        %553 = vmatpush1.xpose.msra.mxu0 0.0
        %554 = vmatprep.subr.mxu0 0.0
        %555 = vmatpush1.xpose.msra.mxu0 0.0
        %556 = vmatprep.subr.mxu0 0.0
        %557 = vmatpush1.xpose.msra.mxu0 0.0
        %558 = vmatprep.subr.mxu0 0.0
        %559 = vmatpush1.xpose.msra.mxu0 0.0
        %560 = vmatprep.subr.mxu0 0.0
        %561 = vmatpush1.xpose.msra.mxu0 0.0
        %562 = vmatprep.subr.mxu0 0.0
        %563 = vmatpush1.xpose.msra.mxu0 0.0
        %564 = vmatprep.subr.mxu0 0.0
        %565 = vmatpush1.xpose.msra.mxu0 0.0
        %566 = vmatprep.subr.mxu0 0.0
        %567 = vmatpush1.xpose.msra.mxu0 0.0
        %568 = vmatprep.subr.mxu0 0.0
        %569 = vmatpush1.xpose.msra.mxu0 0.0
        %570 = vmatprep.subr.mxu0 0.0
        %571 = vmatpush1.xpose.msra.mxu0 0.0
        %572 = vmatprep.subr.mxu0 0.0
        %573 = vmatpush1.xpose.msra.mxu0 0.0
        %574 = vmatprep.subr.mxu0 0.0
        %575 = vmatpush1.xpose.msra.mxu0 0.0
        %576 = vmatprep.mubr.f32.mxu0 0.0
        %577 = vmatmul.mubr.f32.gmra.mrb[0].mxu0 %v508
        %v578 = vpop.f32.mrb[0].mxu0
        %v579 = vadd.f32 0.0, %v578
        %v580 = vpop.f32.mrb[0].mxu0
        %581 = vdwg.mxu0
        %582 = vrot.lane.b32.xlu0 %v500, 96
        %v583 = vpop.permute.xlu0 %582
        %v584 = vsel %vm507, %v500, 0
        %v586 = vsel %vm507, %v583, 0
        %588 = vmatprep.subr.mxu0 0.0
        %589 = vmatpush1.xpose.msra.mxu0 %v586
        %590 = vmatprep.subr.mxu0 0.0
        %591 = vmatpush1.xpose.msra.mxu0 0.0
        %592 = vmatprep.subr.mxu0 0.0
        %593 = vmatpush1.xpose.msra.mxu0 0.0
        %594 = vmatprep.subr.mxu0 0.0
        %595 = vmatpush1.xpose.msra.mxu0 0.0
        %596 = vmatprep.subr.mxu0 0.0
        %597 = vmatpush1.xpose.msra.mxu0 0.0
        %598 = vmatprep.subr.mxu0 0.0
        %599 = vmatpush1.xpose.msra.mxu0 0.0
        %600 = vmatprep.subr.mxu0 0.0
        %601 = vmatpush1.xpose.msra.mxu0 0.0
        %602 = vmatprep.subr.mxu0 0.0
        %603 = vmatpush1.xpose.msra.mxu0 0.0
        %604 = vmatprep.subr.mxu0 0.0
        %605 = vmatpush1.xpose.msra.mxu0 0.0
        %606 = vmatprep.subr.mxu0 0.0
        %607 = vmatpush1.xpose.msra.mxu0 0.0
        %608 = vmatprep.subr.mxu0 0.0
        %609 = vmatpush1.xpose.msra.mxu0 0.0
        %610 = vmatprep.subr.mxu0 0.0
        %611 = vmatpush1.xpose.msra.mxu0 0.0
        %612 = vmatprep.subr.mxu0 0.0
        %613 = vmatpush1.xpose.msra.mxu0 0.0
        %614 = vmatprep.subr.mxu0 0.0
        %615 = vmatpush1.xpose.msra.mxu0 0.0
        %616 = vmatprep.subr.mxu0 0.0
        %617 = vmatpush1.xpose.msra.mxu0 0.0
        %618 = vmatprep.subr.mxu0 0.0
        %619 = vmatpush1.xpose.msra.mxu0 0.0
        %620 = vmatprep.subr.mxu0 0.0
        %621 = vmatpush1.xpose.msra.mxu0 0.0
        %622 = vmatprep.subr.mxu0 0.0
        %623 = vmatpush1.xpose.msra.mxu0 0.0
        %624 = vmatprep.subr.mxu0 0.0
        %625 = vmatpush1.xpose.msra.mxu0 0.0
        %626 = vmatprep.subr.mxu0 0.0
        %627 = vmatpush1.xpose.msra.mxu0 0.0
        %628 = vmatprep.subr.mxu0 0.0
        %629 = vmatpush1.xpose.msra.mxu0 0.0
        %630 = vmatprep.subr.mxu0 0.0
        %631 = vmatpush1.xpose.msra.mxu0 0.0
        %632 = vmatprep.subr.mxu0 0.0
        %633 = vmatpush1.xpose.msra.mxu0 0.0
        %634 = vmatprep.subr.mxu0 0.0
        %635 = vmatpush1.xpose.msra.mxu0 0.0
        %636 = vmatprep.subr.mxu0 0.0
        %637 = vmatpush1.xpose.msra.mxu0 0.0
        %638 = vmatprep.subr.mxu0 0.0
        %639 = vmatpush1.xpose.msra.mxu0 0.0
        %640 = vmatprep.subr.mxu0 0.0
        %641 = vmatpush1.xpose.msra.mxu0 0.0
        %642 = vmatprep.subr.mxu0 0.0
        %643 = vmatpush1.xpose.msra.mxu0 0.0
        %644 = vmatprep.subr.mxu0 0.0
        %645 = vmatpush1.xpose.msra.mxu0 0.0
        %646 = vmatprep.subr.mxu0 0.0
        %647 = vmatpush1.xpose.msra.mxu0 0.0
        %648 = vmatprep.subr.mxu0 0.0
        %649 = vmatpush1.xpose.msra.mxu0 0.0
        %650 = vmatprep.subr.mxu0 0.0
        %651 = vmatpush1.xpose.msra.mxu0 0.0
        %652 = vmatprep.mubr.f32.mxu0 0.0
        %653 = vmatmul.mubr.f32.gmra.mrb[0].mxu0 %v584
        %v654 = vpop.f32.mrb[0].mxu0
        %v655 = vadd.f32 0.0, %v654
        %v656 = vpop.f32.mrb[0].mxu0
        %657 = vdwg.mxu0
        %658 = vrot.lane.b32.xlu0 %v502, 96
        %v659 = vpop.permute.xlu0 %658
        %v660 = vsel %vm507, %v502, 0
        %v662 = vsel %vm507, %v659, 0
        %664 = vmatprep.subr.mxu0 0.0
        %665 = vmatpush1.xpose.msra.mxu0 %v662
        %666 = vmatprep.subr.mxu0 0.0
        %667 = vmatpush1.xpose.msra.mxu0 0.0
        %668 = vmatprep.subr.mxu0 0.0
        %669 = vmatpush1.xpose.msra.mxu0 0.0
        %670 = vmatprep.subr.mxu0 0.0
        %671 = vmatpush1.xpose.msra.mxu0 0.0
        %672 = vmatprep.subr.mxu0 0.0
        %673 = vmatpush1.xpose.msra.mxu0 0.0
        %674 = vmatprep.subr.mxu0 0.0
        %675 = vmatpush1.xpose.msra.mxu0 0.0
        %676 = vmatprep.subr.mxu0 0.0
        %677 = vmatpush1.xpose.msra.mxu0 0.0
        %678 = vmatprep.subr.mxu0 0.0
        %679 = vmatpush1.xpose.msra.mxu0 0.0
        %680 = vmatprep.subr.mxu0 0.0
        %681 = vmatpush1.xpose.msra.mxu0 0.0
        %682 = vmatprep.subr.mxu0 0.0
        %683 = vmatpush1.xpose.msra.mxu0 0.0
        %684 = vmatprep.subr.mxu0 0.0
        %685 = vmatpush1.xpose.msra.mxu0 0.0
        %686 = vmatprep.subr.mxu0 0.0
        %687 = vmatpush1.xpose.msra.mxu0 0.0
        %688 = vmatprep.subr.mxu0 0.0
        %689 = vmatpush1.xpose.msra.mxu0 0.0
        %690 = vmatprep.subr.mxu0 0.0
        %691 = vmatpush1.xpose.msra.mxu0 0.0
        %692 = vmatprep.subr.mxu0 0.0
        %693 = vmatpush1.xpose.msra.mxu0 0.0
        %694 = vmatprep.subr.mxu0 0.0
        %695 = vmatpush1.xpose.msra.mxu0 0.0
        %696 = vmatprep.subr.mxu0 0.0
        %697 = vmatpush1.xpose.msra.mxu0 0.0
        %698 = vmatprep.subr.mxu0 0.0
        %699 = vmatpush1.xpose.msra.mxu0 0.0
        %700 = vmatprep.subr.mxu0 0.0
        %701 = vmatpush1.xpose.msra.mxu0 0.0
        %702 = vmatprep.subr.mxu0 0.0
        %703 = vmatpush1.xpose.msra.mxu0 0.0
        %704 = vmatprep.subr.mxu0 0.0
        %705 = vmatpush1.xpose.msra.mxu0 0.0
        %706 = vmatprep.subr.mxu0 0.0
        %707 = vmatpush1.xpose.msra.mxu0 0.0
        %708 = vmatprep.subr.mxu0 0.0
        %709 = vmatpush1.xpose.msra.mxu0 0.0
        %710 = vmatprep.subr.mxu0 0.0
        %711 = vmatpush1.xpose.msra.mxu0 0.0
        %712 = vmatprep.subr.mxu0 0.0
        %713 = vmatpush1.xpose.msra.mxu0 0.0
        %714 = vmatprep.subr.mxu0 0.0
        %715 = vmatpush1.xpose.msra.mxu0 0.0
        %716 = vmatprep.subr.mxu0 0.0
        %717 = vmatpush1.xpose.msra.mxu0 0.0
        %718 = vmatprep.subr.mxu0 0.0
        %719 = vmatpush1.xpose.msra.mxu0 0.0
        %720 = vmatprep.subr.mxu0 0.0
        %721 = vmatpush1.xpose.msra.mxu0 0.0
        %722 = vmatprep.subr.mxu0 0.0
        %723 = vmatpush1.xpose.msra.mxu0 0.0
        %724 = vmatprep.subr.mxu0 0.0
        %725 = vmatpush1.xpose.msra.mxu0 0.0
        %726 = vmatprep.subr.mxu0 0.0
        %727 = vmatpush1.xpose.msra.mxu0 0.0
        %728 = vmatprep.mubr.f32.mxu0 0.0
        %729 = vmatmul.mubr.f32.gmra.mrb[0].mxu0 %v660
        %v730 = vpop.f32.mrb[0].mxu0
        %v731 = vadd.f32 0.0, %v730
        %v732 = vpop.f32.mrb[0].mxu0
        %733 = vdwg.mxu0
        %734 = vrot.lane.b32.xlu0 %v504, 96
        %v735 = vpop.permute.xlu0 %734
        %v736 = vsel %vm507, %v504, 0
        %v738 = vsel %vm507, %v735, 0
        %740 = vmatprep.subr.mxu0 0.0
        %741 = vmatpush1.xpose.msra.mxu0 %v738
        %742 = vmatprep.subr.mxu0 0.0
        %743 = vmatpush1.xpose.msra.mxu0 0.0
        %744 = vmatprep.subr.mxu0 0.0
        %745 = vmatpush1.xpose.msra.mxu0 0.0
        %746 = vmatprep.subr.mxu0 0.0
        %747 = vmatpush1.xpose.msra.mxu0 0.0
        %748 = vmatprep.subr.mxu0 0.0
        %749 = vmatpush1.xpose.msra.mxu0 0.0
        %750 = vmatprep.subr.mxu0 0.0
        %751 = vmatpush1.xpose.msra.mxu0 0.0
        %752 = vmatprep.subr.mxu0 0.0
        %753 = vmatpush1.xpose.msra.mxu0 0.0
        %754 = vmatprep.subr.mxu0 0.0
        %755 = vmatpush1.xpose.msra.mxu0 0.0
        %756 = vmatprep.subr.mxu0 0.0
        %757 = vmatpush1.xpose.msra.mxu0 0.0
        %758 = vmatprep.subr.mxu0 0.0
        %759 = vmatpush1.xpose.msra.mxu0 0.0
        %760 = vmatprep.subr.mxu0 0.0
        %761 = vmatpush1.xpose.msra.mxu0 0.0
        %762 = vmatprep.subr.mxu0 0.0
        %763 = vmatpush1.xpose.msra.mxu0 0.0
        %764 = vmatprep.subr.mxu0 0.0
        %765 = vmatpush1.xpose.msra.mxu0 0.0
        %766 = vmatprep.subr.mxu0 0.0
        %767 = vmatpush1.xpose.msra.mxu0 0.0
        %768 = vmatprep.subr.mxu0 0.0
        %769 = vmatpush1.xpose.msra.mxu0 0.0
        %770 = vmatprep.subr.mxu0 0.0
        %771 = vmatpush1.xpose.msra.mxu0 0.0
        %772 = vmatprep.subr.mxu0 0.0
        %773 = vmatpush1.xpose.msra.mxu0 0.0
        %774 = vmatprep.subr.mxu0 0.0
        %775 = vmatpush1.xpose.msra.mxu0 0.0
        %776 = vmatprep.subr.mxu0 0.0
        %777 = vmatpush1.xpose.msra.mxu0 0.0
        %778 = vmatprep.subr.mxu0 0.0
        %779 = vmatpush1.xpose.msra.mxu0 0.0
        %780 = vmatprep.subr.mxu0 0.0
        %781 = vmatpush1.xpose.msra.mxu0 0.0
        %782 = vmatprep.subr.mxu0 0.0
        %783 = vmatpush1.xpose.msra.mxu0 0.0
        %784 = vmatprep.subr.mxu0 0.0
        %785 = vmatpush1.xpose.msra.mxu0 0.0
        %786 = vmatprep.subr.mxu0 0.0
        %787 = vmatpush1.xpose.msra.mxu0 0.0
        %788 = vmatprep.subr.mxu0 0.0
        %789 = vmatpush1.xpose.msra.mxu0 0.0
        %790 = vmatprep.subr.mxu0 0.0
        %791 = vmatpush1.xpose.msra.mxu0 0.0
        %792 = vmatprep.subr.mxu0 0.0
        %793 = vmatpush1.xpose.msra.mxu0 0.0
        %794 = vmatprep.subr.mxu0 0.0
        %795 = vmatpush1.xpose.msra.mxu0 0.0
        %796 = vmatprep.subr.mxu0 0.0
        %797 = vmatpush1.xpose.msra.mxu0 0.0
        %798 = vmatprep.subr.mxu0 0.0
        %799 = vmatpush1.xpose.msra.mxu0 0.0
        %800 = vmatprep.subr.mxu0 0.0
        %801 = vmatpush1.xpose.msra.mxu0 0.0
        %802 = vmatprep.subr.mxu0 0.0
        %803 = vmatpush1.xpose.msra.mxu0 0.0
        %804 = vmatprep.mubr.f32.mxu0 0.0
        %805 = vmatmul.mubr.f32.gmra.mrb[0].mxu0 %v736
        %v806 = vpop.f32.mrb[0].mxu0
        %v807 = vadd.f32 0.0, %v806
        %v808 = vpop.f32.mrb[0].mxu0
        %809 = vdwg.mxu0
        %v810 = vmul.f32 %v579, 0.35355338
        %v811 = vmul.f32 %v655, 0.35355338
        %v812 = vmul.f32 %v731, 0.35355338
        %v813 = vmul.f32 %v807, 0.35355338
        %v814 = vsel %vm507, %v810, -inf
        %815 = vmax.xlane.f32.xlu0 %v814
        %v816 = vpop.xlane.xlu0 %815
        %v817 = vsel %vm507, %v811, -inf
        %818 = vmax.xlane.f32.xlu0 %v817
        %v819 = vpop.xlane.xlu0 %818
        %v820 = vsel %vm507, %v812, -inf
        %821 = vmax.xlane.f32.xlu0 %v820
        %v822 = vpop.xlane.xlu0 %821
        %v823 = vsel %vm507, %v813, -inf
        %824 = vmax.xlane.f32.xlu0 %v823
        %v825 = vpop.xlane.xlu0 %824
        %v826 = vsub.f32 %v810, %v816
        %v827 = vsub.f32 %v811, %v819
        %v828 = vsub.f32 %v812, %v822
        %v829 = vsub.f32 %v813, %v825
        %v830 = vmul.f32 %v826, 1.442695
        %v831 = vpow.pop %v830
        %v832 = vmul.f32 %v827, 1.442695
        %v833 = vpow.pop %v832
        %v834 = vmul.f32 %v828, 1.442695
        %v835 = vpow.pop %v834
        %v836 = vmul.f32 %v829, 1.442695
        %v837 = vpow.pop %v836
        %v838 = vsel %vm507, %v831, 0.0
        %839 = vadd.xlane.f32.xlu0 %v838
        %v840 = vpop.xlane.xlu0 %839
        %v841 = vsel %vm507, %v833, 0.0
        %842 = vadd.xlane.f32.xlu0 %v841
        %v843 = vpop.xlane.xlu0 %842
        %v844 = vsel %vm507, %v835, 0.0
        %845 = vadd.xlane.f32.xlu0 %v844
        %v846 = vpop.xlane.xlu0 %845
        %v847 = vsel %vm507, %v837, 0.0
        %848 = vadd.xlane.f32.xlu0 %v847
        %v849 = vpop.xlane.xlu0 %848
        %850 = vrot.lane.b32.xlu0 %v495, 64
        %v851 = vpop.permute.xlu0 %850
        %v854 = vsel %vm507, %v831, 0
        %856 = vmatprep.subr.mxu0 0.0
        %857 = vmatpush1.msra.mxu0 %v851
        %858 = vmatprep.subr.mxu0 0.0
        %859 = vmatpush1.msra.mxu0 0.0
        %860 = vmatprep.subr.mxu0 0.0
        %861 = vmatpush1.msra.mxu0 0.0
        %862 = vmatprep.subr.mxu0 0.0
        %863 = vmatpush1.msra.mxu0 0.0
        %864 = vmatprep.subr.mxu0 0.0
        %865 = vmatpush1.msra.mxu0 0.0
        %866 = vmatprep.subr.mxu0 0.0
        %867 = vmatpush1.msra.mxu0 0.0
        %868 = vmatprep.subr.mxu0 0.0
        %869 = vmatpush1.msra.mxu0 0.0
        %870 = vmatprep.subr.mxu0 0.0
        %871 = vmatpush1.msra.mxu0 0.0
        %872 = vmatprep.subr.mxu0 0.0
        %873 = vmatpush1.msra.mxu0 0.0
        %874 = vmatprep.subr.mxu0 0.0
        %875 = vmatpush1.msra.mxu0 0.0
        %876 = vmatprep.subr.mxu0 0.0
        %877 = vmatpush1.msra.mxu0 0.0
        %878 = vmatprep.subr.mxu0 0.0
        %879 = vmatpush1.msra.mxu0 0.0
        %880 = vmatprep.subr.mxu0 0.0
        %881 = vmatpush1.msra.mxu0 0.0
        %882 = vmatprep.subr.mxu0 0.0
        %883 = vmatpush1.msra.mxu0 0.0
        %884 = vmatprep.subr.mxu0 0.0
        %885 = vmatpush1.msra.mxu0 0.0
        %886 = vmatprep.subr.mxu0 0.0
        %887 = vmatpush1.msra.mxu0 0.0
        %888 = vmatprep.subr.mxu0 0.0
        %889 = vmatpush1.msra.mxu0 0.0
        %890 = vmatprep.subr.mxu0 0.0
        %891 = vmatpush1.msra.mxu0 0.0
        %892 = vmatprep.subr.mxu0 0.0
        %893 = vmatpush1.msra.mxu0 0.0
        %894 = vmatprep.subr.mxu0 0.0
        %895 = vmatpush1.msra.mxu0 0.0
        %896 = vmatprep.subr.mxu0 0.0
        %897 = vmatpush1.msra.mxu0 0.0
        %898 = vmatprep.subr.mxu0 0.0
        %899 = vmatpush1.msra.mxu0 0.0
        %900 = vmatprep.subr.mxu0 0.0
        %901 = vmatpush1.msra.mxu0 0.0
        %902 = vmatprep.subr.mxu0 0.0
        %903 = vmatpush1.msra.mxu0 0.0
        %904 = vmatprep.subr.mxu0 0.0
        %905 = vmatpush1.msra.mxu0 0.0
        %906 = vmatprep.subr.mxu0 0.0
        %907 = vmatpush1.msra.mxu0 0.0
        %908 = vmatprep.subr.mxu0 0.0
        %909 = vmatpush1.msra.mxu0 0.0
        %910 = vmatprep.subr.mxu0 0.0
        %911 = vmatpush1.msra.mxu0 0.0
        %912 = vmatprep.subr.mxu0 0.0
        %913 = vmatpush1.msra.mxu0 0.0
        %914 = vmatprep.subr.mxu0 0.0
        %915 = vmatpush1.msra.mxu0 0.0
        %916 = vmatprep.subr.mxu0 0.0
        %917 = vmatpush1.msra.mxu0 0.0
        %918 = vmatprep.subr.mxu0 0.0
        %919 = vmatpush1.msra.mxu0 0.0
        %920 = vmatprep.mubr.f32.mxu0 0.0
        %921 = vmatmul.mubr.f32.gmra.mrb[0].mxu0 %v854
        %v922 = vpop.f32.mrb[0].mxu0
        %v923 = vadd.f32 0.0, %v922
        %v924 = vpop.f32.mrb[0].mxu0
        %925 = vdwg.mxu0
        %926 = vrot.lane.b32.xlu0 %v500, 64
        %v927 = vpop.permute.xlu0 %926
        %v930 = vsel %vm507, %v833, 0
        %932 = vmatprep.subr.mxu0 0.0
        %933 = vmatpush1.msra.mxu0 %v927
        %934 = vmatprep.subr.mxu0 0.0
        %935 = vmatpush1.msra.mxu0 0.0
        %936 = vmatprep.subr.mxu0 0.0
        %937 = vmatpush1.msra.mxu0 0.0
        %938 = vmatprep.subr.mxu0 0.0
        %939 = vmatpush1.msra.mxu0 0.0
        %940 = vmatprep.subr.mxu0 0.0
        %941 = vmatpush1.msra.mxu0 0.0
        %942 = vmatprep.subr.mxu0 0.0
        %943 = vmatpush1.msra.mxu0 0.0
        %944 = vmatprep.subr.mxu0 0.0
        %945 = vmatpush1.msra.mxu0 0.0
        %946 = vmatprep.subr.mxu0 0.0
        %947 = vmatpush1.msra.mxu0 0.0
        %948 = vmatprep.subr.mxu0 0.0
        %949 = vmatpush1.msra.mxu0 0.0
        %950 = vmatprep.subr.mxu0 0.0
        %951 = vmatpush1.msra.mxu0 0.0
        %952 = vmatprep.subr.mxu0 0.0
        %953 = vmatpush1.msra.mxu0 0.0
        %954 = vmatprep.subr.mxu0 0.0
        %955 = vmatpush1.msra.mxu0 0.0
        %956 = vmatprep.subr.mxu0 0.0
        %957 = vmatpush1.msra.mxu0 0.0
        %958 = vmatprep.subr.mxu0 0.0
        %959 = vmatpush1.msra.mxu0 0.0
        %960 = vmatprep.subr.mxu0 0.0
        %961 = vmatpush1.msra.mxu0 0.0
        %962 = vmatprep.subr.mxu0 0.0
        %963 = vmatpush1.msra.mxu0 0.0
        %964 = vmatprep.subr.mxu0 0.0
        %965 = vmatpush1.msra.mxu0 0.0
        %966 = vmatprep.subr.mxu0 0.0
        %967 = vmatpush1.msra.mxu0 0.0
        %968 = vmatprep.subr.mxu0 0.0
        %969 = vmatpush1.msra.mxu0 0.0
        %970 = vmatprep.subr.mxu0 0.0
        %971 = vmatpush1.msra.mxu0 0.0
        %972 = vmatprep.subr.mxu0 0.0
        %973 = vmatpush1.msra.mxu0 0.0
        %974 = vmatprep.subr.mxu0 0.0
        %975 = vmatpush1.msra.mxu0 0.0
        %976 = vmatprep.subr.mxu0 0.0
        %977 = vmatpush1.msra.mxu0 0.0
        %978 = vmatprep.subr.mxu0 0.0
        %979 = vmatpush1.msra.mxu0 0.0
        %980 = vmatprep.subr.mxu0 0.0
        %981 = vmatpush1.msra.mxu0 0.0
        %982 = vmatprep.subr.mxu0 0.0
        %983 = vmatpush1.msra.mxu0 0.0
        %984 = vmatprep.subr.mxu0 0.0
        %985 = vmatpush1.msra.mxu0 0.0
        %986 = vmatprep.subr.mxu0 0.0
        %987 = vmatpush1.msra.mxu0 0.0
        %988 = vmatprep.subr.mxu0 0.0
        %989 = vmatpush1.msra.mxu0 0.0
        %990 = vmatprep.subr.mxu0 0.0
        %991 = vmatpush1.msra.mxu0 0.0
        %992 = vmatprep.subr.mxu0 0.0
        %993 = vmatpush1.msra.mxu0 0.0
        %994 = vmatprep.subr.mxu0 0.0
        %995 = vmatpush1.msra.mxu0 0.0
        %996 = vmatprep.mubr.f32.mxu0 0.0
        %997 = vmatmul.mubr.f32.gmra.mrb[0].mxu0 %v930
        %v998 = vpop.f32.mrb[0].mxu0
        %v999 = vadd.f32 0.0, %v998
        %v1000 = vpop.f32.mrb[0].mxu0
        %1001 = vdwg.mxu0
        %1002 = vrot.lane.b32.xlu0 %v502, 64
        %v1003 = vpop.permute.xlu0 %1002
        %v1006 = vsel %vm507, %v835, 0
        %1008 = vmatprep.subr.mxu0 0.0
        %1009 = vmatpush1.msra.mxu0 %v1003
        %1010 = vmatprep.subr.mxu0 0.0
        %1011 = vmatpush1.msra.mxu0 0.0
        %1012 = vmatprep.subr.mxu0 0.0
        %1013 = vmatpush1.msra.mxu0 0.0
        %1014 = vmatprep.subr.mxu0 0.0
        %1015 = vmatpush1.msra.mxu0 0.0
        %1016 = vmatprep.subr.mxu0 0.0
        %1017 = vmatpush1.msra.mxu0 0.0
        %1018 = vmatprep.subr.mxu0 0.0
        %1019 = vmatpush1.msra.mxu0 0.0
        %1020 = vmatprep.subr.mxu0 0.0
        %1021 = vmatpush1.msra.mxu0 0.0
        %1022 = vmatprep.subr.mxu0 0.0
        %1023 = vmatpush1.msra.mxu0 0.0
        %1024 = vmatprep.subr.mxu0 0.0
        %1025 = vmatpush1.msra.mxu0 0.0
        %1026 = vmatprep.subr.mxu0 0.0
        %1027 = vmatpush1.msra.mxu0 0.0
        %1028 = vmatprep.subr.mxu0 0.0
        %1029 = vmatpush1.msra.mxu0 0.0
        %1030 = vmatprep.subr.mxu0 0.0
        %1031 = vmatpush1.msra.mxu0 0.0
        %1032 = vmatprep.subr.mxu0 0.0
        %1033 = vmatpush1.msra.mxu0 0.0
        %1034 = vmatprep.subr.mxu0 0.0
        %1035 = vmatpush1.msra.mxu0 0.0
        %1036 = vmatprep.subr.mxu0 0.0
        %1037 = vmatpush1.msra.mxu0 0.0
        %1038 = vmatprep.subr.mxu0 0.0
        %1039 = vmatpush1.msra.mxu0 0.0
        %1040 = vmatprep.subr.mxu0 0.0
        %1041 = vmatpush1.msra.mxu0 0.0
        %1042 = vmatprep.subr.mxu0 0.0
        %1043 = vmatpush1.msra.mxu0 0.0
        %1044 = vmatprep.subr.mxu0 0.0
        %1045 = vmatpush1.msra.mxu0 0.0
        %1046 = vmatprep.subr.mxu0 0.0
        %1047 = vmatpush1.msra.mxu0 0.0
        %1048 = vmatprep.subr.mxu0 0.0
        %1049 = vmatpush1.msra.mxu0 0.0
        %1050 = vmatprep.subr.mxu0 0.0
        %1051 = vmatpush1.msra.mxu0 0.0
        %1052 = vmatprep.subr.mxu0 0.0
        %1053 = vmatpush1.msra.mxu0 0.0
        %1054 = vmatprep.subr.mxu0 0.0
        %1055 = vmatpush1.msra.mxu0 0.0
        %1056 = vmatprep.subr.mxu0 0.0
        %1057 = vmatpush1.msra.mxu0 0.0
        %1058 = vmatprep.subr.mxu0 0.0
        %1059 = vmatpush1.msra.mxu0 0.0
        %1060 = vmatprep.subr.mxu0 0.0
        %1061 = vmatpush1.msra.mxu0 0.0
        %1062 = vmatprep.subr.mxu0 0.0
        %1063 = vmatpush1.msra.mxu0 0.0
        %1064 = vmatprep.subr.mxu0 0.0
        %1065 = vmatpush1.msra.mxu0 0.0
        %1066 = vmatprep.subr.mxu0 0.0
        %1067 = vmatpush1.msra.mxu0 0.0
        %1068 = vmatprep.subr.mxu0 0.0
        %1069 = vmatpush1.msra.mxu0 0.0
        %1070 = vmatprep.subr.mxu0 0.0
        %1071 = vmatpush1.msra.mxu0 0.0
        %1072 = vmatprep.mubr.f32.mxu0 0.0
        %1073 = vmatmul.mubr.f32.gmra.mrb[0].mxu0 %v1006
        %v1074 = vpop.f32.mrb[0].mxu0
        %v1075 = vadd.f32 0.0, %v1074
        %v1076 = vpop.f32.mrb[0].mxu0
        %1077 = vdwg.mxu0
        %1078 = vrot.lane.b32.xlu0 %v504, 64
        %v1079 = vpop.permute.xlu0 %1078
        %v1082 = vsel %vm507, %v837, 0
        %1084 = vmatprep.subr.mxu0 0.0
        %1085 = vmatpush1.msra.mxu0 %v1079
        %1086 = vmatprep.subr.mxu0 0.0
        %1087 = vmatpush1.msra.mxu0 0.0
        %1088 = vmatprep.subr.mxu0 0.0
        %1089 = vmatpush1.msra.mxu0 0.0
        %1090 = vmatprep.subr.mxu0 0.0
        %1091 = vmatpush1.msra.mxu0 0.0
        %1092 = vmatprep.subr.mxu0 0.0
        %1093 = vmatpush1.msra.mxu0 0.0
        %1094 = vmatprep.subr.mxu0 0.0
        %1095 = vmatpush1.msra.mxu0 0.0
        %1096 = vmatprep.subr.mxu0 0.0
        %1097 = vmatpush1.msra.mxu0 0.0
        %1098 = vmatprep.subr.mxu0 0.0
        %1099 = vmatpush1.msra.mxu0 0.0
        %1100 = vmatprep.subr.mxu0 0.0
        %1101 = vmatpush1.msra.mxu0 0.0
        %1102 = vmatprep.subr.mxu0 0.0
        %1103 = vmatpush1.msra.mxu0 0.0
        %1104 = vmatprep.subr.mxu0 0.0
        %1105 = vmatpush1.msra.mxu0 0.0
        %1106 = vmatprep.subr.mxu0 0.0
        %1107 = vmatpush1.msra.mxu0 0.0
        %1108 = vmatprep.subr.mxu0 0.0
        %1109 = vmatpush1.msra.mxu0 0.0
        %1110 = vmatprep.subr.mxu0 0.0
        %1111 = vmatpush1.msra.mxu0 0.0
        %1112 = vmatprep.subr.mxu0 0.0
        %1113 = vmatpush1.msra.mxu0 0.0
        %1114 = vmatprep.subr.mxu0 0.0
        %1115 = vmatpush1.msra.mxu0 0.0
        %1116 = vmatprep.subr.mxu0 0.0
        %1117 = vmatpush1.msra.mxu0 0.0
        %1118 = vmatprep.subr.mxu0 0.0
        %1119 = vmatpush1.msra.mxu0 0.0
        %1120 = vmatprep.subr.mxu0 0.0
        %1121 = vmatpush1.msra.mxu0 0.0
        %1122 = vmatprep.subr.mxu0 0.0
        %1123 = vmatpush1.msra.mxu0 0.0
        %1124 = vmatprep.subr.mxu0 0.0
        %1125 = vmatpush1.msra.mxu0 0.0
        %1126 = vmatprep.subr.mxu0 0.0
        %1127 = vmatpush1.msra.mxu0 0.0
        %1128 = vmatprep.subr.mxu0 0.0
        %1129 = vmatpush1.msra.mxu0 0.0
        %1130 = vmatprep.subr.mxu0 0.0
        %1131 = vmatpush1.msra.mxu0 0.0
        %1132 = vmatprep.subr.mxu0 0.0
        %1133 = vmatpush1.msra.mxu0 0.0
        %1134 = vmatprep.subr.mxu0 0.0
        %1135 = vmatpush1.msra.mxu0 0.0
        %1136 = vmatprep.subr.mxu0 0.0
        %1137 = vmatpush1.msra.mxu0 0.0
        %1138 = vmatprep.subr.mxu0 0.0
        %1139 = vmatpush1.msra.mxu0 0.0
        %1140 = vmatprep.subr.mxu0 0.0
        %1141 = vmatpush1.msra.mxu0 0.0
        %1142 = vmatprep.subr.mxu0 0.0
        %1143 = vmatpush1.msra.mxu0 0.0
        %1144 = vmatprep.subr.mxu0 0.0
        %1145 = vmatpush1.msra.mxu0 0.0
        %1146 = vmatprep.subr.mxu0 0.0
        %1147 = vmatpush1.msra.mxu0 0.0
        %1148 = vmatprep.mubr.f32.mxu0 0.0
        %1149 = vmatmul.mubr.f32.gmra.mrb[0].mxu0 %v1082
        %v1150 = vpop.f32.mrb[0].mxu0
        %v1151 = vadd.f32 0.0, %v1150
        %v1152 = vpop.f32.mrb[0].mxu0
        %1153 = vdwg.mxu0
        %v1154 = vrcp.pop %v840
        %v1155 = vrcp.pop %v843
        %v1156 = vrcp.pop %v846
        %v1157 = vrcp.pop %v849
        %v1158 = vmul.f32 %v923, %v1154
        %v1159 = vmul.f32 %v999, %v1155
        %v1160 = vmul.f32 %v1075, %v1156
        %v1161 = vmul.f32 %v1151, %v1157
        %1162 = vst.msk [vmem:[#allocation2] sm:$0xff] %vm507, %v1158
        %1164 = vrot.lane.b32.xlu0 %v1159, 8
        %v1165 = vpop.permute.xlu0 %1164
        %vm1167 = vcmask 130112
        %1168 = vst.msk [vmem:[#allocation2] sm:$0xff] %vm1167, %v1165
        %1170 = vrot.lane.b32.xlu0 %v1160, 16
        %v1171 = vpop.permute.xlu0 %1170
        %vm1173 = vcmask 195712
        %1174 = vst.msk [vmem:[#allocation2] sm:$0xff] %vm1173, %v1171
        %1176 = vrot.lane.b32.xlu0 %v1161, 24
        %v1177 = vpop.permute.xlu0 %1176
        %vm1179 = vcmask 261312
        %1180 = vst.msk [vmem:[#allocation2] sm:$0xff] %vm1179, %v1177
        %v1181 = vld [vmem:[#allocation2] sm:$0xff]
        %v1182 = vadd.f32 %v1181, %v413
        %v1183 = vld [vmem:[%s5] sm:$0x1]
        %v1184 = vld [vmem:[%s6] sm:$0x1]
        %v1185 = vsel %vm385, %v1182, 0.0
        %1186 = vadd.xlane.f32.xlu0 %v1185
        %v1187 = vpop.xlane.xlu0 %1186
        %v1188 = vmul.f32 %v1187, %v389
        %v1189 = vsub.f32 %v1182, %v1188
        %v1190 = vmul.f32 %v1189, %v1189
        %v1191 = vsel %vm385, %v1190, 0.0
        %1192 = vadd.xlane.f32.xlu0 %v1191
        %v1193 = vpop.xlane.xlu0 %1192
        %v1194 = vmul.f32 %v1193, %v389
        %v1195 = vadd.f32 %v1194, 1e-05
        %v1196 = vrsqrt.pop %v1195
        %v1197 = vmul.f32 %v1189, %v1196
        %v1199 = vlaneseq
        %v1200 = vshrl.u32 %v1199, 7
        %v1201 = vsub.s32 0, %v1200
        %v1202 = vrot.slane %v1183, %v1201
        %v1204 = vmul.f32 %v1197, %v1202
        %v1206 = vlaneseq
        %v1207 = vshrl.u32 %v1206, 7
        %v1208 = vsub.s32 0, %v1207
        %v1209 = vrot.slane %v1184, %v1208
        %v1211 = vadd.f32 %v1204, %v1209
        %v1212 = vld [vmem:[%s7] sm:$0xff]
        %v1213 = vld [vmem:[%s7 + $0x8] sm:$0xff]
        %v1214 = vld [vmem:[%s7 + $0x10] sm:$0xff]
        %v1215 = vld [vmem:[%s7 + $0x18] sm:$0xff]
        %v1216 = vld [vmem:[%s8] sm:$0x1]
        %v1218 = vlaneseq
        %v1219 = vshrl.u32 %v1218, 7
        %v1220 = vsub.s32 0, %v1219
        %v1221 = vrot.slane %v1216, %v1220
        %v1224 = vsel %vm385, %v1211, 0
        %1226 = vmatprep.subr.mxu0 0.0
        %1227 = vmatpush1.msra.mxu0 %v1212
        %1228 = vmatprep.subr.mxu0 0.0
        %1229 = vmatpush1.msra.mxu0 %v1213
        %1230 = vmatprep.subr.mxu0 0.0
        %1231 = vmatpush1.msra.mxu0 %v1214
        %1232 = vmatprep.subr.mxu0 0.0
        %1233 = vmatpush1.msra.mxu0 %v1215
        %1234 = vmatprep.subr.mxu0 0.0
        %1235 = vmatpush1.msra.mxu0 0.0
        %1236 = vmatprep.subr.mxu0 0.0
        %1237 = vmatpush1.msra.mxu0 0.0
        %1238 = vmatprep.subr.mxu0 0.0
        %1239 = vmatpush1.msra.mxu0 0.0
        %1240 = vmatprep.subr.mxu0 0.0
        %1241 = vmatpush1.msra.mxu0 0.0
        %1242 = vmatprep.subr.mxu0 0.0
        %1243 = vmatpush1.msra.mxu0 0.0
        %1244 = vmatprep.subr.mxu0 0.0
        %1245 = vmatpush1.msra.mxu0 0.0
        %1246 = vmatprep.subr.mxu0 0.0
        %1247 = vmatpush1.msra.mxu0 0.0
        %1248 = vmatprep.subr.mxu0 0.0
        %1249 = vmatpush1.msra.mxu0 0.0
        %1250 = vmatprep.subr.mxu0 0.0
        %1251 = vmatpush1.msra.mxu0 0.0
        %1252 = vmatprep.subr.mxu0 0.0
        %1253 = vmatpush1.msra.mxu0 0.0
        %1254 = vmatprep.subr.mxu0 0.0
        %1255 = vmatpush1.msra.mxu0 0.0
        %1256 = vmatprep.subr.mxu0 0.0
        %1257 = vmatpush1.msra.mxu0 0.0
        %1258 = vmatprep.subr.mxu0 0.0
        %1259 = vmatpush1.msra.mxu0 0.0
        %1260 = vmatprep.subr.mxu0 0.0
        %1261 = vmatpush1.msra.mxu0 0.0
        %1262 = vmatprep.subr.mxu0 0.0
        %1263 = vmatpush1.msra.mxu0 0.0
        %1264 = vmatprep.subr.mxu0 0.0
        %1265 = vmatpush1.msra.mxu0 0.0
        %1266 = vmatprep.subr.mxu0 0.0
        %1267 = vmatpush1.msra.mxu0 0.0
        %1268 = vmatprep.subr.mxu0 0.0
        %1269 = vmatpush1.msra.mxu0 0.0
        %1270 = vmatprep.subr.mxu0 0.0
        %1271 = vmatpush1.msra.mxu0 0.0
        %1272 = vmatprep.subr.mxu0 0.0
        %1273 = vmatpush1.msra.mxu0 0.0
        %1274 = vmatprep.subr.mxu0 0.0
        %1275 = vmatpush1.msra.mxu0 0.0
        %1276 = vmatprep.subr.mxu0 0.0
        %1277 = vmatpush1.msra.mxu0 0.0
        %1278 = vmatprep.subr.mxu0 0.0
        %1279 = vmatpush1.msra.mxu0 0.0
        %1280 = vmatprep.subr.mxu0 0.0
        %1281 = vmatpush1.msra.mxu0 0.0
        %1282 = vmatprep.subr.mxu0 0.0
        %1283 = vmatpush1.msra.mxu0 0.0
        %1284 = vmatprep.subr.mxu0 0.0
        %1285 = vmatpush1.msra.mxu0 0.0
        %1286 = vmatprep.subr.mxu0 0.0
        %1287 = vmatpush1.msra.mxu0 0.0
        %1288 = vmatprep.subr.mxu0 0.0
        %1289 = vmatpush1.msra.mxu0 0.0
        %1290 = vmatprep.mubr.f32.mxu0 0.0
        %1291 = vmatmul.mubr.f32.gmra.mrb[0].mxu0 %v1224
        %v1292 = vpop.f32.mrb[0].mxu0
        %v1293 = vadd.f32 %v1221, %v1292
        %v1294 = vpop.f32.mrb[0].mxu0
        %1295 = vdwg.mxu0
        %v1296 = vmul.f32 %v1293, 0.5
        %v1297 = vmul.f32 %v1293, 0.70710677
        %v1298 = verf.f32.pop %v1297
        %v1299 = vadd.f32 %v1298, 1.0
        %v1300 = vmul.f32 %v1296, %v1299
        %v1301 = vld [vmem:[%s9] sm:$0xff]
        %v1302 = vld [vmem:[%s9 + $0x8] sm:$0xff]
        %v1303 = vld [vmem:[%s9 + $0x10] sm:$0xff]
        %v1304 = vld [vmem:[%s9 + $0x18] sm:$0xff]
        %v1305 = vld [vmem:[%s9 + $0x20] sm:$0xff]
        %v1306 = vld [vmem:[%s9 + $0x28] sm:$0xff]
        %v1307 = vld [vmem:[%s9 + $0x30] sm:$0xff]
        %v1308 = vld [vmem:[%s9 + $0x38] sm:$0xff]
        %v1309 = vld [vmem:[%s10] sm:$0x1]
        %v1311 = vlaneseq
        %v1312 = vshrl.u32 %v1311, 7
        %v1313 = vsub.s32 0, %v1312
        %v1314 = vrot.slane %v1309, %v1313
        %vm1316 = vcmask 523264
        %v1318 = vsel %vm1316, %v1300, 0
        %1320 = vmatprep.subr.mxu0 0.0
        %1321 = vmatpush1.msra.mxu0 %v1301
        %1322 = vmatprep.subr.mxu0 0.0
        %1323 = vmatpush1.msra.mxu0 %v1302
        %1324 = vmatprep.subr.mxu0 0.0
        %1325 = vmatpush1.msra.mxu0 %v1303
        %1326 = vmatprep.subr.mxu0 0.0
        %1327 = vmatpush1.msra.mxu0 %v1304
        %1328 = vmatprep.subr.mxu0 0.0
        %1329 = vmatpush1.msra.mxu0 %v1305
        %1330 = vmatprep.subr.mxu0 0.0
        %1331 = vmatpush1.msra.mxu0 %v1306
        %1332 = vmatprep.subr.mxu0 0.0
        %1333 = vmatpush1.msra.mxu0 %v1307
        %1334 = vmatprep.subr.mxu0 0.0
        %1335 = vmatpush1.msra.mxu0 %v1308
        %1336 = vmatprep.subr.mxu0 0.0
        %1337 = vmatpush1.msra.mxu0 0.0
        %1338 = vmatprep.subr.mxu0 0.0
        %1339 = vmatpush1.msra.mxu0 0.0
        %1340 = vmatprep.subr.mxu0 0.0
        %1341 = vmatpush1.msra.mxu0 0.0
        %1342 = vmatprep.subr.mxu0 0.0
        %1343 = vmatpush1.msra.mxu0 0.0
        %1344 = vmatprep.subr.mxu0 0.0
        %1345 = vmatpush1.msra.mxu0 0.0
        %1346 = vmatprep.subr.mxu0 0.0
        %1347 = vmatpush1.msra.mxu0 0.0
        %1348 = vmatprep.subr.mxu0 0.0
        %1349 = vmatpush1.msra.mxu0 0.0
        %1350 = vmatprep.subr.mxu0 0.0
        %1351 = vmatpush1.msra.mxu0 0.0
        %1352 = vmatprep.subr.mxu0 0.0
        %1353 = vmatpush1.msra.mxu0 0.0
        %1354 = vmatprep.subr.mxu0 0.0
        %1355 = vmatpush1.msra.mxu0 0.0
        %1356 = vmatprep.subr.mxu0 0.0
        %1357 = vmatpush1.msra.mxu0 0.0
        %1358 = vmatprep.subr.mxu0 0.0
        %1359 = vmatpush1.msra.mxu0 0.0
        %1360 = vmatprep.subr.mxu0 0.0
        %1361 = vmatpush1.msra.mxu0 0.0
        %1362 = vmatprep.subr.mxu0 0.0
        %1363 = vmatpush1.msra.mxu0 0.0
        %1364 = vmatprep.subr.mxu0 0.0
        %1365 = vmatpush1.msra.mxu0 0.0
        %1366 = vmatprep.subr.mxu0 0.0
        %1367 = vmatpush1.msra.mxu0 0.0
        %1368 = vmatprep.subr.mxu0 0.0
        %1369 = vmatpush1.msra.mxu0 0.0
        %1370 = vmatprep.subr.mxu0 0.0
        %1371 = vmatpush1.msra.mxu0 0.0
        %1372 = vmatprep.subr.mxu0 0.0
        %1373 = vmatpush1.msra.mxu0 0.0
        %1374 = vmatprep.subr.mxu0 0.0
        %1375 = vmatpush1.msra.mxu0 0.0
        %1376 = vmatprep.subr.mxu0 0.0
        %1377 = vmatpush1.msra.mxu0 0.0
        %1378 = vmatprep.subr.mxu0 0.0
        %1379 = vmatpush1.msra.mxu0 0.0
        %1380 = vmatprep.subr.mxu0 0.0
        %1381 = vmatpush1.msra.mxu0 0.0
        %1382 = vmatprep.subr.mxu0 0.0
        %1383 = vmatpush1.msra.mxu0 0.0
        %1384 = vmatprep.mubr.f32.mxu0 0.0
        %1385 = vmatmul.mubr.f32.gmra.mrb[0].mxu0 %v1318
        %v1386 = vpop.f32.mrb[0].mxu0
        %v1387 = vadd.f32 %v1314, %v1386
        %v1388 = vpop.f32.mrb[0].mxu0
        %1389 = vdwg.mxu0
        %v1390 = vmul.f32 %v1387, 0.5
        %v1391 = vmul.f32 %v1387, 0.70710677
        %v1392 = verf.f32.pop %v1391
        %v1393 = vadd.f32 %v1392, 1.0
        %v1394 = vmul.f32 %v1390, %v1393
        %v1395 = vadd.f32 %v1394, %v1211
        %1396 = vst.msk [vmem:[%s377] sm:$0xff] %vm385, %v1395
        %s1397 = sand.u32 %s269, 1
        %s1398 = scalar_lea.sflag [#allocation4], %s1397
        %s1399 = sand.u32 %s269, 1
        %s1400 = smul.addr %s1399, 8
        %s1401 = scalar_lea.vmem [#allocation3], %s1400
        // Predicated region
        $region65: #{tpu_custom_call.1} parent=63 // pred_check
          %p1402 = pneg %p279
        $region66: #{tpu_custom_call.1} parent=63 // pred_check_branch
          %1404 = sbr.rel (%p1402) target = $region68
        $region67: #{tpu_custom_call.1} parent=63 // pred_region
          %s1406 = ssub.s32 128, 128
          %1407 = vsyncadd %s1398, %s1406
          %s1408 = smul.addr %s25, 128
          %s1409 = scalar_lea.hbm %s11, %s1408
          %s1411 = sshll.u32 %s1401, 4
          %s1412 = int_to_ptr.vmem [resolvable:$true] %s1411
          %1414 = dma.vmem_to_hbm [thread:$0]  %s1412, 128, %s1409, %s1398
        $region68: #{tpu_custom_call.1} parent=63 // pred_fallthru
          _
      $region64: #{tpu_custom_call.1} parent=5 // pred_fallthru
        _
      %p1415 = scmp.le.s32.totalorder 2, %s20
      // Predicated region
      $region69: #{tpu_custom_call.1} parent=5 // pred_check
        %p1416 = pneg %p1415
      $region70: #{tpu_custom_call.1} parent=5 // pred_check_branch
        %1418 = sbr.rel (%p1416) target = $region72
      $region71: #{tpu_custom_call.1} parent=5 // pred_region
        %s1419 = ssub.s32 %s20, 2
        // Predicated region
        $region73: #{tpu_custom_call.1} parent=71 // pred_check
          %p1420 = pneg %p285
        $region74: #{tpu_custom_call.1} parent=71 // pred_check_branch
          %1422 = sbr.rel (%p1420) target = $region76
        $region75: #{tpu_custom_call.1} parent=71 // pred_region
          %s1423 = sand.u32 %s270, 1
          %s1424 = scalar_lea.sflag [#allocation4], %s1423
          %s1425 = sand.u32 %s270, 1
          %s1426 = smul.addr %s1425, 8
          %s1427 = scalar_lea.vmem [#allocation3], %s1426
          %1428 = dma.done %s1424, 128
        $region76: #{tpu_custom_call.1} parent=71 // pred_fallthru
          _
      $region72: #{tpu_custom_call.1} parent=5 // pred_fallthru
        _
    $region6: #{tpu_custom_call.1} parent=1 // loop_footer
      %s24 = sadd.s32 1, %s20
    $region7: #{tpu_custom_call.1} parent=1 // loop_footer_branch
      %19 = sbr.rel target = $region3
    $region8: #{tpu_custom_call.1} parent=1 // loop_exit
      _
    %1429 = vsyncpa [#allocation4], 1
    %s1430 = scalar_lea.sflag [#allocation4], 1
    %1431 = vsyncpa %s1430, 1

// kernel: tpu_custom_call.1
$region0: #{tpu_custom_call.1}
  #allocation0 [shape = 'u32[]', space=smem, size = 0x4, offset = 0x4, fixed_abs, tag = 'smem constant byte address 0x4 - core index']
  #allocation1 [shape = 'u32[144,128]{1,0:T(1,128)}', space=vmem, size = 0x12000, scoped, tag = 'internal scratch']
  #allocation2 [shape = 'f32[8,32]{1,0:T(8,128)}', space=vmem, size = 0x1000, scoped, tag = 'scratch operand']
  %s0 = inlined_call_operand.vmem [shape: f32[16,32], index: 0, kind: input, shape index: {}]
  %s1 = inlined_call_operand.vmem [shape: f32[1,32], index: 1, kind: input, shape index: {}]
  %s2 = inlined_call_operand.vmem [shape: f32[1,32], index: 2, kind: input, shape index: {}]
  %s3 = inlined_call_operand.vmem [shape: f32[32,96], index: 3, kind: input, shape index: {}]
  %s4 = inlined_call_operand.vmem [shape: f32[1,96], index: 4, kind: input, shape index: {}]
  %s5 = inlined_call_operand.vmem [shape: f32[1,32], index: 5, kind: input, shape index: {}]
  %s6 = inlined_call_operand.vmem [shape: f32[1,32], index: 6, kind: input, shape index: {}]
  %s7 = inlined_call_operand.vmem [shape: f32[32,64], index: 7, kind: input, shape index: {}]
  %s8 = inlined_call_operand.vmem [shape: f32[1,64], index: 8, kind: input, shape index: {}]
  %s9 = inlined_call_operand.vmem [shape: f32[64,32], index: 9, kind: input, shape index: {}]
  %s10 = inlined_call_operand.vmem [shape: f32[1,32], index: 10, kind: input, shape index: {}]
  %s11 = inlined_call_operand.hbm [shape: f32[16,32], index: 11, kind: output, shape index: {}]
  %s12 = sld [smem:[#allocation0]]
  $region77: #{tpu_custom_call.1} parent=0
    _
  %s14 = ssub.s32 1, %s12
  %s15 = scalar_select 0, %s14, %s12
  $region1: #{tpu_custom_call.1} parent=0
    #allocation3 [shape = 'u8[8192]{0}', space=vmem, size = 0x2000, scoped, tag = 'output window, operand 0']
    #allocation4 [shape = 's32[2]{0}', space=sflag, size = 0x8, scoped, tag = 'scoped memory for tpu_custom_call.1']
    %16 = vsyncpa [#allocation4], 0
    %s17 = scalar_lea.sflag [#allocation4], 1
    %18 = vsyncpa %s17, 0
    loop: start=0, step=1, limit=4
    $region2: #{tpu_custom_call.1} parent=1 // loop_pre_header
      _
    $region3: #{tpu_custom_call.1} parent=1 // loop_header
      %s20 = sphi 0, %s24
      %p21 = scmp.ge.s32.totalorder %s20, 4
      %s30 = sphi 0, %s32
      %s33 = sphi 0, %s30
      %s34 = sphi 0, %s33
      %s50 = sphi 0, %s34
      %s54 = sphi 0, %s54
      %s56 = sphi 0, %s54
      %s57 = sphi 0, %s56
      %s71 = sphi 0, %s57
      %s75 = sphi 0, %s75
      %s77 = sphi 0, %s75
      %s78 = sphi 0, %s77
      %s92 = sphi 0, %s78
      %s96 = sphi 0, %s96
      %s98 = sphi 0, %s96
      %s99 = sphi 0, %s98
      %s113 = sphi 0, %s99
      %s117 = sphi 0, %s117
      %s119 = sphi 0, %s117
      %s120 = sphi 0, %s119
      %s134 = sphi 0, %s120
      %s138 = sphi 0, %s138
      %s140 = sphi 0, %s138
      %s141 = sphi 0, %s140
      %s155 = sphi 0, %s141
      %s159 = sphi 0, %s159
      %s161 = sphi 0, %s159
      %s162 = sphi 0, %s161
      %s176 = sphi 0, %s162
      %s180 = sphi 0, %s180
      %s182 = sphi 0, %s180
      %s183 = sphi 0, %s182
      %s197 = sphi 0, %s183
      %s201 = sphi 0, %s201
      %s203 = sphi 0, %s201
      %s204 = sphi 0, %s203
      %s218 = sphi 0, %s204
      %s222 = sphi 0, %s222
      %s224 = sphi 0, %s222
      %s225 = sphi 0, %s224
      %s239 = sphi 0, %s225
      %s243 = sphi 0, %s243
      %s245 = sphi 0, %s243
      %s246 = sphi 0, %s245
      %s260 = sphi 0, %s246
      %s266 = sphi 0, %s268
      %s269 = sphi 0, %s266
      %s270 = sphi 0, %s269
      %s286 = sphi 0, %s270
    $region4: #{tpu_custom_call.1} parent=1 // loop_header_branch
      %23 = sbr.rel (%p21) target = $region8
    $region5: #{tpu_custom_call.1} parent=1 // loop_body
      %s25 = ssub.s32 %s20, 1
      %s26 = ssub.s32 %s20, 2
      %s27 = sadd.s32 %s20, 1
      %s28 = ssub.s32 %s20, %s27
      %p29 = scmp.eq.s32.totalorder %s28, 0
      %s31 = sadd.s32 %s30, 1
      %s32 = scalar_select %p29, %s30, %s31
      %p35 = pneg %p29
      %p36 = scmp.eq.s32.totalorder %s20, 1
      %p37 = por %p35, %p36
      %p38 = scmp.ne.s32.totalorder %s30, %s33
      %p39 = scmp.eq.s32.totalorder %s20, 0
      %p40 = por %p38, %p39
      %p41 = scmp.ne.s32.totalorder %s30, %s33
      %p42 = scmp.eq.s32.totalorder %s25, 1
      %p43 = por %p41, %p42
      %p44 = scmp.ne.s32.totalorder %s33, %s34
      %p45 = scmp.eq.s32.totalorder %s25, 0
      %p46 = por %p44, %p45
      %p47 = scmp.ne.s32.totalorder %s33, %s34
      %p48 = scmp.eq.s32.totalorder %s26, 1
      %p49 = por %p47, %p48
      %p51 = scmp.ne.s32.totalorder %s34, %s50
      %p52 = scmp.eq.s32.totalorder %s26, 0
      %p53 = por %p51, %p52
      %s55 = sadd.s32 %s54, 1
      %p58 = scmp.eq.s32.totalorder %s20, 1
      %p59 = scmp.ne.s32.totalorder %s54, %s56
      %p60 = scmp.eq.s32.totalorder %s20, 0
      %p61 = por %p59, %p60
      %p62 = scmp.ne.s32.totalorder %s54, %s56
      %p63 = scmp.eq.s32.totalorder %s25, 1
      %p64 = por %p62, %p63
      %p65 = scmp.ne.s32.totalorder %s56, %s57
      %p66 = scmp.eq.s32.totalorder %s25, 0
      %p67 = por %p65, %p66
      %p68 = scmp.ne.s32.totalorder %s56, %s57
      %p69 = scmp.eq.s32.totalorder %s26, 1
      %p70 = por %p68, %p69
      %p72 = scmp.ne.s32.totalorder %s57, %s71
      %p73 = scmp.eq.s32.totalorder %s26, 0
      %p74 = por %p72, %p73
      %s76 = sadd.s32 %s75, 1
      %p79 = scmp.eq.s32.totalorder %s20, 1
      %p80 = scmp.ne.s32.totalorder %s75, %s77
      %p81 = scmp.eq.s32.totalorder %s20, 0
      %p82 = por %p80, %p81
      %p83 = scmp.ne.s32.totalorder %s75, %s77
      %p84 = scmp.eq.s32.totalorder %s25, 1
      %p85 = por %p83, %p84
      %p86 = scmp.ne.s32.totalorder %s77, %s78
      %p87 = scmp.eq.s32.totalorder %s25, 0
      %p88 = por %p86, %p87
      %p89 = scmp.ne.s32.totalorder %s77, %s78
      %p90 = scmp.eq.s32.totalorder %s26, 1
      %p91 = por %p89, %p90
      %p93 = scmp.ne.s32.totalorder %s78, %s92
      %p94 = scmp.eq.s32.totalorder %s26, 0
      %p95 = por %p93, %p94
      %s97 = sadd.s32 %s96, 1
      %p100 = scmp.eq.s32.totalorder %s20, 1
      %p101 = scmp.ne.s32.totalorder %s96, %s98
      %p102 = scmp.eq.s32.totalorder %s20, 0
      %p103 = por %p101, %p102
      %p104 = scmp.ne.s32.totalorder %s96, %s98
      %p105 = scmp.eq.s32.totalorder %s25, 1
      %p106 = por %p104, %p105
      %p107 = scmp.ne.s32.totalorder %s98, %s99
      %p108 = scmp.eq.s32.totalorder %s25, 0
      %p109 = por %p107, %p108
      %p110 = scmp.ne.s32.totalorder %s98, %s99
      %p111 = scmp.eq.s32.totalorder %s26, 1
      %p112 = por %p110, %p111
      %p114 = scmp.ne.s32.totalorder %s99, %s113
      %p115 = scmp.eq.s32.totalorder %s26, 0
      %p116 = por %p114, %p115
      %s118 = sadd.s32 %s117, 1
      %p121 = scmp.eq.s32.totalorder %s20, 1
      %p122 = scmp.ne.s32.totalorder %s117, %s119
      %p123 = scmp.eq.s32.totalorder %s20, 0
      %p124 = por %p122, %p123
      %p125 = scmp.ne.s32.totalorder %s117, %s119
      %p126 = scmp.eq.s32.totalorder %s25, 1
      %p127 = por %p125, %p126
      %p128 = scmp.ne.s32.totalorder %s119, %s120
      %p129 = scmp.eq.s32.totalorder %s25, 0
      %p130 = por %p128, %p129
      %p131 = scmp.ne.s32.totalorder %s119, %s120
      %p132 = scmp.eq.s32.totalorder %s26, 1
      %p133 = por %p131, %p132
      %p135 = scmp.ne.s32.totalorder %s120, %s134
      %p136 = scmp.eq.s32.totalorder %s26, 0
      %p137 = por %p135, %p136
      %s139 = sadd.s32 %s138, 1
      %p142 = scmp.eq.s32.totalorder %s20, 1
      %p143 = scmp.ne.s32.totalorder %s138, %s140
      %p144 = scmp.eq.s32.totalorder %s20, 0
      %p145 = por %p143, %p144
      %p146 = scmp.ne.s32.totalorder %s138, %s140
      %p147 = scmp.eq.s32.totalorder %s25, 1
      %p148 = por %p146, %p147
      %p149 = scmp.ne.s32.totalorder %s140, %s141
      %p150 = scmp.eq.s32.totalorder %s25, 0
      %p151 = por %p149, %p150
      %p152 = scmp.ne.s32.totalorder %s140, %s141
      %p153 = scmp.eq.s32.totalorder %s26, 1
      %p154 = por %p152, %p153
      %p156 = scmp.ne.s32.totalorder %s141, %s155
      %p157 = scmp.eq.s32.totalorder %s26, 0
      %p158 = por %p156, %p157
      %s160 = sadd.s32 %s159, 1
      %p163 = scmp.eq.s32.totalorder %s20, 1
      %p164 = scmp.ne.s32.totalorder %s159, %s161
      %p165 = scmp.eq.s32.totalorder %s20, 0
      %p166 = por %p164, %p165
      %p167 = scmp.ne.s32.totalorder %s159, %s161
      %p168 = scmp.eq.s32.totalorder %s25, 1
      %p169 = por %p167, %p168
      %p170 = scmp.ne.s32.totalorder %s161, %s162
      %p171 = scmp.eq.s32.totalorder %s25, 0
      %p172 = por %p170, %p171
      %p173 = scmp.ne.s32.totalorder %s161, %s162
      %p174 = scmp.eq.s32.totalorder %s26, 1
      %p175 = por %p173, %p174
      %p177 = scmp.ne.s32.totalorder %s162, %s176
      %p178 = scmp.eq.s32.totalorder %s26, 0
      %p179 = por %p177, %p178
      %s181 = sadd.s32 %s180, 1
      %p184 = scmp.eq.s32.totalorder %s20, 1
      %p185 = scmp.ne.s32.totalorder %s180, %s182
      %p186 = scmp.eq.s32.totalorder %s20, 0
      %p187 = por %p185, %p186
      %p188 = scmp.ne.s32.totalorder %s180, %s182
      %p189 = scmp.eq.s32.totalorder %s25, 1
      %p190 = por %p188, %p189
      %p191 = scmp.ne.s32.totalorder %s182, %s183
      %p192 = scmp.eq.s32.totalorder %s25, 0
      %p193 = por %p191, %p192
      %p194 = scmp.ne.s32.totalorder %s182, %s183
      %p195 = scmp.eq.s32.totalorder %s26, 1
      %p196 = por %p194, %p195
      %p198 = scmp.ne.s32.totalorder %s183, %s197
      %p199 = scmp.eq.s32.totalorder %s26, 0
      %p200 = por %p198, %p199
      %s202 = sadd.s32 %s201, 1
      %p205 = scmp.eq.s32.totalorder %s20, 1
      %p206 = scmp.ne.s32.totalorder %s201, %s203
      %p207 = scmp.eq.s32.totalorder %s20, 0
      %p208 = por %p206, %p207
      %p209 = scmp.ne.s32.totalorder %s201, %s203
      %p210 = scmp.eq.s32.totalorder %s25, 1
      %p211 = por %p209, %p210
      %p212 = scmp.ne.s32.totalorder %s203, %s204
      %p213 = scmp.eq.s32.totalorder %s25, 0
      %p214 = por %p212, %p213
      %p215 = scmp.ne.s32.totalorder %s203, %s204
      %p216 = scmp.eq.s32.totalorder %s26, 1
      %p217 = por %p215, %p216
      %p219 = scmp.ne.s32.totalorder %s204, %s218
      %p220 = scmp.eq.s32.totalorder %s26, 0
      %p221 = por %p219, %p220
      %s223 = sadd.s32 %s222, 1
      %p226 = scmp.eq.s32.totalorder %s20, 1
      %p227 = scmp.ne.s32.totalorder %s222, %s224
      %p228 = scmp.eq.s32.totalorder %s20, 0
      %p229 = por %p227, %p228
      %p230 = scmp.ne.s32.totalorder %s222, %s224
      %p231 = scmp.eq.s32.totalorder %s25, 1
      %p232 = por %p230, %p231
      %p233 = scmp.ne.s32.totalorder %s224, %s225
      %p234 = scmp.eq.s32.totalorder %s25, 0
      %p235 = por %p233, %p234
      %p236 = scmp.ne.s32.totalorder %s224, %s225
      %p237 = scmp.eq.s32.totalorder %s26, 1
      %p238 = por %p236, %p237
      %p240 = scmp.ne.s32.totalorder %s225, %s239
      %p241 = scmp.eq.s32.totalorder %s26, 0
      %p242 = por %p240, %p241
      %s244 = sadd.s32 %s243, 1
      %p247 = scmp.eq.s32.totalorder %s20, 1
      %p248 = scmp.ne.s32.totalorder %s243, %s245
      %p249 = scmp.eq.s32.totalorder %s20, 0
      %p250 = por %p248, %p249
      %p251 = scmp.ne.s32.totalorder %s243, %s245
      %p252 = scmp.eq.s32.totalorder %s25, 1
      %p253 = por %p251, %p252
      %p254 = scmp.ne.s32.totalorder %s245, %s246
      %p255 = scmp.eq.s32.totalorder %s25, 0
      %p256 = por %p254, %p255
      %p257 = scmp.ne.s32.totalorder %s245, %s246
      %p258 = scmp.eq.s32.totalorder %s26, 1
      %p259 = por %p257, %p258
      %p261 = scmp.ne.s32.totalorder %s246, %s260
      %p262 = scmp.eq.s32.totalorder %s26, 0
      %p263 = por %p261, %p262
      %s264 = ssub.s32 %s20, %s27
      %p265 = scmp.eq.s32.totalorder %s264, 0
      %s267 = sadd.s32 %s266, 1
      %s268 = scalar_select %p265, %s266, %s267
      %p271 = pneg %p265
      %p272 = scmp.eq.s32.totalorder %s20, 1
      %p273 = por %p271, %p272
      %p274 = scmp.ne.s32.totalorder %s266, %s269
      %p275 = scmp.eq.s32.totalorder %s20, 0
      %p276 = por %p274, %p275
      %p277 = scmp.ne.s32.totalorder %s266, %s269
      %p278 = scmp.eq.s32.totalorder %s25, 1
      %p279 = por %p277, %p278
      %p280 = scmp.ne.s32.totalorder %s269, %s270
      %p281 = scmp.eq.s32.totalorder %s25, 0
      %p282 = por %p280, %p281
      %p283 = scmp.ne.s32.totalorder %s269, %s270
      %p284 = scmp.eq.s32.totalorder %s26, 1
      %p285 = por %p283, %p284
      %p287 = scmp.ne.s32.totalorder %s270, %s286
      %p288 = scmp.eq.s32.totalorder %s26, 0
      %p289 = por %p287, %p288
      %p290 = scmp.le.s32.totalorder 1, %s20
      %p291 = scmp.lt.s32.totalorder %s20, 3
      %p292 = pnand %p290, %p291
      %p293 = pneg %p292
      // Predicated region
      $region9: #{tpu_custom_call.1} parent=5 // pred_check
        _
      $region10: #{tpu_custom_call.1} parent=5 // pred_check_branch
        %295 = sbr.rel (%p292) target = $region12
      $region11: #{tpu_custom_call.1} parent=5 // pred_region
        %s296 = ssub.s32 %s20, 1
        // Predicated region
        $region13: #{tpu_custom_call.1} parent=11 // pred_check
          %p297 = pneg %p67
        $region14: #{tpu_custom_call.1} parent=11 // pred_check_branch
          %299 = sbr.rel (%p297) target = $region16
        $region15: #{tpu_custom_call.1} parent=11 // pred_region
          _
        $region16: #{tpu_custom_call.1} parent=11 // pred_fallthru
          _
        // Predicated region
        $region17: #{tpu_custom_call.1} parent=11 // pred_check
          %p300 = pneg %p88
        $region18: #{tpu_custom_call.1} parent=11 // pred_check_branch
          %302 = sbr.rel (%p300) target = $region20
        $region19: #{tpu_custom_call.1} parent=11 // pred_region
          _
        $region20: #{tpu_custom_call.1} parent=11 // pred_fallthru
          _
        // Predicated region
        $region21: #{tpu_custom_call.1} parent=11 // pred_check
          %p303 = pneg %p109
        $region22: #{tpu_custom_call.1} parent=11 // pred_check_branch
          %305 = sbr.rel (%p303) target = $region24
        $region23: #{tpu_custom_call.1} parent=11 // pred_region
          _
        $region24: #{tpu_custom_call.1} parent=11 // pred_fallthru
          _
        // Predicated region
        $region25: #{tpu_custom_call.1} parent=11 // pred_check
          %p306 = pneg %p130
        $region26: #{tpu_custom_call.1} parent=11 // pred_check_branch
          %308 = sbr.rel (%p306) target = $region28
        $region27: #{tpu_custom_call.1} parent=11 // pred_region
          _
        $region28: #{tpu_custom_call.1} parent=11 // pred_fallthru
          _
        // Predicated region
        $region29: #{tpu_custom_call.1} parent=11 // pred_check
          %p309 = pneg %p151
        $region30: #{tpu_custom_call.1} parent=11 // pred_check_branch
          %311 = sbr.rel (%p309) target = $region32
        $region31: #{tpu_custom_call.1} parent=11 // pred_region
          _
        $region32: #{tpu_custom_call.1} parent=11 // pred_fallthru
          _
        // Predicated region
        $region33: #{tpu_custom_call.1} parent=11 // pred_check
          %p312 = pneg %p172
        $region34: #{tpu_custom_call.1} parent=11 // pred_check_branch
          %314 = sbr.rel (%p312) target = $region36
        $region35: #{tpu_custom_call.1} parent=11 // pred_region
          _
        $region36: #{tpu_custom_call.1} parent=11 // pred_fallthru
          _
        // Predicated region
        $region37: #{tpu_custom_call.1} parent=11 // pred_check
          %p315 = pneg %p193
        $region38: #{tpu_custom_call.1} parent=11 // pred_check_branch
          %317 = sbr.rel (%p315) target = $region40
        $region39: #{tpu_custom_call.1} parent=11 // pred_region
          _
        $region40: #{tpu_custom_call.1} parent=11 // pred_fallthru
          _
        // Predicated region
        $region41: #{tpu_custom_call.1} parent=11 // pred_check
          %p318 = pneg %p214
        $region42: #{tpu_custom_call.1} parent=11 // pred_check_branch
          %320 = sbr.rel (%p318) target = $region44
        $region43: #{tpu_custom_call.1} parent=11 // pred_region
          _
        $region44: #{tpu_custom_call.1} parent=11 // pred_fallthru
          _
        // Predicated region
        $region45: #{tpu_custom_call.1} parent=11 // pred_check
          %p321 = pneg %p235
        $region46: #{tpu_custom_call.1} parent=11 // pred_check_branch
          %323 = sbr.rel (%p321) target = $region48
        $region47: #{tpu_custom_call.1} parent=11 // pred_region
          _
        $region48: #{tpu_custom_call.1} parent=11 // pred_fallthru
          _
        // Predicated region
        $region49: #{tpu_custom_call.1} parent=11 // pred_check
          %p324 = pneg %p256
        $region50: #{tpu_custom_call.1} parent=11 // pred_check_branch
          %326 = sbr.rel (%p324) target = $region52
        $region51: #{tpu_custom_call.1} parent=11 // pred_region
          _
        $region52: #{tpu_custom_call.1} parent=11 // pred_fallthru
          _
      $region12: #{tpu_custom_call.1} parent=5 // pred_fallthru
        _
      %p327 = scmp.lt.s32.totalorder %s20, 2
      // Predicated region
      $region53: #{tpu_custom_call.1} parent=5 // pred_check
        %p328 = pneg %p327
      $region54: #{tpu_custom_call.1} parent=5 // pred_check_branch
        %330 = sbr.rel (%p328) target = $region56
      $region55: #{tpu_custom_call.1} parent=5 // pred_region
        // Predicated region
        $region57: #{tpu_custom_call.1} parent=55 // pred_check
          %p331 = pneg %p40
        $region58: #{tpu_custom_call.1} parent=55 // pred_check_branch
          %333 = sbr.rel (%p331) target = $region60
        $region59: #{tpu_custom_call.1} parent=55 // pred_region
          %p334 = scmp.lt.s32.totalorder %s20, 1
          %s335 = scalar_select %p334, %s20, 1
          %s336 = smul.addr %s335, 8
          %s337 = scalar_lea.vmem %s0, %s336
        $region60: #{tpu_custom_call.1} parent=55 // pred_fallthru
          _
      $region56: #{tpu_custom_call.1} parent=5 // pred_fallthru
        _
      %p338 = scmp.le.s32.totalorder 1, %s20
      %p339 = scmp.lt.s32.totalorder %s20, 3
      %p340 = pnand %p338, %p339
      %p341 = pneg %p340
      // Predicated region
      $region61: #{tpu_custom_call.1} parent=5 // pred_check
        _
      $region62: #{tpu_custom_call.1} parent=5 // pred_check_branch
        %343 = sbr.rel (%p340) target = $region64
      $region63: #{tpu_custom_call.1} parent=5 // pred_region
        %s344 = ssub.s32 %s20, 1
        %p345 = scmp.lt.s32.totalorder %s25, 1
        %s346 = scalar_select %p345, %s25, 1
        %s347 = smul.addr %s346, 8
        %s348 = scalar_lea.vmem %s0, %s347
        %p349 = pneg %p46
        %p350 = pneg %p43
        %p351 = pneg %p67
        %p352 = pneg %p64
        %p353 = pneg %p88
        %p354 = pneg %p85
        %p355 = pneg %p109
        %p356 = pneg %p106
        %p357 = pneg %p130
        %p358 = pneg %p127
        %p359 = pneg %p151
        %p360 = pneg %p148
        %p361 = pneg %p172
        %p362 = pneg %p169
        %p363 = pneg %p193
        %p364 = pneg %p190
        %p365 = pneg %p214
        %p366 = pneg %p211
        %p367 = pneg %p235
        %p368 = pneg %p232
        %p369 = pneg %p256
        %p370 = pneg %p253
        %p371 = pneg %p282
        %p372 = pneg %p279
        %s373 = sand.u32 %s269, 1
        %s374 = scalar_lea.sflag [#allocation4], %s373
        %s375 = sand.u32 %s269, 1
        %s376 = smul.addr %s375, 8
        %s377 = scalar_lea.vmem [#allocation3], %s376
        %p378 = scmp.lt.s32.totalorder %s25, 1
        %s379 = scalar_select %p378, %s25, 1
        %s380 = smul.addr %s379, 8
        %s381 = scalar_lea.vmem %s0, %s380
        %v382 = vld [vmem:[%s381] sm:$0xff]
        %v383 = vld [vmem:[%s1] sm:$0x1]
        %v384 = vld [vmem:[%s2] sm:$0x1]
        %vm385 = vcmask 261120
        %v386 = vsel %vm385, %v382, 0.0
        %387 = vadd.xlane.f32.xlu0 %v386
        %v388 = vpop.xlane.xlu0 %387
        %v389 = vrcp.pop 32.0
        %v390 = vmul.f32 %v388, %v389
        %v391 = vsub.f32 %v382, %v390
        %v392 = vmul.f32 %v391, %v391
        %v393 = vsel %vm385, %v392, 0.0
        %394 = vadd.xlane.f32.xlu0 %v393
        %v395 = vpop.xlane.xlu0 %394
        %v396 = vmul.f32 %v395, %v389
        %v397 = vadd.f32 %v396, 1e-05
        %v398 = vrsqrt.pop %v397
        %v399 = vmul.f32 %v391, %v398
        %v401 = vlaneseq
        %v402 = vshrl.u32 %v401, 7
        %v403 = vsub.s32 0, %v402
        %v404 = vrot.slane %v383, %v403
        %v406 = vmul.f32 %v399, %v404
        %v408 = vlaneseq
        %v409 = vshrl.u32 %v408, 7
        %v410 = vsub.s32 0, %v409
        %v411 = vrot.slane %v384, %v410
        %v413 = vadd.f32 %v406, %v411
        %v414 = vld [vmem:[%s3] sm:$0xff]
        %v415 = vld [vmem:[%s3 + $0x8] sm:$0xff]
        %v416 = vld [vmem:[%s3 + $0x10] sm:$0xff]
        %v417 = vld [vmem:[%s3 + $0x18] sm:$0xff]
        %v418 = vld [vmem:[%s4] sm:$0x1]
        %v420 = vlaneseq
        %v421 = vshrl.u32 %v420, 7
        %v422 = vsub.s32 0, %v421
        %v423 = vrot.slane %v418, %v422
        %v426 = vsel %vm385, %v413, 0
        %428 = vmatprep.subr.mxu0 0.0
        %429 = vmatpush1.msra.mxu0 %v414
        %430 = vmatprep.subr.mxu0 0.0
        %431 = vmatpush1.msra.mxu0 %v415
        %432 = vmatprep.subr.mxu0 0.0
        %433 = vmatpush1.msra.mxu0 %v416
        %434 = vmatprep.subr.mxu0 0.0
        %435 = vmatpush1.msra.mxu0 %v417
        %436 = vmatprep.subr.mxu0 0.0
        %437 = vmatpush1.msra.mxu0 0.0
        %438 = vmatprep.subr.mxu0 0.0
        %439 = vmatpush1.msra.mxu0 0.0
        %440 = vmatprep.subr.mxu0 0.0
        %441 = vmatpush1.msra.mxu0 0.0
        %442 = vmatprep.subr.mxu0 0.0
        %443 = vmatpush1.msra.mxu0 0.0
        %444 = vmatprep.subr.mxu0 0.0
        %445 = vmatpush1.msra.mxu0 0.0
        %446 = vmatprep.subr.mxu0 0.0
        %447 = vmatpush1.msra.mxu0 0.0
        %448 = vmatprep.subr.mxu0 0.0
        %449 = vmatpush1.msra.mxu0 0.0
        %450 = vmatprep.subr.mxu0 0.0
        %451 = vmatpush1.msra.mxu0 0.0
        %452 = vmatprep.subr.mxu0 0.0
        %453 = vmatpush1.msra.mxu0 0.0
        %454 = vmatprep.subr.mxu0 0.0
        %455 = vmatpush1.msra.mxu0 0.0
        %456 = vmatprep.subr.mxu0 0.0
        %457 = vmatpush1.msra.mxu0 0.0
        %458 = vmatprep.subr.mxu0 0.0
        %459 = vmatpush1.msra.mxu0 0.0
        %460 = vmatprep.subr.mxu0 0.0
        %461 = vmatpush1.msra.mxu0 0.0
        %462 = vmatprep.subr.mxu0 0.0
        %463 = vmatpush1.msra.mxu0 0.0
        %464 = vmatprep.subr.mxu0 0.0
        %465 = vmatpush1.msra.mxu0 0.0
        %466 = vmatprep.subr.mxu0 0.0
        %467 = vmatpush1.msra.mxu0 0.0
        %468 = vmatprep.subr.mxu0 0.0
        %469 = vmatpush1.msra.mxu0 0.0
        %470 = vmatprep.subr.mxu0 0.0
        %471 = vmatpush1.msra.mxu0 0.0
        %472 = vmatprep.subr.mxu0 0.0
        %473 = vmatpush1.msra.mxu0 0.0
        %474 = vmatprep.subr.mxu0 0.0
        %475 = vmatpush1.msra.mxu0 0.0
        %476 = vmatprep.subr.mxu0 0.0
        %477 = vmatpush1.msra.mxu0 0.0
        %478 = vmatprep.subr.mxu0 0.0
        %479 = vmatpush1.msra.mxu0 0.0
        %480 = vmatprep.subr.mxu0 0.0
        %481 = vmatpush1.msra.mxu0 0.0
        %482 = vmatprep.subr.mxu0 0.0
        %483 = vmatpush1.msra.mxu0 0.0
        %484 = vmatprep.subr.mxu0 0.0
        %485 = vmatpush1.msra.mxu0 0.0
        %486 = vmatprep.subr.mxu0 0.0
        %487 = vmatpush1.msra.mxu0 0.0
        %488 = vmatprep.subr.mxu0 0.0
        %489 = vmatpush1.msra.mxu0 0.0
        %490 = vmatprep.subr.mxu0 0.0
        %491 = vmatpush1.msra.mxu0 0.0
        %492 = vmatprep.mubr.f32.mxu0 0.0
        %493 = vmatmul.mubr.f32.gmra.mrb[0].mxu0 %v426
        %v494 = vpop.f32.mrb[0].mxu0
        %v495 = vadd.f32 %v423, %v494
        %v496 = vpop.f32.mrb[0].mxu0
        %497 = vdwg.mxu0
        %499 = vrot.lane.b32.xlu0 %v495, 120
        %v500 = vpop.permute.xlu0 %499
        %501 = vrot.lane.b32.xlu0 %v495, 112
        %v502 = vpop.permute.xlu0 %501
        %503 = vrot.lane.b32.xlu0 %v495, 104
        %v504 = vpop.permute.xlu0 %503
        %505 = vrot.lane.b32.xlu0 %v495, 96
        %v506 = vpop.permute.xlu0 %505
        %vm507 = vcmask 64512
        %v508 = vsel %vm507, %v495, 0
        %v510 = vsel %vm507, %v506, 0
        %512 = vmatprep.subr.mxu0 0.0
        %513 = vmatpush1.xpose.msra.mxu0 %v510
        %514 = vmatprep.subr.mxu0 0.0
        %515 = vmatpush1.xpose.msra.mxu0 0.0
        %516 = vmatprep.subr.mxu0 0.0
        %517 = vmatpush1.xpose.msra.mxu0 0.0
        %518 = vmatprep.subr.mxu0 0.0
        %519 = vmatpush1.xpose.msra.mxu0 0.0
        %520 = vmatprep.subr.mxu0 0.0
        %521 = vmatpush1.xpose.msra.mxu0 0.0
        %522 = vmatprep.subr.mxu0 0.0
        %523 = vmatpush1.xpose.msra.mxu0 0.0
        %524 = vmatprep.subr.mxu0 0.0
        %525 = vmatpush1.xpose.msra.mxu0 0.0
        %526 = vmatprep.subr.mxu0 0.0
        %527 = vmatpush1.xpose.msra.mxu0 0.0
        %528 = vmatprep.subr.mxu0 0.0
        %529 = vmatpush1.xpose.msra.mxu0 0.0
        %530 = vmatprep.subr.mxu0 0.0
        %531 = vmatpush1.xpose.msra.mxu0 0.0
        %532 = vmatprep.subr.mxu0 0.0
        %533 = vmatpush1.xpose.msra.mxu0 0.0
        %534 = vmatprep.subr.mxu0 0.0
        %535 = vmatpush1.xpose.msra.mxu0 0.0
        %536 = vmatprep.subr.mxu0 0.0
        %537 = vmatpush1.xpose.msra.mxu0 0.0
        %538 = vmatprep.subr.mxu0 0.0
        %539 = vmatpush1.xpose.msra.mxu0 0.0
        %540 = vmatprep.subr.mxu0 0.0
        %541 = vmatpush1.xpose.msra.mxu0 0.0
        %542 = vmatprep.subr.mxu0 0.0
        %543 = vmatpush1.xpose.msra.mxu0 0.0
        %544 = vmatprep.subr.mxu0 0.0
        %545 = vmatpush1.xpose.msra.mxu0 0.0
        %546 = vmatprep.subr.mxu0 0.0
        %547 = vmatpush1.xpose.msra.mxu0 0.0
        %548 = vmatprep.subr.mxu0 0.0
        %549 = vmatpush1.xpose.msra.mxu0 0.0
        %550 = vmatprep.subr.mxu0 0.0
        %551 = vmatpush1.xpose.msra.mxu0 0.0
        %552 = vmatprep.subr.mxu0 0.0
        %553 = vmatpush1.xpose.msra.mxu0 0.0
        %554 = vmatprep.subr.mxu0 0.0
        %555 = vmatpush1.xpose.msra.mxu0 0.0
        %556 = vmatprep.subr.mxu0 0.0
        %557 = vmatpush1.xpose.msra.mxu0 0.0
        %558 = vmatprep.subr.mxu0 0.0
        %559 = vmatpush1.xpose.msra.mxu0 0.0
        %560 = vmatprep.subr.mxu0 0.0
        %561 = vmatpush1.xpose.msra.mxu0 0.0
        %562 = vmatprep.subr.mxu0 0.0
        %563 = vmatpush1.xpose.msra.mxu0 0.0
        %564 = vmatprep.subr.mxu0 0.0
        %565 = vmatpush1.xpose.msra.mxu0 0.0
        %566 = vmatprep.subr.mxu0 0.0
        %567 = vmatpush1.xpose.msra.mxu0 0.0
        %568 = vmatprep.subr.mxu0 0.0
        %569 = vmatpush1.xpose.msra.mxu0 0.0
        %570 = vmatprep.subr.mxu0 0.0
        %571 = vmatpush1.xpose.msra.mxu0 0.0
        %572 = vmatprep.subr.mxu0 0.0
        %573 = vmatpush1.xpose.msra.mxu0 0.0
        %574 = vmatprep.subr.mxu0 0.0
        %575 = vmatpush1.xpose.msra.mxu0 0.0
        %576 = vmatprep.mubr.f32.mxu0 0.0
        %577 = vmatmul.mubr.f32.gmra.mrb[0].mxu0 %v508
        %v578 = vpop.f32.mrb[0].mxu0
        %v579 = vadd.f32 0.0, %v578
        %v580 = vpop.f32.mrb[0].mxu0
        %581 = vdwg.mxu0
        %582 = vrot.lane.b32.xlu0 %v500, 96
        %v583 = vpop.permute.xlu0 %582
        %v584 = vsel %vm507, %v500, 0
        %v586 = vsel %vm507, %v583, 0
        %588 = vmatprep.subr.mxu0 0.0
        %589 = vmatpush1.xpose.msra.mxu0 %v586
        %590 = vmatprep.subr.mxu0 0.0
        %591 = vmatpush1.xpose.msra.mxu0 0.0
        %592 = vmatprep.subr.mxu0 0.0
        %593 = vmatpush1.xpose.msra.mxu0 0.0
        %594 = vmatprep.subr.mxu0 0.0
        %595 = vmatpush1.xpose.msra.mxu0 0.0
        %596 = vmatprep.subr.mxu0 0.0
        %597 = vmatpush1.xpose.msra.mxu0 0.0
        %598 = vmatprep.subr.mxu0 0.0
        %599 = vmatpush1.xpose.msra.mxu0 0.0
        %600 = vmatprep.subr.mxu0 0.0
        %601 = vmatpush1.xpose.msra.mxu0 0.0
        %602 = vmatprep.subr.mxu0 0.0
        %603 = vmatpush1.xpose.msra.mxu0 0.0
        %604 = vmatprep.subr.mxu0 0.0
        %605 = vmatpush1.xpose.msra.mxu0 0.0
        %606 = vmatprep.subr.mxu0 0.0
        %607 = vmatpush1.xpose.msra.mxu0 0.0
        %608 = vmatprep.subr.mxu0 0.0
        %609 = vmatpush1.xpose.msra.mxu0 0.0
        %610 = vmatprep.subr.mxu0 0.0
        %611 = vmatpush1.xpose.msra.mxu0 0.0
        %612 = vmatprep.subr.mxu0 0.0
        %613 = vmatpush1.xpose.msra.mxu0 0.0
        %614 = vmatprep.subr.mxu0 0.0
        %615 = vmatpush1.xpose.msra.mxu0 0.0
        %616 = vmatprep.subr.mxu0 0.0
        %617 = vmatpush1.xpose.msra.mxu0 0.0
        %618 = vmatprep.subr.mxu0 0.0
        %619 = vmatpush1.xpose.msra.mxu0 0.0
        %620 = vmatprep.subr.mxu0 0.0
        %621 = vmatpush1.xpose.msra.mxu0 0.0
        %622 = vmatprep.subr.mxu0 0.0
        %623 = vmatpush1.xpose.msra.mxu0 0.0
        %624 = vmatprep.subr.mxu0 0.0
        %625 = vmatpush1.xpose.msra.mxu0 0.0
        %626 = vmatprep.subr.mxu0 0.0
        %627 = vmatpush1.xpose.msra.mxu0 0.0
        %628 = vmatprep.subr.mxu0 0.0
        %629 = vmatpush1.xpose.msra.mxu0 0.0
        %630 = vmatprep.subr.mxu0 0.0
        %631 = vmatpush1.xpose.msra.mxu0 0.0
        %632 = vmatprep.subr.mxu0 0.0
        %633 = vmatpush1.xpose.msra.mxu0 0.0
        %634 = vmatprep.subr.mxu0 0.0
        %635 = vmatpush1.xpose.msra.mxu0 0.0
        %636 = vmatprep.subr.mxu0 0.0
        %637 = vmatpush1.xpose.msra.mxu0 0.0
        %638 = vmatprep.subr.mxu0 0.0
        %639 = vmatpush1.xpose.msra.mxu0 0.0
        %640 = vmatprep.subr.mxu0 0.0
        %641 = vmatpush1.xpose.msra.mxu0 0.0
        %642 = vmatprep.subr.mxu0 0.0
        %643 = vmatpush1.xpose.msra.mxu0 0.0
        %644 = vmatprep.subr.mxu0 0.0
        %645 = vmatpush1.xpose.msra.mxu0 0.0
        %646 = vmatprep.subr.mxu0 0.0
        %647 = vmatpush1.xpose.msra.mxu0 0.0
        %648 = vmatprep.subr.mxu0 0.0
        %649 = vmatpush1.xpose.msra.mxu0 0.0
        %650 = vmatprep.subr.mxu0 0.0
        %651 = vmatpush1.xpose.msra.mxu0 0.0
        %652 = vmatprep.mubr.f32.mxu0 0.0
        %653 = vmatmul.mubr.f32.gmra.mrb[0].mxu0 %v584
        %v654 = vpop.f32.mrb[0].mxu0
        %v655 = vadd.f32 0.0, %v654
        %v656 = vpop.f32.mrb[0].mxu0
        %657 = vdwg.mxu0
        %658 = vrot.lane.b32.xlu0 %v502, 96
        %v659 = vpop.permute.xlu0 %658
        %v660 = vsel %vm507, %v502, 0
        %v662 = vsel %vm507, %v659, 0
        %664 = vmatprep.subr.mxu0 0.0
        %665 = vmatpush1.xpose.msra.mxu0 %v662
        %666 = vmatprep.subr.mxu0 0.0
        %667 = vmatpush1.xpose.msra.mxu0 0.0
        %668 = vmatprep.subr.mxu0 0.0
        %669 = vmatpush1.xpose.msra.mxu0 0.0
        %670 = vmatprep.subr.mxu0 0.0
        %671 = vmatpush1.xpose.msra.mxu0 0.0
        %672 = vmatprep.subr.mxu0 0.0
        %673 = vmatpush1.xpose.msra.mxu0 0.0
        %674 = vmatprep.subr.mxu0 0.0
        %675 = vmatpush1.xpose.msra.mxu0 0.0
        %676 = vmatprep.subr.mxu0 0.0
        %677 = vmatpush1.xpose.msra.mxu0 0.0
        %678 = vmatprep.subr.mxu0 0.0
        %679 = vmatpush1.xpose.msra.mxu0 0.0
        %680 = vmatprep.subr.mxu0 0.0
        %681 = vmatpush1.xpose.msra.mxu0 0.0
        %682 = vmatprep.subr.mxu0 0.0
        %683 = vmatpush1.xpose.msra.mxu0 0.0
        %684 = vmatprep.subr.mxu0 0.0
        %685 = vmatpush1.xpose.msra.mxu0 0.0
        %686 = vmatprep.subr.mxu0 0.0
        %687 = vmatpush1.xpose.msra.mxu0 0.0
        %688 = vmatprep.subr.mxu0 0.0
        %689 = vmatpush1.xpose.msra.mxu0 0.0
        %690 = vmatprep.subr.mxu0 0.0
        %691 = vmatpush1.xpose.msra.mxu0 0.0
        %692 = vmatprep.subr.mxu0 0.0
        %693 = vmatpush1.xpose.msra.mxu0 0.0
        %694 = vmatprep.subr.mxu0 0.0
        %695 = vmatpush1.xpose.msra.mxu0 0.0
        %696 = vmatprep.subr.mxu0 0.0
        %697 = vmatpush1.xpose.msra.mxu0 0.0
        %698 = vmatprep.subr.mxu0 0.0
        %699 = vmatpush1.xpose.msra.mxu0 0.0
        %700 = vmatprep.subr.mxu0 0.0
        %701 = vmatpush1.xpose.msra.mxu0 0.0
        %702 = vmatprep.subr.mxu0 0.0
        %703 = vmatpush1.xpose.msra.mxu0 0.0
        %704 = vmatprep.subr.mxu0 0.0
        %705 = vmatpush1.xpose.msra.mxu0 0.0
        %706 = vmatprep.subr.mxu0 0.0
        %707 = vmatpush1.xpose.msra.mxu0 0.0
        %708 = vmatprep.subr.mxu0 0.0
        %709 = vmatpush1.xpose.msra.mxu0 0.0
        %710 = vmatprep.subr.mxu0 0.0
        %711 = vmatpush1.xpose.msra.mxu0 0.0
        %712 = vmatprep.subr.mxu0 0.0
        %713 = vmatpush1.xpose.msra.mxu0 0.0
        %714 = vmatprep.subr.mxu0 0.0
        %715 = vmatpush1.xpose.msra.mxu0 0.0
        %716 = vmatprep.subr.mxu0 0.0
        %717 = vmatpush1.xpose.msra.mxu0 0.0
        %718 = vmatprep.subr.mxu0 0.0
        %719 = vmatpush1.xpose.msra.mxu0 0.0
        %720 = vmatprep.subr.mxu0 0.0
        %721 = vmatpush1.xpose.msra.mxu0 0.0
        %722 = vmatprep.subr.mxu0 0.0
        %723 = vmatpush1.xpose.msra.mxu0 0.0
        %724 = vmatprep.subr.mxu0 0.0
        %725 = vmatpush1.xpose.msra.mxu0 0.0
        %726 = vmatprep.subr.mxu0 0.0
        %727 = vmatpush1.xpose.msra.mxu0 0.0
        %728 = vmatprep.mubr.f32.mxu0 0.0
        %729 = vmatmul.mubr.f32.gmra.mrb[0].mxu0 %v660
        %v730 = vpop.f32.mrb[0].mxu0
        %v731 = vadd.f32 0.0, %v730
        %v732 = vpop.f32.mrb[0].mxu0
        %733 = vdwg.mxu0
        %734 = vrot.lane.b32.xlu0 %v504, 96
        %v735 = vpop.permute.xlu0 %734
        %v736 = vsel %vm507, %v504, 0
        %v738 = vsel %vm507, %v735, 0
        %740 = vmatprep.subr.mxu0 0.0
        %741 = vmatpush1.xpose.msra.mxu0 %v738
        %742 = vmatprep.subr.mxu0 0.0
        %743 = vmatpush1.xpose.msra.mxu0 0.0
        %744 = vmatprep.subr.mxu0 0.0
        %745 = vmatpush1.xpose.msra.mxu0 0.0
        %746 = vmatprep.subr.mxu0 0.0
        %747 = vmatpush1.xpose.msra.mxu0 0.0
        %748 = vmatprep.subr.mxu0 0.0
        %749 = vmatpush1.xpose.msra.mxu0 0.0
        %750 = vmatprep.subr.mxu0 0.0
        %751 = vmatpush1.xpose.msra.mxu0 0.0
        %752 = vmatprep.subr.mxu0 0.0
        %753 = vmatpush1.xpose.msra.mxu0 0.0
        %754 = vmatprep.subr.mxu0 0.0
        %755 = vmatpush1.xpose.msra.mxu0 0.0
        %756 = vmatprep.subr.mxu0 0.0
        %757 = vmatpush1.xpose.msra.mxu0 0.0
        %758 = vmatprep.subr.mxu0 0.0
        %759 = vmatpush1.xpose.msra.mxu0 0.0
        %760 = vmatprep.subr.mxu0 0.0
        %761 = vmatpush1.xpose.msra.mxu0 0.0
        %762 = vmatprep.subr.mxu0 0.0
        %763 = vmatpush1.xpose.msra.mxu0 0.0
        %764 = vmatprep.subr.mxu0 0.0
        %765 = vmatpush1.xpose.msra.mxu0 0.0
        %766 = vmatprep.subr.mxu0 0.0
        %767 = vmatpush1.xpose.msra.mxu0 0.0
        %768 = vmatprep.subr.mxu0 0.0
        %769 = vmatpush1.xpose.msra.mxu0 0.0
        %770 = vmatprep.subr.mxu0 0.0
        %771 = vmatpush1.xpose.msra.mxu0 0.0
        %772 = vmatprep.subr.mxu0 0.0
        %773 = vmatpush1.xpose.msra.mxu0 0.0
        %774 = vmatprep.subr.mxu0 0.0
        %775 = vmatpush1.xpose.msra.mxu0 0.0
        %776 = vmatprep.subr.mxu0 0.0
        %777 = vmatpush1.xpose.msra.mxu0 0.0
        %778 = vmatprep.subr.mxu0 0.0
        %779 = vmatpush1.xpose.msra.mxu0 0.0
        %780 = vmatprep.subr.mxu0 0.0
        %781 = vmatpush1.xpose.msra.mxu0 0.0
        %782 = vmatprep.subr.mxu0 0.0
        %783 = vmatpush1.xpose.msra.mxu0 0.0
        %784 = vmatprep.subr.mxu0 0.0
        %785 = vmatpush1.xpose.msra.mxu0 0.0
        %786 = vmatprep.subr.mxu0 0.0
        %787 = vmatpush1.xpose.msra.mxu0 0.0
        %788 = vmatprep.subr.mxu0 0.0
        %789 = vmatpush1.xpose.msra.mxu0 0.0
        %790 = vmatprep.subr.mxu0 0.0
        %791 = vmatpush1.xpose.msra.mxu0 0.0
        %792 = vmatprep.subr.mxu0 0.0
        %793 = vmatpush1.xpose.msra.mxu0 0.0
        %794 = vmatprep.subr.mxu0 0.0
        %795 = vmatpush1.xpose.msra.mxu0 0.0
        %796 = vmatprep.subr.mxu0 0.0
        %797 = vmatpush1.xpose.msra.mxu0 0.0
        %798 = vmatprep.subr.mxu0 0.0
        %799 = vmatpush1.xpose.msra.mxu0 0.0
        %800 = vmatprep.subr.mxu0 0.0
        %801 = vmatpush1.xpose.msra.mxu0 0.0
        %802 = vmatprep.subr.mxu0 0.0
        %803 = vmatpush1.xpose.msra.mxu0 0.0
        %804 = vmatprep.mubr.f32.mxu0 0.0
        %805 = vmatmul.mubr.f32.gmra.mrb[0].mxu0 %v736
        %v806 = vpop.f32.mrb[0].mxu0
        %v807 = vadd.f32 0.0, %v806
        %v808 = vpop.f32.mrb[0].mxu0
        %809 = vdwg.mxu0
        %v810 = vmul.f32 %v579, 0.35355338
        %v811 = vmul.f32 %v655, 0.35355338
        %v812 = vmul.f32 %v731, 0.35355338
        %v813 = vmul.f32 %v807, 0.35355338
        %v814 = vsel %vm507, %v810, -inf
        %815 = vmax.xlane.f32.xlu0 %v814
        %v816 = vpop.xlane.xlu0 %815
        %v817 = vsel %vm507, %v811, -inf
        %818 = vmax.xlane.f32.xlu0 %v817
        %v819 = vpop.xlane.xlu0 %818
        %v820 = vsel %vm507, %v812, -inf
        %821 = vmax.xlane.f32.xlu0 %v820
        %v822 = vpop.xlane.xlu0 %821
        %v823 = vsel %vm507, %v813, -inf
        %824 = vmax.xlane.f32.xlu0 %v823
        %v825 = vpop.xlane.xlu0 %824
        %v826 = vsub.f32 %v810, %v816
        %v827 = vsub.f32 %v811, %v819
        %v828 = vsub.f32 %v812, %v822
        %v829 = vsub.f32 %v813, %v825
        %v830 = vmul.f32 %v826, 1.442695
        %v831 = vpow.pop %v830
        %v832 = vmul.f32 %v827, 1.442695
        %v833 = vpow.pop %v832
        %v834 = vmul.f32 %v828, 1.442695
        %v835 = vpow.pop %v834
        %v836 = vmul.f32 %v829, 1.442695
        %v837 = vpow.pop %v836
        %v838 = vsel %vm507, %v831, 0.0
        %839 = vadd.xlane.f32.xlu0 %v838
        %v840 = vpop.xlane.xlu0 %839
        %v841 = vsel %vm507, %v833, 0.0
        %842 = vadd.xlane.f32.xlu0 %v841
        %v843 = vpop.xlane.xlu0 %842
        %v844 = vsel %vm507, %v835, 0.0
        %845 = vadd.xlane.f32.xlu0 %v844
        %v846 = vpop.xlane.xlu0 %845
        %v847 = vsel %vm507, %v837, 0.0
        %848 = vadd.xlane.f32.xlu0 %v847
        %v849 = vpop.xlane.xlu0 %848
        %850 = vrot.lane.b32.xlu0 %v495, 64
        %v851 = vpop.permute.xlu0 %850
        %v854 = vsel %vm507, %v831, 0
        %856 = vmatprep.subr.mxu0 0.0
        %857 = vmatpush1.msra.mxu0 %v851
        %858 = vmatprep.subr.mxu0 0.0
        %859 = vmatpush1.msra.mxu0 0.0
        %860 = vmatprep.subr.mxu0 0.0
        %861 = vmatpush1.msra.mxu0 0.0
        %862 = vmatprep.subr.mxu0 0.0
        %863 = vmatpush1.msra.mxu0 0.0
        %864 = vmatprep.subr.mxu0 0.0
        %865 = vmatpush1.msra.mxu0 0.0
        %866 = vmatprep.subr.mxu0 0.0
        %867 = vmatpush1.msra.mxu0 0.0
        %868 = vmatprep.subr.mxu0 0.0
        %869 = vmatpush1.msra.mxu0 0.0
        %870 = vmatprep.subr.mxu0 0.0
        %871 = vmatpush1.msra.mxu0 0.0
        %872 = vmatprep.subr.mxu0 0.0
        %873 = vmatpush1.msra.mxu0 0.0
        %874 = vmatprep.subr.mxu0 0.0
        %875 = vmatpush1.msra.mxu0 0.0
        %876 = vmatprep.subr.mxu0 0.0
        %877 = vmatpush1.msra.mxu0 0.0
        %878 = vmatprep.subr.mxu0 0.0
        %879 = vmatpush1.msra.mxu0 0.0
        %880 = vmatprep.subr.mxu0 0.0
        %881 = vmatpush1.msra.mxu0 0.0
        %882 = vmatprep.subr.mxu0 0.0
        %883 = vmatpush1.msra.mxu0 0.0
        %884 = vmatprep.subr.mxu0 0.0
        %885 = vmatpush1.msra.mxu0 0.0
        %886 = vmatprep.subr.mxu0 0.0
        %887 = vmatpush1.msra.mxu0 0.0
        %888 = vmatprep.subr.mxu0 0.0
        %889 = vmatpush1.msra.mxu0 0.0
        %890 = vmatprep.subr.mxu0 0.0
        %891 = vmatpush1.msra.mxu0 0.0
        %892 = vmatprep.subr.mxu0 0.0
        %893 = vmatpush1.msra.mxu0 0.0
        %894 = vmatprep.subr.mxu0 0.0
        %895 = vmatpush1.msra.mxu0 0.0
        %896 = vmatprep.subr.mxu0 0.0
        %897 = vmatpush1.msra.mxu0 0.0
        %898 = vmatprep.subr.mxu0 0.0
        %899 = vmatpush1.msra.mxu0 0.0
        %900 = vmatprep.subr.mxu0 0.0
        %901 = vmatpush1.msra.mxu0 0.0
        %902 = vmatprep.subr.mxu0 0.0
        %903 = vmatpush1.msra.mxu0 0.0
        %904 = vmatprep.subr.mxu0 0.0
        %905 = vmatpush1.msra.mxu0 0.0
        %906 = vmatprep.subr.mxu0 0.0
        %907 = vmatpush1.msra.mxu0 0.0
        %908 = vmatprep.subr.mxu0 0.0
        %909 = vmatpush1.msra.mxu0 0.0
        %910 = vmatprep.subr.mxu0 0.0
        %911 = vmatpush1.msra.mxu0 0.0
        %912 = vmatprep.subr.mxu0 0.0
        %913 = vmatpush1.msra.mxu0 0.0
        %914 = vmatprep.subr.mxu0 0.0
        %915 = vmatpush1.msra.mxu0 0.0
        %916 = vmatprep.subr.mxu0 0.0
        %917 = vmatpush1.msra.mxu0 0.0
        %918 = vmatprep.subr.mxu0 0.0
        %919 = vmatpush1.msra.mxu0 0.0
        %920 = vmatprep.mubr.f32.mxu0 0.0
        %921 = vmatmul.mubr.f32.gmra.mrb[0].mxu0 %v854
        %v922 = vpop.f32.mrb[0].mxu0
        %v923 = vadd.f32 0.0, %v922
        %v924 = vpop.f32.mrb[0].mxu0
        %925 = vdwg.mxu0
        %926 = vrot.lane.b32.xlu0 %v500, 64
        %v927 = vpop.permute.xlu0 %926
        %v930 = vsel %vm507, %v833, 0
        %932 = vmatprep.subr.mxu0 0.0
        %933 = vmatpush1.msra.mxu0 %v927
        %934 = vmatprep.subr.mxu0 0.0
        %935 = vmatpush1.msra.mxu0 0.0
        %936 = vmatprep.subr.mxu0 0.0
        %937 = vmatpush1.msra.mxu0 0.0
        %938 = vmatprep.subr.mxu0 0.0
        %939 = vmatpush1.msra.mxu0 0.0
        %940 = vmatprep.subr.mxu0 0.0
        %941 = vmatpush1.msra.mxu0 0.0
        %942 = vmatprep.subr.mxu0 0.0
        %943 = vmatpush1.msra.mxu0 0.0
        %944 = vmatprep.subr.mxu0 0.0
        %945 = vmatpush1.msra.mxu0 0.0
        %946 = vmatprep.subr.mxu0 0.0
        %947 = vmatpush1.msra.mxu0 0.0
        %948 = vmatprep.subr.mxu0 0.0
        %949 = vmatpush1.msra.mxu0 0.0
        %950 = vmatprep.subr.mxu0 0.0
        %951 = vmatpush1.msra.mxu0 0.0
        %952 = vmatprep.subr.mxu0 0.0
        %953 = vmatpush1.msra.mxu0 0.0
        %954 = vmatprep.subr.mxu0 0.0
        %955 = vmatpush1.msra.mxu0 0.0
        %956 = vmatprep.subr.mxu0 0.0
        %957 = vmatpush1.msra.mxu0 0.0
        %958 = vmatprep.subr.mxu0 0.0
        %959 = vmatpush1.msra.mxu0 0.0
        %960 = vmatprep.subr.mxu0 0.0
        %961 = vmatpush1.msra.mxu0 0.0
        %962 = vmatprep.subr.mxu0 0.0
        %963 = vmatpush1.msra.mxu0 0.0
        %964 = vmatprep.subr.mxu0 0.0
        %965 = vmatpush1.msra.mxu0 0.0
        %966 = vmatprep.subr.mxu0 0.0
        %967 = vmatpush1.msra.mxu0 0.0
        %968 = vmatprep.subr.mxu0 0.0
        %969 = vmatpush1.msra.mxu0 0.0
        %970 = vmatprep.subr.mxu0 0.0
        %971 = vmatpush1.msra.mxu0 0.0
        %972 = vmatprep.subr.mxu0 0.0
        %973 = vmatpush1.msra.mxu0 0.0
        %974 = vmatprep.subr.mxu0 0.0
        %975 = vmatpush1.msra.mxu0 0.0
        %976 = vmatprep.subr.mxu0 0.0
        %977 = vmatpush1.msra.mxu0 0.0
        %978 = vmatprep.subr.mxu0 0.0
        %979 = vmatpush1.msra.mxu0 0.0
        %980 = vmatprep.subr.mxu0 0.0
        %981 = vmatpush1.msra.mxu0 0.0
        %982 = vmatprep.subr.mxu0 0.0
        %983 = vmatpush1.msra.mxu0 0.0
        %984 = vmatprep.subr.mxu0 0.0
        %985 = vmatpush1.msra.mxu0 0.0
        %986 = vmatprep.subr.mxu0 0.0
        %987 = vmatpush1.msra.mxu0 0.0
        %988 = vmatprep.subr.mxu0 0.0
        %989 = vmatpush1.msra.mxu0 0.0
        %990 = vmatprep.subr.mxu0 0.0
        %991 = vmatpush1.msra.mxu0 0.0
        %992 = vmatprep.subr.mxu0 0.0
        %993 = vmatpush1.msra.mxu0 0.0
        %994 = vmatprep.subr.mxu0 0.0
        %995 = vmatpush1.msra.mxu0 0.0
        %996 = vmatprep.mubr.f32.mxu0 0.0
        %997 = vmatmul.mubr.f32.gmra.mrb[0].mxu0 %v930
        %v998 = vpop.f32.mrb[0].mxu0
        %v999 = vadd.f32 0.0, %v998
        %v1000 = vpop.f32.mrb[0].mxu0
        %1001 = vdwg.mxu0
        %1002 = vrot.lane.b32.xlu0 %v502, 64
        %v1003 = vpop.permute.xlu0 %1002
        %v1006 = vsel %vm507, %v835, 0
        %1008 = vmatprep.subr.mxu0 0.0
        %1009 = vmatpush1.msra.mxu0 %v1003
        %1010 = vmatprep.subr.mxu0 0.0
        %1011 = vmatpush1.msra.mxu0 0.0
        %1012 = vmatprep.subr.mxu0 0.0
        %1013 = vmatpush1.msra.mxu0 0.0
        %1014 = vmatprep.subr.mxu0 0.0
        %1015 = vmatpush1.msra.mxu0 0.0
        %1016 = vmatprep.subr.mxu0 0.0
        %1017 = vmatpush1.msra.mxu0 0.0
        %1018 = vmatprep.subr.mxu0 0.0
        %1019 = vmatpush1.msra.mxu0 0.0
        %1020 = vmatprep.subr.mxu0 0.0
        %1021 = vmatpush1.msra.mxu0 0.0
        %1022 = vmatprep.subr.mxu0 0.0
        %1023 = vmatpush1.msra.mxu0 0.0
        %1024 = vmatprep.subr.mxu0 0.0
        %1025 = vmatpush1.msra.mxu0 0.0
        %1026 = vmatprep.subr.mxu0 0.0
        %1027 = vmatpush1.msra.mxu0 0.0
        %1028 = vmatprep.subr.mxu0 0.0
        %1029 = vmatpush1.msra.mxu0 0.0
        %1030 = vmatprep.subr.mxu0 0.0
        %1031 = vmatpush1.msra.mxu0 0.0
        %1032 = vmatprep.subr.mxu0 0.0
        %1033 = vmatpush1.msra.mxu0 0.0
        %1034 = vmatprep.subr.mxu0 0.0
        %1035 = vmatpush1.msra.mxu0 0.0
        %1036 = vmatprep.subr.mxu0 0.0
        %1037 = vmatpush1.msra.mxu0 0.0
        %1038 = vmatprep.subr.mxu0 0.0
        %1039 = vmatpush1.msra.mxu0 0.0
        %1040 = vmatprep.subr.mxu0 0.0
        %1041 = vmatpush1.msra.mxu0 0.0
        %1042 = vmatprep.subr.mxu0 0.0
        %1043 = vmatpush1.msra.mxu0 0.0
        %1044 = vmatprep.subr.mxu0 0.0
        %1045 = vmatpush1.msra.mxu0 0.0
        %1046 = vmatprep.subr.mxu0 0.0
        %1047 = vmatpush1.msra.mxu0 0.0
        %1048 = vmatprep.subr.mxu0 0.0
        %1049 = vmatpush1.msra.mxu0 0.0
        %1050 = vmatprep.subr.mxu0 0.0
        %1051 = vmatpush1.msra.mxu0 0.0
        %1052 = vmatprep.subr.mxu0 0.0
        %1053 = vmatpush1.msra.mxu0 0.0
        %1054 = vmatprep.subr.mxu0 0.0
        %1055 = vmatpush1.msra.mxu0 0.0
        %1056 = vmatprep.subr.mxu0 0.0
        %1057 = vmatpush1.msra.mxu0 0.0
        %1058 = vmatprep.subr.mxu0 0.0
        %1059 = vmatpush1.msra.mxu0 0.0
        %1060 = vmatprep.subr.mxu0 0.0
        %1061 = vmatpush1.msra.mxu0 0.0
        %1062 = vmatprep.subr.mxu0 0.0
        %1063 = vmatpush1.msra.mxu0 0.0
        %1064 = vmatprep.subr.mxu0 0.0
        %1065 = vmatpush1.msra.mxu0 0.0
        %1066 = vmatprep.subr.mxu0 0.0
        %1067 = vmatpush1.msra.mxu0 0.0
        %1068 = vmatprep.subr.mxu0 0.0
        %1069 = vmatpush1.msra.mxu0 0.0
        %1070 = vmatprep.subr.mxu0 0.0
        %1071 = vmatpush1.msra.mxu0 0.0
        %1072 = vmatprep.mubr.f32.mxu0 0.0
        %1073 = vmatmul.mubr.f32.gmra.mrb[0].mxu0 %v1006
        %v1074 = vpop.f32.mrb[0].mxu0
        %v1075 = vadd.f32 0.0, %v1074
        %v1076 = vpop.f32.mrb[0].mxu0
        %1077 = vdwg.mxu0
        %1078 = vrot.lane.b32.xlu0 %v504, 64
        %v1079 = vpop.permute.xlu0 %1078
        %v1082 = vsel %vm507, %v837, 0
        %1084 = vmatprep.subr.mxu0 0.0
        %1085 = vmatpush1.msra.mxu0 %v1079
        %1086 = vmatprep.subr.mxu0 0.0
        %1087 = vmatpush1.msra.mxu0 0.0
        %1088 = vmatprep.subr.mxu0 0.0
        %1089 = vmatpush1.msra.mxu0 0.0
        %1090 = vmatprep.subr.mxu0 0.0
        %1091 = vmatpush1.msra.mxu0 0.0
        %1092 = vmatprep.subr.mxu0 0.0
        %1093 = vmatpush1.msra.mxu0 0.0
        %1094 = vmatprep.subr.mxu0 0.0
        %1095 = vmatpush1.msra.mxu0 0.0
        %1096 = vmatprep.subr.mxu0 0.0
        %1097 = vmatpush1.msra.mxu0 0.0
        %1098 = vmatprep.subr.mxu0 0.0
        %1099 = vmatpush1.msra.mxu0 0.0
        %1100 = vmatprep.subr.mxu0 0.0
        %1101 = vmatpush1.msra.mxu0 0.0
        %1102 = vmatprep.subr.mxu0 0.0
        %1103 = vmatpush1.msra.mxu0 0.0
        %1104 = vmatprep.subr.mxu0 0.0
        %1105 = vmatpush1.msra.mxu0 0.0
        %1106 = vmatprep.subr.mxu0 0.0
        %1107 = vmatpush1.msra.mxu0 0.0
        %1108 = vmatprep.subr.mxu0 0.0
        %1109 = vmatpush1.msra.mxu0 0.0
        %1110 = vmatprep.subr.mxu0 0.0
        %1111 = vmatpush1.msra.mxu0 0.0
        %1112 = vmatprep.subr.mxu0 0.0
        %1113 = vmatpush1.msra.mxu0 0.0
        %1114 = vmatprep.subr.mxu0 0.0
        %1115 = vmatpush1.msra.mxu0 0.0
        %1116 = vmatprep.subr.mxu0 0.0
        %1117 = vmatpush1.msra.mxu0 0.0
        %1118 = vmatprep.subr.mxu0 0.0
        %1119 = vmatpush1.msra.mxu0 0.0
        %1120 = vmatprep.subr.mxu0 0.0
        %1121 = vmatpush1.msra.mxu0 0.0
        %1122 = vmatprep.subr.mxu0 0.0
        %1123 = vmatpush1.msra.mxu0 0.0
        %1124 = vmatprep.subr.mxu0 0.0
        %1125 = vmatpush1.msra.mxu0 0.0
        %1126 = vmatprep.subr.mxu0 0.0
        %1127 = vmatpush1.msra.mxu0 0.0
        %1128 = vmatprep.subr.mxu0 0.0
        %1129 = vmatpush1.msra.mxu0 0.0
        %1130 = vmatprep.subr.mxu0 0.0
        %1131 = vmatpush1.msra.mxu0 0.0
        %1132 = vmatprep.subr.mxu0 0.0
        %1133 = vmatpush1.msra.mxu0 0.0
        %1134 = vmatprep.subr.mxu0 0.0
        %1135 = vmatpush1.msra.mxu0 0.0
        %1136 = vmatprep.subr.mxu0 0.0
        %1137 = vmatpush1.msra.mxu0 0.0
        %1138 = vmatprep.subr.mxu0 0.0
        %1139 = vmatpush1.msra.mxu0 0.0
        %1140 = vmatprep.subr.mxu0 0.0
        %1141 = vmatpush1.msra.mxu0 0.0
        %1142 = vmatprep.subr.mxu0 0.0
        %1143 = vmatpush1.msra.mxu0 0.0
        %1144 = vmatprep.subr.mxu0 0.0
        %1145 = vmatpush1.msra.mxu0 0.0
        %1146 = vmatprep.subr.mxu0 0.0
        %1147 = vmatpush1.msra.mxu0 0.0
        %1148 = vmatprep.mubr.f32.mxu0 0.0
        %1149 = vmatmul.mubr.f32.gmra.mrb[0].mxu0 %v1082
        %v1150 = vpop.f32.mrb[0].mxu0
        %v1151 = vadd.f32 0.0, %v1150
        %v1152 = vpop.f32.mrb[0].mxu0
        %1153 = vdwg.mxu0
        %v1154 = vrcp.pop %v840
        %v1155 = vrcp.pop %v843
        %v1156 = vrcp.pop %v846
        %v1157 = vrcp.pop %v849
        %v1158 = vmul.f32 %v923, %v1154
        %v1159 = vmul.f32 %v999, %v1155
        %v1160 = vmul.f32 %v1075, %v1156
        %v1161 = vmul.f32 %v1151, %v1157
        %1162 = vst.msk [vmem:[#allocation2] sm:$0xff] %vm507, %v1158
        %1164 = vrot.lane.b32.xlu0 %v1159, 8
        %v1165 = vpop.permute.xlu0 %1164
        %vm1167 = vcmask 130112
        %1168 = vst.msk [vmem:[#allocation2] sm:$0xff] %vm1167, %v1165
        %1170 = vrot.lane.b32.xlu0 %v1160, 16
        %v1171 = vpop.permute.xlu0 %1170
        %vm1173 = vcmask 195712
        %1174 = vst.msk [vmem:[#allocation2] sm:$0xff] %vm1173, %v1171
        %1176 = vrot.lane.b32.xlu0 %v1161, 24
        %v1177 = vpop.permute.xlu0 %1176
        %vm1179 = vcmask 261312
        %1180 = vst.msk [vmem:[#allocation2] sm:$0xff] %vm1179, %v1177
        %v1181 = vld [vmem:[#allocation2] sm:$0xff]
        %v1182 = vadd.f32 %v1181, %v413
        %v1183 = vld [vmem:[%s5] sm:$0x1]
        %v1184 = vld [vmem:[%s6] sm:$0x1]
        %v1185 = vsel %vm385, %v1182, 0.0
        %1186 = vadd.xlane.f32.xlu0 %v1185
        %v1187 = vpop.xlane.xlu0 %1186
        %v1188 = vmul.f32 %v1187, %v389
        %v1189 = vsub.f32 %v1182, %v1188
        %v1190 = vmul.f32 %v1189, %v1189
        %v1191 = vsel %vm385, %v1190, 0.0
        %1192 = vadd.xlane.f32.xlu0 %v1191
        %v1193 = vpop.xlane.xlu0 %1192
        %v1194 = vmul.f32 %v1193, %v389
        %v1195 = vadd.f32 %v1194, 1e-05
        %v1196 = vrsqrt.pop %v1195
        %v1197 = vmul.f32 %v1189, %v1196
        %v1199 = vlaneseq
        %v1200 = vshrl.u32 %v1199, 7
        %v1201 = vsub.s32 0, %v1200
        %v1202 = vrot.slane %v1183, %v1201
        %v1204 = vmul.f32 %v1197, %v1202
        %v1206 = vlaneseq
        %v1207 = vshrl.u32 %v1206, 7
        %v1208 = vsub.s32 0, %v1207
        %v1209 = vrot.slane %v1184, %v1208
        %v1211 = vadd.f32 %v1204, %v1209
        %v1212 = vld [vmem:[%s7] sm:$0xff]
        %v1213 = vld [vmem:[%s7 + $0x8] sm:$0xff]
        %v1214 = vld [vmem:[%s7 + $0x10] sm:$0xff]
        %v1215 = vld [vmem:[%s7 + $0x18] sm:$0xff]
        %v1216 = vld [vmem:[%s8] sm:$0x1]
        %v1218 = vlaneseq
        %v1219 = vshrl.u32 %v1218, 7
        %v1220 = vsub.s32 0, %v1219
        %v1221 = vrot.slane %v1216, %v1220
        %v1224 = vsel %vm385, %v1211, 0
        %1226 = vmatprep.subr.mxu0 0.0
        %1227 = vmatpush1.msra.mxu0 %v1212
        %1228 = vmatprep.subr.mxu0 0.0
        %1229 = vmatpush1.msra.mxu0 %v1213
        %1230 = vmatprep.subr.mxu0 0.0
        %1231 = vmatpush1.msra.mxu0 %v1214
        %1232 = vmatprep.subr.mxu0 0.0
        %1233 = vmatpush1.msra.mxu0 %v1215
        %1234 = vmatprep.subr.mxu0 0.0
        %1235 = vmatpush1.msra.mxu0 0.0
        %1236 = vmatprep.subr.mxu0 0.0
        %1237 = vmatpush1.msra.mxu0 0.0
        %1238 = vmatprep.subr.mxu0 0.0
        %1239 = vmatpush1.msra.mxu0 0.0
        %1240 = vmatprep.subr.mxu0 0.0
        %1241 = vmatpush1.msra.mxu0 0.0
        %1242 = vmatprep.subr.mxu0 0.0
        %1243 = vmatpush1.msra.mxu0 0.0
        %1244 = vmatprep.subr.mxu0 0.0
        %1245 = vmatpush1.msra.mxu0 0.0
        %1246 = vmatprep.subr.mxu0 0.0
        %1247 = vmatpush1.msra.mxu0 0.0
        %1248 = vmatprep.subr.mxu0 0.0
        %1249 = vmatpush1.msra.mxu0 0.0
        %1250 = vmatprep.subr.mxu0 0.0
        %1251 = vmatpush1.msra.mxu0 0.0
        %1252 = vmatprep.subr.mxu0 0.0
        %1253 = vmatpush1.msra.mxu0 0.0
        %1254 = vmatprep.subr.mxu0 0.0
        %1255 = vmatpush1.msra.mxu0 0.0
        %1256 = vmatprep.subr.mxu0 0.0
        %1257 = vmatpush1.msra.mxu0 0.0
        %1258 = vmatprep.subr.mxu0 0.0
        %1259 = vmatpush1.msra.mxu0 0.0
        %1260 = vmatprep.subr.mxu0 0.0
        %1261 = vmatpush1.msra.mxu0 0.0
        %1262 = vmatprep.subr.mxu0 0.0
        %1263 = vmatpush1.msra.mxu0 0.0
        %1264 = vmatprep.subr.mxu0 0.0
        %1265 = vmatpush1.msra.mxu0 0.0
        %1266 = vmatprep.subr.mxu0 0.0
        %1267 = vmatpush1.msra.mxu0 0.0
        %1268 = vmatprep.subr.mxu0 0.0
        %1269 = vmatpush1.msra.mxu0 0.0
        %1270 = vmatprep.subr.mxu0 0.0
        %1271 = vmatpush1.msra.mxu0 0.0
        %1272 = vmatprep.subr.mxu0 0.0
        %1273 = vmatpush1.msra.mxu0 0.0
        %1274 = vmatprep.subr.mxu0 0.0
        %1275 = vmatpush1.msra.mxu0 0.0
        %1276 = vmatprep.subr.mxu0 0.0
        %1277 = vmatpush1.msra.mxu0 0.0
        %1278 = vmatprep.subr.mxu0 0.0
        %1279 = vmatpush1.msra.mxu0 0.0
        %1280 = vmatprep.subr.mxu0 0.0
        %1281 = vmatpush1.msra.mxu0 0.0
        %1282 = vmatprep.subr.mxu0 0.0
        %1283 = vmatpush1.msra.mxu0 0.0
        %1284 = vmatprep.subr.mxu0 0.0
        %1285 = vmatpush1.msra.mxu0 0.0
        %1286 = vmatprep.subr.mxu0 0.0
        %1287 = vmatpush1.msra.mxu0 0.0
        %1288 = vmatprep.subr.mxu0 0.0
        %1289 = vmatpush1.msra.mxu0 0.0
        %1290 = vmatprep.mubr.f32.mxu0 0.0
        %1291 = vmatmul.mubr.f32.gmra.mrb[0].mxu0 %v1224
        %v1292 = vpop.f32.mrb[0].mxu0
        %v1293 = vadd.f32 %v1221, %v1292
        %v1294 = vpop.f32.mrb[0].mxu0
        %1295 = vdwg.mxu0
        %v1296 = vmul.f32 %v1293, 0.5
        %v1297 = vmul.f32 %v1293, 0.70710677
        %v1298 = verf.f32.pop %v1297
        %v1299 = vadd.f32 %v1298, 1.0
        %v1300 = vmul.f32 %v1296, %v1299
        %v1301 = vld [vmem:[%s9] sm:$0xff]
        %v1302 = vld [vmem:[%s9 + $0x8] sm:$0xff]
        %v1303 = vld [vmem:[%s9 + $0x10] sm:$0xff]
        %v1304 = vld [vmem:[%s9 + $0x18] sm:$0xff]
        %v1305 = vld [vmem:[%s9 + $0x20] sm:$0xff]
        %v1306 = vld [vmem:[%s9 + $0x28] sm:$0xff]
        %v1307 = vld [vmem:[%s9 + $0x30] sm:$0xff]
        %v1308 = vld [vmem:[%s9 + $0x38] sm:$0xff]
        %v1309 = vld [vmem:[%s10] sm:$0x1]
        %v1311 = vlaneseq
        %v1312 = vshrl.u32 %v1311, 7
        %v1313 = vsub.s32 0, %v1312
        %v1314 = vrot.slane %v1309, %v1313
        %vm1316 = vcmask 523264
        %v1318 = vsel %vm1316, %v1300, 0
        %1320 = vmatprep.subr.mxu0 0.0
        %1321 = vmatpush1.msra.mxu0 %v1301
        %1322 = vmatprep.subr.mxu0 0.0
        %1323 = vmatpush1.msra.mxu0 %v1302
        %1324 = vmatprep.subr.mxu0 0.0
        %1325 = vmatpush1.msra.mxu0 %v1303
        %1326 = vmatprep.subr.mxu0 0.0
        %1327 = vmatpush1.msra.mxu0 %v1304
        %1328 = vmatprep.subr.mxu0 0.0
        %1329 = vmatpush1.msra.mxu0 %v1305
        %1330 = vmatprep.subr.mxu0 0.0
        %1331 = vmatpush1.msra.mxu0 %v1306
        %1332 = vmatprep.subr.mxu0 0.0
        %1333 = vmatpush1.msra.mxu0 %v1307
        %1334 = vmatprep.subr.mxu0 0.0
        %1335 = vmatpush1.msra.mxu0 %v1308
        %1336 = vmatprep.subr.mxu0 0.0
        %1337 = vmatpush1.msra.mxu0 0.0
        %1338 = vmatprep.subr.mxu0 0.0
        %1339 = vmatpush1.msra.mxu0 0.0
        %1340 = vmatprep.subr.mxu0 0.0
        %1341 = vmatpush1.msra.mxu0 0.0
        %1342 = vmatprep.subr.mxu0 0.0
        %1343 = vmatpush1.msra.mxu0 0.0
        %1344 = vmatprep.subr.mxu0 0.0
        %1345 = vmatpush1.msra.mxu0 0.0
        %1346 = vmatprep.subr.mxu0 0.0
        %1347 = vmatpush1.msra.mxu0 0.0
        %1348 = vmatprep.subr.mxu0 0.0
        %1349 = vmatpush1.msra.mxu0 0.0
        %1350 = vmatprep.subr.mxu0 0.0
        %1351 = vmatpush1.msra.mxu0 0.0
        %1352 = vmatprep.subr.mxu0 0.0
        %1353 = vmatpush1.msra.mxu0 0.0
        %1354 = vmatprep.subr.mxu0 0.0
        %1355 = vmatpush1.msra.mxu0 0.0
        %1356 = vmatprep.subr.mxu0 0.0
        %1357 = vmatpush1.msra.mxu0 0.0
        %1358 = vmatprep.subr.mxu0 0.0
        %1359 = vmatpush1.msra.mxu0 0.0
        %1360 = vmatprep.subr.mxu0 0.0
        %1361 = vmatpush1.msra.mxu0 0.0
        %1362 = vmatprep.subr.mxu0 0.0
        %1363 = vmatpush1.msra.mxu0 0.0
        %1364 = vmatprep.subr.mxu0 0.0
        %1365 = vmatpush1.msra.mxu0 0.0
        %1366 = vmatprep.subr.mxu0 0.0
        %1367 = vmatpush1.msra.mxu0 0.0
        %1368 = vmatprep.subr.mxu0 0.0
        %1369 = vmatpush1.msra.mxu0 0.0
        %1370 = vmatprep.subr.mxu0 0.0
        %1371 = vmatpush1.msra.mxu0 0.0
        %1372 = vmatprep.subr.mxu0 0.0
        %1373 = vmatpush1.msra.mxu0 0.0
        %1374 = vmatprep.subr.mxu0 0.0
        %1375 = vmatpush1.msra.mxu0 0.0
        %1376 = vmatprep.subr.mxu0 0.0
        %1377 = vmatpush1.msra.mxu0 0.0
        %1378 = vmatprep.subr.mxu0 0.0
        %1379 = vmatpush1.msra.mxu0 0.0
        %1380 = vmatprep.subr.mxu0 0.0
        %1381 = vmatpush1.msra.mxu0 0.0
        %1382 = vmatprep.subr.mxu0 0.0
        %1383 = vmatpush1.msra.mxu0 0.0
        %1384 = vmatprep.mubr.f32.mxu0 0.0
        %1385 = vmatmul.mubr.f32.gmra.mrb[0].mxu0 %v1318
        %v1386 = vpop.f32.mrb[0].mxu0
        %v1387 = vadd.f32 %v1314, %v1386
        %v1388 = vpop.f32.mrb[0].mxu0
        %1389 = vdwg.mxu0
        %v1390 = vmul.f32 %v1387, 0.5
        %v1391 = vmul.f32 %v1387, 0.70710677
        %v1392 = verf.f32.pop %v1391
        %v1393 = vadd.f32 %v1392, 1.0
        %v1394 = vmul.f32 %v1390, %v1393
        %v1395 = vadd.f32 %v1394, %v1211
        %1396 = vst.msk [vmem:[%s377] sm:$0xff] %vm385, %v1395
        %s1397 = sand.u32 %s269, 1
        %s1398 = scalar_lea.sflag [#allocation4], %s1397
        %s1399 = sand.u32 %s269, 1
        %s1400 = smul.addr %s1399, 8
        %s1401 = scalar_lea.vmem [#allocation3], %s1400
        // Predicated region
        $region65: #{tpu_custom_call.1} parent=63 // pred_check
          %p1402 = pneg %p279
        $region66: #{tpu_custom_call.1} parent=63 // pred_check_branch
          %1404 = sbr.rel (%p1402) target = $region68
        $region67: #{tpu_custom_call.1} parent=63 // pred_region
          %s1406 = ssub.s32 128, 128
          %1407 = vsyncadd %s1398, %s1406
          %s1408 = smul.addr %s25, 128
          %s1409 = scalar_lea.hbm %s11, %s1408
          %s1411 = sshll.u32 %s1401, 4
          %s1412 = int_to_ptr.vmem [resolvable:$true] %s1411
          %1414 = dma.vmem_to_hbm [thread:$0]  %s1412, 128, %s1409, %s1398
        $region68: #{tpu_custom_call.1} parent=63 // pred_fallthru
          _
      $region64: #{tpu_custom_call.1} parent=5 // pred_fallthru
        _
      %p1415 = scmp.le.s32.totalorder 2, %s20
      // Predicated region
      $region69: #{tpu_custom_call.1} parent=5 // pred_check
        %p1416 = pneg %p1415
      $region70: #{tpu_custom_call.1} parent=5 // pred_check_branch
        %1418 = sbr.rel (%p1416) target = $region72
      $region71: #{tpu_custom_call.1} parent=5 // pred_region
        %s1419 = ssub.s32 %s20, 2
        // Predicated region
        $region73: #{tpu_custom_call.1} parent=71 // pred_check
          %p1420 = pneg %p285
        $region74: #{tpu_custom_call.1} parent=71 // pred_check_branch
          %1422 = sbr.rel (%p1420) target = $region76
        $region75: #{tpu_custom_call.1} parent=71 // pred_region
          %s1423 = sand.u32 %s270, 1
          %s1424 = scalar_lea.sflag [#allocation4], %s1423
          %s1425 = sand.u32 %s270, 1
          %s1426 = smul.addr %s1425, 8
          %s1427 = scalar_lea.vmem [#allocation3], %s1426
          %1428 = dma.done %s1424, 128
        $region76: #{tpu_custom_call.1} parent=71 // pred_fallthru
          _
      $region72: #{tpu_custom_call.1} parent=5 // pred_fallthru
        _
    $region6: #{tpu_custom_call.1} parent=1 // loop_footer
      %s24 = sadd.s32 1, %s20
    $region7: #{tpu_custom_call.1} parent=1 // loop_footer_branch
      %19 = sbr.rel target = $region3
    $region8: #{tpu_custom_call.1} parent=1 // loop_exit
      _
    %1429 = vsyncpa [#allocation4], 1
    %s1430 = scalar_lea.sflag [#allocation4], 1
    %1431 = vsyncpa %s1430, 1

// kernel: tpu_custom_call.1
$region0: #{tpu_custom_call.1}
  #allocation0 [shape = 'u32[]', space=smem, size = 0x4, offset = 0x4, fixed_abs, tag = 'smem constant byte address 0x4 - core index']
  #allocation1 [shape = 'u32[144,128]{1,0:T(1,128)}', space=vmem, size = 0x12000, scoped, tag = 'internal scratch']
  #allocation2 [shape = 'f32[8,32]{1,0:T(8,128)}', space=vmem, size = 0x1000, scoped, tag = 'scratch operand']
  %s0 = inlined_call_operand.vmem [shape: f32[16,32], index: 0, kind: input, shape index: {}]
  %s1 = inlined_call_operand.vmem [shape: f32[1,32], index: 1, kind: input, shape index: {}]
  %s2 = inlined_call_operand.vmem [shape: f32[1,32], index: 2, kind: input, shape index: {}]
  %s3 = inlined_call_operand.vmem [shape: f32[4,32,24], index: 3, kind: input, shape index: {}]
  %s4 = inlined_call_operand.vmem [shape: f32[4,1,24], index: 4, kind: input, shape index: {}]
  %s5 = inlined_call_operand.vmem [shape: f32[1,32], index: 5, kind: input, shape index: {}]
  %s6 = inlined_call_operand.vmem [shape: f32[1,32], index: 6, kind: input, shape index: {}]
  %s7 = inlined_call_operand.vmem [shape: f32[32,64], index: 7, kind: input, shape index: {}]
  %s8 = inlined_call_operand.vmem [shape: f32[1,64], index: 8, kind: input, shape index: {}]
  %s9 = inlined_call_operand.vmem [shape: f32[64,32], index: 9, kind: input, shape index: {}]
  %s10 = inlined_call_operand.vmem [shape: f32[1,32], index: 10, kind: input, shape index: {}]
  %s11 = inlined_call_operand.hbm [shape: f32[16,32], index: 11, kind: output, shape index: {}]
  %s12 = sld [smem:[#allocation0]]
  $region77: #{tpu_custom_call.1} parent=0
    _
  %s14 = ssub.s32 1, %s12
  %s15 = scalar_select 0, %s14, %s12
  $region1: #{tpu_custom_call.1} parent=0
    #allocation3 [shape = 'u8[8192]{0}', space=vmem, size = 0x2000, scoped, tag = 'output window, operand 0']
    #allocation4 [shape = 's32[2]{0}', space=sflag, size = 0x8, scoped, tag = 'scoped memory for tpu_custom_call.1']
    %16 = vsyncpa [#allocation4], 0
    %s17 = scalar_lea.sflag [#allocation4], 1
    %18 = vsyncpa %s17, 0
    loop: start=0, step=1, limit=4
    $region2: #{tpu_custom_call.1} parent=1 // loop_pre_header
      _
    $region3: #{tpu_custom_call.1} parent=1 // loop_header
      %s20 = sphi 0, %s24
      %p21 = scmp.ge.s32.totalorder %s20, 4
      %s30 = sphi 0, %s32
      %s33 = sphi 0, %s30
      %s34 = sphi 0, %s33
      %s50 = sphi 0, %s34
      %s54 = sphi 0, %s54
      %s56 = sphi 0, %s54
      %s57 = sphi 0, %s56
      %s71 = sphi 0, %s57
      %s75 = sphi 0, %s75
      %s77 = sphi 0, %s75
      %s78 = sphi 0, %s77
      %s92 = sphi 0, %s78
      %s96 = sphi 0, %s96
      %s98 = sphi 0, %s96
      %s99 = sphi 0, %s98
      %s113 = sphi 0, %s99
      %s117 = sphi 0, %s117
      %s119 = sphi 0, %s117
      %s120 = sphi 0, %s119
      %s134 = sphi 0, %s120
      %s138 = sphi 0, %s138
      %s140 = sphi 0, %s138
      %s141 = sphi 0, %s140
      %s155 = sphi 0, %s141
      %s159 = sphi 0, %s159
      %s161 = sphi 0, %s159
      %s162 = sphi 0, %s161
      %s176 = sphi 0, %s162
      %s180 = sphi 0, %s180
      %s182 = sphi 0, %s180
      %s183 = sphi 0, %s182
      %s197 = sphi 0, %s183
      %s201 = sphi 0, %s201
      %s203 = sphi 0, %s201
      %s204 = sphi 0, %s203
      %s218 = sphi 0, %s204
      %s222 = sphi 0, %s222
      %s224 = sphi 0, %s222
      %s225 = sphi 0, %s224
      %s239 = sphi 0, %s225
      %s243 = sphi 0, %s243
      %s245 = sphi 0, %s243
      %s246 = sphi 0, %s245
      %s260 = sphi 0, %s246
      %s266 = sphi 0, %s268
      %s269 = sphi 0, %s266
      %s270 = sphi 0, %s269
      %s286 = sphi 0, %s270
    $region4: #{tpu_custom_call.1} parent=1 // loop_header_branch
      %23 = sbr.rel (%p21) target = $region8
    $region5: #{tpu_custom_call.1} parent=1 // loop_body
      %s25 = ssub.s32 %s20, 1
      %s26 = ssub.s32 %s20, 2
      %s27 = sadd.s32 %s20, 1
      %s28 = ssub.s32 %s20, %s27
      %p29 = scmp.eq.s32.totalorder %s28, 0
      %s31 = sadd.s32 %s30, 1
      %s32 = scalar_select %p29, %s30, %s31
      %p35 = pneg %p29
      %p36 = scmp.eq.s32.totalorder %s20, 1
      %p37 = por %p35, %p36
      %p38 = scmp.ne.s32.totalorder %s30, %s33
      %p39 = scmp.eq.s32.totalorder %s20, 0
      %p40 = por %p38, %p39
      %p41 = scmp.ne.s32.totalorder %s30, %s33
      %p42 = scmp.eq.s32.totalorder %s25, 1
      %p43 = por %p41, %p42
      %p44 = scmp.ne.s32.totalorder %s33, %s34
      %p45 = scmp.eq.s32.totalorder %s25, 0
      %p46 = por %p44, %p45
      %p47 = scmp.ne.s32.totalorder %s33, %s34
      %p48 = scmp.eq.s32.totalorder %s26, 1
      %p49 = por %p47, %p48
      %p51 = scmp.ne.s32.totalorder %s34, %s50
      %p52 = scmp.eq.s32.totalorder %s26, 0
      %p53 = por %p51, %p52
      %s55 = sadd.s32 %s54, 1
      %p58 = scmp.eq.s32.totalorder %s20, 1
      %p59 = scmp.ne.s32.totalorder %s54, %s56
      %p60 = scmp.eq.s32.totalorder %s20, 0
      %p61 = por %p59, %p60
      %p62 = scmp.ne.s32.totalorder %s54, %s56
      %p63 = scmp.eq.s32.totalorder %s25, 1
      %p64 = por %p62, %p63
      %p65 = scmp.ne.s32.totalorder %s56, %s57
      %p66 = scmp.eq.s32.totalorder %s25, 0
      %p67 = por %p65, %p66
      %p68 = scmp.ne.s32.totalorder %s56, %s57
      %p69 = scmp.eq.s32.totalorder %s26, 1
      %p70 = por %p68, %p69
      %p72 = scmp.ne.s32.totalorder %s57, %s71
      %p73 = scmp.eq.s32.totalorder %s26, 0
      %p74 = por %p72, %p73
      %s76 = sadd.s32 %s75, 1
      %p79 = scmp.eq.s32.totalorder %s20, 1
      %p80 = scmp.ne.s32.totalorder %s75, %s77
      %p81 = scmp.eq.s32.totalorder %s20, 0
      %p82 = por %p80, %p81
      %p83 = scmp.ne.s32.totalorder %s75, %s77
      %p84 = scmp.eq.s32.totalorder %s25, 1
      %p85 = por %p83, %p84
      %p86 = scmp.ne.s32.totalorder %s77, %s78
      %p87 = scmp.eq.s32.totalorder %s25, 0
      %p88 = por %p86, %p87
      %p89 = scmp.ne.s32.totalorder %s77, %s78
      %p90 = scmp.eq.s32.totalorder %s26, 1
      %p91 = por %p89, %p90
      %p93 = scmp.ne.s32.totalorder %s78, %s92
      %p94 = scmp.eq.s32.totalorder %s26, 0
      %p95 = por %p93, %p94
      %s97 = sadd.s32 %s96, 1
      %p100 = scmp.eq.s32.totalorder %s20, 1
      %p101 = scmp.ne.s32.totalorder %s96, %s98
      %p102 = scmp.eq.s32.totalorder %s20, 0
      %p103 = por %p101, %p102
      %p104 = scmp.ne.s32.totalorder %s96, %s98
      %p105 = scmp.eq.s32.totalorder %s25, 1
      %p106 = por %p104, %p105
      %p107 = scmp.ne.s32.totalorder %s98, %s99
      %p108 = scmp.eq.s32.totalorder %s25, 0
      %p109 = por %p107, %p108
      %p110 = scmp.ne.s32.totalorder %s98, %s99
      %p111 = scmp.eq.s32.totalorder %s26, 1
      %p112 = por %p110, %p111
      %p114 = scmp.ne.s32.totalorder %s99, %s113
      %p115 = scmp.eq.s32.totalorder %s26, 0
      %p116 = por %p114, %p115
      %s118 = sadd.s32 %s117, 1
      %p121 = scmp.eq.s32.totalorder %s20, 1
      %p122 = scmp.ne.s32.totalorder %s117, %s119
      %p123 = scmp.eq.s32.totalorder %s20, 0
      %p124 = por %p122, %p123
      %p125 = scmp.ne.s32.totalorder %s117, %s119
      %p126 = scmp.eq.s32.totalorder %s25, 1
      %p127 = por %p125, %p126
      %p128 = scmp.ne.s32.totalorder %s119, %s120
      %p129 = scmp.eq.s32.totalorder %s25, 0
      %p130 = por %p128, %p129
      %p131 = scmp.ne.s32.totalorder %s119, %s120
      %p132 = scmp.eq.s32.totalorder %s26, 1
      %p133 = por %p131, %p132
      %p135 = scmp.ne.s32.totalorder %s120, %s134
      %p136 = scmp.eq.s32.totalorder %s26, 0
      %p137 = por %p135, %p136
      %s139 = sadd.s32 %s138, 1
      %p142 = scmp.eq.s32.totalorder %s20, 1
      %p143 = scmp.ne.s32.totalorder %s138, %s140
      %p144 = scmp.eq.s32.totalorder %s20, 0
      %p145 = por %p143, %p144
      %p146 = scmp.ne.s32.totalorder %s138, %s140
      %p147 = scmp.eq.s32.totalorder %s25, 1
      %p148 = por %p146, %p147
      %p149 = scmp.ne.s32.totalorder %s140, %s141
      %p150 = scmp.eq.s32.totalorder %s25, 0
      %p151 = por %p149, %p150
      %p152 = scmp.ne.s32.totalorder %s140, %s141
      %p153 = scmp.eq.s32.totalorder %s26, 1
      %p154 = por %p152, %p153
      %p156 = scmp.ne.s32.totalorder %s141, %s155
      %p157 = scmp.eq.s32.totalorder %s26, 0
      %p158 = por %p156, %p157
      %s160 = sadd.s32 %s159, 1
      %p163 = scmp.eq.s32.totalorder %s20, 1
      %p164 = scmp.ne.s32.totalorder %s159, %s161
      %p165 = scmp.eq.s32.totalorder %s20, 0
      %p166 = por %p164, %p165
      %p167 = scmp.ne.s32.totalorder %s159, %s161
      %p168 = scmp.eq.s32.totalorder %s25, 1
      %p169 = por %p167, %p168
      %p170 = scmp.ne.s32.totalorder %s161, %s162
      %p171 = scmp.eq.s32.totalorder %s25, 0
      %p172 = por %p170, %p171
      %p173 = scmp.ne.s32.totalorder %s161, %s162
      %p174 = scmp.eq.s32.totalorder %s26, 1
      %p175 = por %p173, %p174
      %p177 = scmp.ne.s32.totalorder %s162, %s176
      %p178 = scmp.eq.s32.totalorder %s26, 0
      %p179 = por %p177, %p178
      %s181 = sadd.s32 %s180, 1
      %p184 = scmp.eq.s32.totalorder %s20, 1
      %p185 = scmp.ne.s32.totalorder %s180, %s182
      %p186 = scmp.eq.s32.totalorder %s20, 0
      %p187 = por %p185, %p186
      %p188 = scmp.ne.s32.totalorder %s180, %s182
      %p189 = scmp.eq.s32.totalorder %s25, 1
      %p190 = por %p188, %p189
      %p191 = scmp.ne.s32.totalorder %s182, %s183
      %p192 = scmp.eq.s32.totalorder %s25, 0
      %p193 = por %p191, %p192
      %p194 = scmp.ne.s32.totalorder %s182, %s183
      %p195 = scmp.eq.s32.totalorder %s26, 1
      %p196 = por %p194, %p195
      %p198 = scmp.ne.s32.totalorder %s183, %s197
      %p199 = scmp.eq.s32.totalorder %s26, 0
      %p200 = por %p198, %p199
      %s202 = sadd.s32 %s201, 1
      %p205 = scmp.eq.s32.totalorder %s20, 1
      %p206 = scmp.ne.s32.totalorder %s201, %s203
      %p207 = scmp.eq.s32.totalorder %s20, 0
      %p208 = por %p206, %p207
      %p209 = scmp.ne.s32.totalorder %s201, %s203
      %p210 = scmp.eq.s32.totalorder %s25, 1
      %p211 = por %p209, %p210
      %p212 = scmp.ne.s32.totalorder %s203, %s204
      %p213 = scmp.eq.s32.totalorder %s25, 0
      %p214 = por %p212, %p213
      %p215 = scmp.ne.s32.totalorder %s203, %s204
      %p216 = scmp.eq.s32.totalorder %s26, 1
      %p217 = por %p215, %p216
      %p219 = scmp.ne.s32.totalorder %s204, %s218
      %p220 = scmp.eq.s32.totalorder %s26, 0
      %p221 = por %p219, %p220
      %s223 = sadd.s32 %s222, 1
      %p226 = scmp.eq.s32.totalorder %s20, 1
      %p227 = scmp.ne.s32.totalorder %s222, %s224
      %p228 = scmp.eq.s32.totalorder %s20, 0
      %p229 = por %p227, %p228
      %p230 = scmp.ne.s32.totalorder %s222, %s224
      %p231 = scmp.eq.s32.totalorder %s25, 1
      %p232 = por %p230, %p231
      %p233 = scmp.ne.s32.totalorder %s224, %s225
      %p234 = scmp.eq.s32.totalorder %s25, 0
      %p235 = por %p233, %p234
      %p236 = scmp.ne.s32.totalorder %s224, %s225
      %p237 = scmp.eq.s32.totalorder %s26, 1
      %p238 = por %p236, %p237
      %p240 = scmp.ne.s32.totalorder %s225, %s239
      %p241 = scmp.eq.s32.totalorder %s26, 0
      %p242 = por %p240, %p241
      %s244 = sadd.s32 %s243, 1
      %p247 = scmp.eq.s32.totalorder %s20, 1
      %p248 = scmp.ne.s32.totalorder %s243, %s245
      %p249 = scmp.eq.s32.totalorder %s20, 0
      %p250 = por %p248, %p249
      %p251 = scmp.ne.s32.totalorder %s243, %s245
      %p252 = scmp.eq.s32.totalorder %s25, 1
      %p253 = por %p251, %p252
      %p254 = scmp.ne.s32.totalorder %s245, %s246
      %p255 = scmp.eq.s32.totalorder %s25, 0
      %p256 = por %p254, %p255
      %p257 = scmp.ne.s32.totalorder %s245, %s246
      %p258 = scmp.eq.s32.totalorder %s26, 1
      %p259 = por %p257, %p258
      %p261 = scmp.ne.s32.totalorder %s246, %s260
      %p262 = scmp.eq.s32.totalorder %s26, 0
      %p263 = por %p261, %p262
      %s264 = ssub.s32 %s20, %s27
      %p265 = scmp.eq.s32.totalorder %s264, 0
      %s267 = sadd.s32 %s266, 1
      %s268 = scalar_select %p265, %s266, %s267
      %p271 = pneg %p265
      %p272 = scmp.eq.s32.totalorder %s20, 1
      %p273 = por %p271, %p272
      %p274 = scmp.ne.s32.totalorder %s266, %s269
      %p275 = scmp.eq.s32.totalorder %s20, 0
      %p276 = por %p274, %p275
      %p277 = scmp.ne.s32.totalorder %s266, %s269
      %p278 = scmp.eq.s32.totalorder %s25, 1
      %p279 = por %p277, %p278
      %p280 = scmp.ne.s32.totalorder %s269, %s270
      %p281 = scmp.eq.s32.totalorder %s25, 0
      %p282 = por %p280, %p281
      %p283 = scmp.ne.s32.totalorder %s269, %s270
      %p284 = scmp.eq.s32.totalorder %s26, 1
      %p285 = por %p283, %p284
      %p287 = scmp.ne.s32.totalorder %s270, %s286
      %p288 = scmp.eq.s32.totalorder %s26, 0
      %p289 = por %p287, %p288
      %p290 = scmp.le.s32.totalorder 1, %s20
      %p291 = scmp.lt.s32.totalorder %s20, 3
      %p292 = pnand %p290, %p291
      %p293 = pneg %p292
      // Predicated region
      $region9: #{tpu_custom_call.1} parent=5 // pred_check
        _
      $region10: #{tpu_custom_call.1} parent=5 // pred_check_branch
        %295 = sbr.rel (%p292) target = $region12
      $region11: #{tpu_custom_call.1} parent=5 // pred_region
        %s296 = ssub.s32 %s20, 1
        // Predicated region
        $region13: #{tpu_custom_call.1} parent=11 // pred_check
          %p297 = pneg %p67
        $region14: #{tpu_custom_call.1} parent=11 // pred_check_branch
          %299 = sbr.rel (%p297) target = $region16
        $region15: #{tpu_custom_call.1} parent=11 // pred_region
          _
        $region16: #{tpu_custom_call.1} parent=11 // pred_fallthru
          _
        // Predicated region
        $region17: #{tpu_custom_call.1} parent=11 // pred_check
          %p300 = pneg %p88
        $region18: #{tpu_custom_call.1} parent=11 // pred_check_branch
          %302 = sbr.rel (%p300) target = $region20
        $region19: #{tpu_custom_call.1} parent=11 // pred_region
          _
        $region20: #{tpu_custom_call.1} parent=11 // pred_fallthru
          _
        // Predicated region
        $region21: #{tpu_custom_call.1} parent=11 // pred_check
          %p303 = pneg %p109
        $region22: #{tpu_custom_call.1} parent=11 // pred_check_branch
          %305 = sbr.rel (%p303) target = $region24
        $region23: #{tpu_custom_call.1} parent=11 // pred_region
          _
        $region24: #{tpu_custom_call.1} parent=11 // pred_fallthru
          _
        // Predicated region
        $region25: #{tpu_custom_call.1} parent=11 // pred_check
          %p306 = pneg %p130
        $region26: #{tpu_custom_call.1} parent=11 // pred_check_branch
          %308 = sbr.rel (%p306) target = $region28
        $region27: #{tpu_custom_call.1} parent=11 // pred_region
          _
        $region28: #{tpu_custom_call.1} parent=11 // pred_fallthru
          _
        // Predicated region
        $region29: #{tpu_custom_call.1} parent=11 // pred_check
          %p309 = pneg %p151
        $region30: #{tpu_custom_call.1} parent=11 // pred_check_branch
          %311 = sbr.rel (%p309) target = $region32
        $region31: #{tpu_custom_call.1} parent=11 // pred_region
          _
        $region32: #{tpu_custom_call.1} parent=11 // pred_fallthru
          _
        // Predicated region
        $region33: #{tpu_custom_call.1} parent=11 // pred_check
          %p312 = pneg %p172
        $region34: #{tpu_custom_call.1} parent=11 // pred_check_branch
          %314 = sbr.rel (%p312) target = $region36
        $region35: #{tpu_custom_call.1} parent=11 // pred_region
          _
        $region36: #{tpu_custom_call.1} parent=11 // pred_fallthru
          _
        // Predicated region
        $region37: #{tpu_custom_call.1} parent=11 // pred_check
          %p315 = pneg %p193
        $region38: #{tpu_custom_call.1} parent=11 // pred_check_branch
          %317 = sbr.rel (%p315) target = $region40
        $region39: #{tpu_custom_call.1} parent=11 // pred_region
          _
        $region40: #{tpu_custom_call.1} parent=11 // pred_fallthru
          _
        // Predicated region
        $region41: #{tpu_custom_call.1} parent=11 // pred_check
          %p318 = pneg %p214
        $region42: #{tpu_custom_call.1} parent=11 // pred_check_branch
          %320 = sbr.rel (%p318) target = $region44
        $region43: #{tpu_custom_call.1} parent=11 // pred_region
          _
        $region44: #{tpu_custom_call.1} parent=11 // pred_fallthru
          _
        // Predicated region
        $region45: #{tpu_custom_call.1} parent=11 // pred_check
          %p321 = pneg %p235
        $region46: #{tpu_custom_call.1} parent=11 // pred_check_branch
          %323 = sbr.rel (%p321) target = $region48
        $region47: #{tpu_custom_call.1} parent=11 // pred_region
          _
        $region48: #{tpu_custom_call.1} parent=11 // pred_fallthru
          _
        // Predicated region
        $region49: #{tpu_custom_call.1} parent=11 // pred_check
          %p324 = pneg %p256
        $region50: #{tpu_custom_call.1} parent=11 // pred_check_branch
          %326 = sbr.rel (%p324) target = $region52
        $region51: #{tpu_custom_call.1} parent=11 // pred_region
          _
        $region52: #{tpu_custom_call.1} parent=11 // pred_fallthru
          _
      $region12: #{tpu_custom_call.1} parent=5 // pred_fallthru
        _
      %p327 = scmp.lt.s32.totalorder %s20, 2
      // Predicated region
      $region53: #{tpu_custom_call.1} parent=5 // pred_check
        %p328 = pneg %p327
      $region54: #{tpu_custom_call.1} parent=5 // pred_check_branch
        %330 = sbr.rel (%p328) target = $region56
      $region55: #{tpu_custom_call.1} parent=5 // pred_region
        // Predicated region
        $region57: #{tpu_custom_call.1} parent=55 // pred_check
          %p331 = pneg %p40
        $region58: #{tpu_custom_call.1} parent=55 // pred_check_branch
          %333 = sbr.rel (%p331) target = $region60
        $region59: #{tpu_custom_call.1} parent=55 // pred_region
          %p334 = scmp.lt.s32.totalorder %s20, 1
          %s335 = scalar_select %p334, %s20, 1
          %s336 = smul.addr %s335, 8
          %s337 = scalar_lea.vmem %s0, %s336
        $region60: #{tpu_custom_call.1} parent=55 // pred_fallthru
          _
      $region56: #{tpu_custom_call.1} parent=5 // pred_fallthru
        _
      %p338 = scmp.le.s32.totalorder 1, %s20
      %p339 = scmp.lt.s32.totalorder %s20, 3
      %p340 = pnand %p338, %p339
      %p341 = pneg %p340
      // Predicated region
      $region61: #{tpu_custom_call.1} parent=5 // pred_check
        _
      $region62: #{tpu_custom_call.1} parent=5 // pred_check_branch
        %343 = sbr.rel (%p340) target = $region64
      $region63: #{tpu_custom_call.1} parent=5 // pred_region
        %s344 = ssub.s32 %s20, 1
        %p345 = scmp.lt.s32.totalorder %s25, 1
        %s346 = scalar_select %p345, %s25, 1
        %s347 = smul.addr %s346, 8
        %s348 = scalar_lea.vmem %s0, %s347
        %p349 = pneg %p46
        %p350 = pneg %p43
        %p351 = pneg %p67
        %p352 = pneg %p64
        %p353 = pneg %p88
        %p354 = pneg %p85
        %p355 = pneg %p109
        %p356 = pneg %p106
        %p357 = pneg %p130
        %p358 = pneg %p127
        %p359 = pneg %p151
        %p360 = pneg %p148
        %p361 = pneg %p172
        %p362 = pneg %p169
        %p363 = pneg %p193
        %p364 = pneg %p190
        %p365 = pneg %p214
        %p366 = pneg %p211
        %p367 = pneg %p235
        %p368 = pneg %p232
        %p369 = pneg %p256
        %p370 = pneg %p253
        %p371 = pneg %p282
        %p372 = pneg %p279
        %s373 = sand.u32 %s269, 1
        %s374 = scalar_lea.sflag [#allocation4], %s373
        %s375 = sand.u32 %s269, 1
        %s376 = smul.addr %s375, 8
        %s377 = scalar_lea.vmem [#allocation3], %s376
        %p378 = scmp.lt.s32.totalorder %s25, 1
        %s379 = scalar_select %p378, %s25, 1
        %s380 = smul.addr %s379, 8
        %s381 = scalar_lea.vmem %s0, %s380
        %v382 = vld [vmem:[%s381] sm:$0xff]
        %v383 = vld [vmem:[%s1] sm:$0x1]
        %v384 = vld [vmem:[%s2] sm:$0x1]
        %vm385 = vcmask 261120
        %v386 = vsel %vm385, %v382, 0.0
        %387 = vadd.xlane.f32.xlu0 %v386
        %v388 = vpop.xlane.xlu0 %387
        %v389 = vrcp.pop 32.0
        %v390 = vmul.f32 %v388, %v389
        %v391 = vsub.f32 %v382, %v390
        %v392 = vmul.f32 %v391, %v391
        %v393 = vsel %vm385, %v392, 0.0
        %394 = vadd.xlane.f32.xlu0 %v393
        %v395 = vpop.xlane.xlu0 %394
        %v396 = vmul.f32 %v395, %v389
        %v397 = vadd.f32 %v396, 1e-05
        %v398 = vrsqrt.pop %v397
        %v399 = vmul.f32 %v391, %v398
        %v401 = vlaneseq
        %v402 = vshrl.u32 %v401, 7
        %v403 = vsub.s32 0, %v402
        %v404 = vrot.slane %v383, %v403
        %v406 = vmul.f32 %v399, %v404
        %v408 = vlaneseq
        %v409 = vshrl.u32 %v408, 7
        %v410 = vsub.s32 0, %v409
        %v411 = vrot.slane %v384, %v410
        %v413 = vadd.f32 %v406, %v411
        %v414 = vld [vmem:[%s3] sm:$0xff]
        %v415 = vld [vmem:[%s3 + $0x8] sm:$0xff]
        %v416 = vld [vmem:[%s3 + $0x10] sm:$0xff]
        %v417 = vld [vmem:[%s3 + $0x18] sm:$0xff]
        %v418 = vld [vmem:[%s3 + $0x20] sm:$0xff]
        %v419 = vld [vmem:[%s3 + $0x28] sm:$0xff]
        %v420 = vld [vmem:[%s3 + $0x30] sm:$0xff]
        %v421 = vld [vmem:[%s3 + $0x38] sm:$0xff]
        %v422 = vld [vmem:[%s3 + $0x40] sm:$0xff]
        %v423 = vld [vmem:[%s3 + $0x48] sm:$0xff]
        %v424 = vld [vmem:[%s3 + $0x50] sm:$0xff]
        %v425 = vld [vmem:[%s3 + $0x58] sm:$0xff]
        %v426 = vld [vmem:[%s3 + $0x60] sm:$0xff]
        %v427 = vld [vmem:[%s3 + $0x68] sm:$0xff]
        %v428 = vld [vmem:[%s3 + $0x70] sm:$0xff]
        %v429 = vld [vmem:[%s3 + $0x78] sm:$0xff]
        %v430 = vld [vmem:[%s4] sm:$0x1]
        %v431 = vld [vmem:[%s4 + $0x1] sm:$0x1]
        %v432 = vld [vmem:[%s4 + $0x2] sm:$0x1]
        %v433 = vld [vmem:[%s4 + $0x3] sm:$0x1]
        %v438 = vlaneseq
        %v439 = vshrl.u32 %v438, 7
        %v440 = vsub.s32 0, %v439
        %v441 = vrot.slane %v430, %v440
        %v442 = vlaneseq
        %v443 = vshrl.u32 %v442, 7
        %v444 = vsub.s32 0, %v443
        %v445 = vrot.slane %v431, %v444
        %v446 = vlaneseq
        %v447 = vshrl.u32 %v446, 7
        %v448 = vsub.s32 0, %v447
        %v449 = vrot.slane %v432, %v448
        %v450 = vlaneseq
        %v451 = vshrl.u32 %v450, 7
        %v452 = vsub.s32 0, %v451
        %v453 = vrot.slane %v433, %v452
        %v459 = vsel %vm385, %v413, 0
        %461 = vmatprep.subr.mxu0 0.0
        %462 = vmatpush1.msra.mxu0 %v414
        %463 = vmatprep.subr.mxu0 0.0
        %464 = vmatpush1.msra.mxu0 %v415
        %465 = vmatprep.subr.mxu0 0.0
        %466 = vmatpush1.msra.mxu0 %v416
        %467 = vmatprep.subr.mxu0 0.0
        %468 = vmatpush1.msra.mxu0 %v417
        %469 = vmatprep.subr.mxu0 0.0
        %470 = vmatpush1.msra.mxu0 0.0
        %471 = vmatprep.subr.mxu0 0.0
        %472 = vmatpush1.msra.mxu0 0.0
        %473 = vmatprep.subr.mxu0 0.0
        %474 = vmatpush1.msra.mxu0 0.0
        %475 = vmatprep.subr.mxu0 0.0
        %476 = vmatpush1.msra.mxu0 0.0
        %477 = vmatprep.subr.mxu0 0.0
        %478 = vmatpush1.msra.mxu0 0.0
        %479 = vmatprep.subr.mxu0 0.0
        %480 = vmatpush1.msra.mxu0 0.0
        %481 = vmatprep.subr.mxu0 0.0
        %482 = vmatpush1.msra.mxu0 0.0
        %483 = vmatprep.subr.mxu0 0.0
        %484 = vmatpush1.msra.mxu0 0.0
        %485 = vmatprep.subr.mxu0 0.0
        %486 = vmatpush1.msra.mxu0 0.0
        %487 = vmatprep.subr.mxu0 0.0
        %488 = vmatpush1.msra.mxu0 0.0
        %489 = vmatprep.subr.mxu0 0.0
        %490 = vmatpush1.msra.mxu0 0.0
        %491 = vmatprep.subr.mxu0 0.0
        %492 = vmatpush1.msra.mxu0 0.0
        %493 = vmatprep.subr.mxu0 0.0
        %494 = vmatpush1.msra.mxu0 0.0
        %495 = vmatprep.subr.mxu0 0.0
        %496 = vmatpush1.msra.mxu0 0.0
        %497 = vmatprep.subr.mxu0 0.0
        %498 = vmatpush1.msra.mxu0 0.0
        %499 = vmatprep.subr.mxu0 0.0
        %500 = vmatpush1.msra.mxu0 0.0
        %501 = vmatprep.subr.mxu0 0.0
        %502 = vmatpush1.msra.mxu0 0.0
        %503 = vmatprep.subr.mxu0 0.0
        %504 = vmatpush1.msra.mxu0 0.0
        %505 = vmatprep.subr.mxu0 0.0
        %506 = vmatpush1.msra.mxu0 0.0
        %507 = vmatprep.subr.mxu0 0.0
        %508 = vmatpush1.msra.mxu0 0.0
        %509 = vmatprep.subr.mxu0 0.0
        %510 = vmatpush1.msra.mxu0 0.0
        %511 = vmatprep.subr.mxu0 0.0
        %512 = vmatpush1.msra.mxu0 0.0
        %513 = vmatprep.subr.mxu0 0.0
        %514 = vmatpush1.msra.mxu0 0.0
        %515 = vmatprep.subr.mxu0 0.0
        %516 = vmatpush1.msra.mxu0 0.0
        %517 = vmatprep.subr.mxu0 0.0
        %518 = vmatpush1.msra.mxu0 0.0
        %519 = vmatprep.subr.mxu0 0.0
        %520 = vmatpush1.msra.mxu0 0.0
        %521 = vmatprep.subr.mxu0 0.0
        %522 = vmatpush1.msra.mxu0 0.0
        %523 = vmatprep.subr.mxu0 0.0
        %524 = vmatpush1.msra.mxu0 0.0
        %525 = vmatprep.mubr.f32.mxu0 0.0
        %526 = vmatmul.mubr.f32.gmra.mrb[0].mxu0 %v459
        %v527 = vpop.f32.mrb[0].mxu0
        %v528 = vadd.f32 %v441, %v527
        %v529 = vpop.f32.mrb[0].mxu0
        %530 = vdwg.mxu0
        %531 = vmatprep.subr.mxu0 0.0
        %532 = vmatpush1.msra.mxu0 %v418
        %533 = vmatprep.subr.mxu0 0.0
        %534 = vmatpush1.msra.mxu0 %v419
        %535 = vmatprep.subr.mxu0 0.0
        %536 = vmatpush1.msra.mxu0 %v420
        %537 = vmatprep.subr.mxu0 0.0
        %538 = vmatpush1.msra.mxu0 %v421
        %539 = vmatprep.subr.mxu0 0.0
        %540 = vmatpush1.msra.mxu0 0.0
        %541 = vmatprep.subr.mxu0 0.0
        %542 = vmatpush1.msra.mxu0 0.0
        %543 = vmatprep.subr.mxu0 0.0
        %544 = vmatpush1.msra.mxu0 0.0
        %545 = vmatprep.subr.mxu0 0.0
        %546 = vmatpush1.msra.mxu0 0.0
        %547 = vmatprep.subr.mxu0 0.0
        %548 = vmatpush1.msra.mxu0 0.0
        %549 = vmatprep.subr.mxu0 0.0
        %550 = vmatpush1.msra.mxu0 0.0
        %551 = vmatprep.subr.mxu0 0.0
        %552 = vmatpush1.msra.mxu0 0.0
        %553 = vmatprep.subr.mxu0 0.0
        %554 = vmatpush1.msra.mxu0 0.0
        %555 = vmatprep.subr.mxu0 0.0
        %556 = vmatpush1.msra.mxu0 0.0
        %557 = vmatprep.subr.mxu0 0.0
        %558 = vmatpush1.msra.mxu0 0.0
        %559 = vmatprep.subr.mxu0 0.0
        %560 = vmatpush1.msra.mxu0 0.0
        %561 = vmatprep.subr.mxu0 0.0
        %562 = vmatpush1.msra.mxu0 0.0
        %563 = vmatprep.subr.mxu0 0.0
        %564 = vmatpush1.msra.mxu0 0.0
        %565 = vmatprep.subr.mxu0 0.0
        %566 = vmatpush1.msra.mxu0 0.0
        %567 = vmatprep.subr.mxu0 0.0
        %568 = vmatpush1.msra.mxu0 0.0
        %569 = vmatprep.subr.mxu0 0.0
        %570 = vmatpush1.msra.mxu0 0.0
        %571 = vmatprep.subr.mxu0 0.0
        %572 = vmatpush1.msra.mxu0 0.0
        %573 = vmatprep.subr.mxu0 0.0
        %574 = vmatpush1.msra.mxu0 0.0
        %575 = vmatprep.subr.mxu0 0.0
        %576 = vmatpush1.msra.mxu0 0.0
        %577 = vmatprep.subr.mxu0 0.0
        %578 = vmatpush1.msra.mxu0 0.0
        %579 = vmatprep.subr.mxu0 0.0
        %580 = vmatpush1.msra.mxu0 0.0
        %581 = vmatprep.subr.mxu0 0.0
        %582 = vmatpush1.msra.mxu0 0.0
        %583 = vmatprep.subr.mxu0 0.0
        %584 = vmatpush1.msra.mxu0 0.0
        %585 = vmatprep.subr.mxu0 0.0
        %586 = vmatpush1.msra.mxu0 0.0
        %587 = vmatprep.subr.mxu0 0.0
        %588 = vmatpush1.msra.mxu0 0.0
        %589 = vmatprep.subr.mxu0 0.0
        %590 = vmatpush1.msra.mxu0 0.0
        %591 = vmatprep.subr.mxu0 0.0
        %592 = vmatpush1.msra.mxu0 0.0
        %593 = vmatprep.subr.mxu0 0.0
        %594 = vmatpush1.msra.mxu0 0.0
        %595 = vmatprep.mubr.f32.mxu0 0.0
        %596 = vmatmul.mubr.f32.gmra.mrb[0].mxu0 %v459
        %v597 = vpop.f32.mrb[0].mxu0
        %v598 = vadd.f32 %v445, %v597
        %v599 = vpop.f32.mrb[0].mxu0
        %600 = vdwg.mxu0
        %601 = vmatprep.subr.mxu0 0.0
        %602 = vmatpush1.msra.mxu0 %v422
        %603 = vmatprep.subr.mxu0 0.0
        %604 = vmatpush1.msra.mxu0 %v423
        %605 = vmatprep.subr.mxu0 0.0
        %606 = vmatpush1.msra.mxu0 %v424
        %607 = vmatprep.subr.mxu0 0.0
        %608 = vmatpush1.msra.mxu0 %v425
        %609 = vmatprep.subr.mxu0 0.0
        %610 = vmatpush1.msra.mxu0 0.0
        %611 = vmatprep.subr.mxu0 0.0
        %612 = vmatpush1.msra.mxu0 0.0
        %613 = vmatprep.subr.mxu0 0.0
        %614 = vmatpush1.msra.mxu0 0.0
        %615 = vmatprep.subr.mxu0 0.0
        %616 = vmatpush1.msra.mxu0 0.0
        %617 = vmatprep.subr.mxu0 0.0
        %618 = vmatpush1.msra.mxu0 0.0
        %619 = vmatprep.subr.mxu0 0.0
        %620 = vmatpush1.msra.mxu0 0.0
        %621 = vmatprep.subr.mxu0 0.0
        %622 = vmatpush1.msra.mxu0 0.0
        %623 = vmatprep.subr.mxu0 0.0
        %624 = vmatpush1.msra.mxu0 0.0
        %625 = vmatprep.subr.mxu0 0.0
        %626 = vmatpush1.msra.mxu0 0.0
        %627 = vmatprep.subr.mxu0 0.0
        %628 = vmatpush1.msra.mxu0 0.0
        %629 = vmatprep.subr.mxu0 0.0
        %630 = vmatpush1.msra.mxu0 0.0
        %631 = vmatprep.subr.mxu0 0.0
        %632 = vmatpush1.msra.mxu0 0.0
        %633 = vmatprep.subr.mxu0 0.0
        %634 = vmatpush1.msra.mxu0 0.0
        %635 = vmatprep.subr.mxu0 0.0
        %636 = vmatpush1.msra.mxu0 0.0
        %637 = vmatprep.subr.mxu0 0.0
        %638 = vmatpush1.msra.mxu0 0.0
        %639 = vmatprep.subr.mxu0 0.0
        %640 = vmatpush1.msra.mxu0 0.0
        %641 = vmatprep.subr.mxu0 0.0
        %642 = vmatpush1.msra.mxu0 0.0
        %643 = vmatprep.subr.mxu0 0.0
        %644 = vmatpush1.msra.mxu0 0.0
        %645 = vmatprep.subr.mxu0 0.0
        %646 = vmatpush1.msra.mxu0 0.0
        %647 = vmatprep.subr.mxu0 0.0
        %648 = vmatpush1.msra.mxu0 0.0
        %649 = vmatprep.subr.mxu0 0.0
        %650 = vmatpush1.msra.mxu0 0.0
        %651 = vmatprep.subr.mxu0 0.0
        %652 = vmatpush1.msra.mxu0 0.0
        %653 = vmatprep.subr.mxu0 0.0
        %654 = vmatpush1.msra.mxu0 0.0
        %655 = vmatprep.subr.mxu0 0.0
        %656 = vmatpush1.msra.mxu0 0.0
        %657 = vmatprep.subr.mxu0 0.0
        %658 = vmatpush1.msra.mxu0 0.0
        %659 = vmatprep.subr.mxu0 0.0
        %660 = vmatpush1.msra.mxu0 0.0
        %661 = vmatprep.subr.mxu0 0.0
        %662 = vmatpush1.msra.mxu0 0.0
        %663 = vmatprep.subr.mxu0 0.0
        %664 = vmatpush1.msra.mxu0 0.0
        %665 = vmatprep.mubr.f32.mxu0 0.0
        %666 = vmatmul.mubr.f32.gmra.mrb[0].mxu0 %v459
        %v667 = vpop.f32.mrb[0].mxu0
        %v668 = vadd.f32 %v449, %v667
        %v669 = vpop.f32.mrb[0].mxu0
        %670 = vdwg.mxu0
        %671 = vmatprep.subr.mxu0 0.0
        %672 = vmatpush1.msra.mxu0 %v426
        %673 = vmatprep.subr.mxu0 0.0
        %674 = vmatpush1.msra.mxu0 %v427
        %675 = vmatprep.subr.mxu0 0.0
        %676 = vmatpush1.msra.mxu0 %v428
        %677 = vmatprep.subr.mxu0 0.0
        %678 = vmatpush1.msra.mxu0 %v429
        %679 = vmatprep.subr.mxu0 0.0
        %680 = vmatpush1.msra.mxu0 0.0
        %681 = vmatprep.subr.mxu0 0.0
        %682 = vmatpush1.msra.mxu0 0.0
        %683 = vmatprep.subr.mxu0 0.0
        %684 = vmatpush1.msra.mxu0 0.0
        %685 = vmatprep.subr.mxu0 0.0
        %686 = vmatpush1.msra.mxu0 0.0
        %687 = vmatprep.subr.mxu0 0.0
        %688 = vmatpush1.msra.mxu0 0.0
        %689 = vmatprep.subr.mxu0 0.0
        %690 = vmatpush1.msra.mxu0 0.0
        %691 = vmatprep.subr.mxu0 0.0
        %692 = vmatpush1.msra.mxu0 0.0
        %693 = vmatprep.subr.mxu0 0.0
        %694 = vmatpush1.msra.mxu0 0.0
        %695 = vmatprep.subr.mxu0 0.0
        %696 = vmatpush1.msra.mxu0 0.0
        %697 = vmatprep.subr.mxu0 0.0
        %698 = vmatpush1.msra.mxu0 0.0
        %699 = vmatprep.subr.mxu0 0.0
        %700 = vmatpush1.msra.mxu0 0.0
        %701 = vmatprep.subr.mxu0 0.0
        %702 = vmatpush1.msra.mxu0 0.0
        %703 = vmatprep.subr.mxu0 0.0
        %704 = vmatpush1.msra.mxu0 0.0
        %705 = vmatprep.subr.mxu0 0.0
        %706 = vmatpush1.msra.mxu0 0.0
        %707 = vmatprep.subr.mxu0 0.0
        %708 = vmatpush1.msra.mxu0 0.0
        %709 = vmatprep.subr.mxu0 0.0
        %710 = vmatpush1.msra.mxu0 0.0
        %711 = vmatprep.subr.mxu0 0.0
        %712 = vmatpush1.msra.mxu0 0.0
        %713 = vmatprep.subr.mxu0 0.0
        %714 = vmatpush1.msra.mxu0 0.0
        %715 = vmatprep.subr.mxu0 0.0
        %716 = vmatpush1.msra.mxu0 0.0
        %717 = vmatprep.subr.mxu0 0.0
        %718 = vmatpush1.msra.mxu0 0.0
        %719 = vmatprep.subr.mxu0 0.0
        %720 = vmatpush1.msra.mxu0 0.0
        %721 = vmatprep.subr.mxu0 0.0
        %722 = vmatpush1.msra.mxu0 0.0
        %723 = vmatprep.subr.mxu0 0.0
        %724 = vmatpush1.msra.mxu0 0.0
        %725 = vmatprep.subr.mxu0 0.0
        %726 = vmatpush1.msra.mxu0 0.0
        %727 = vmatprep.subr.mxu0 0.0
        %728 = vmatpush1.msra.mxu0 0.0
        %729 = vmatprep.subr.mxu0 0.0
        %730 = vmatpush1.msra.mxu0 0.0
        %731 = vmatprep.subr.mxu0 0.0
        %732 = vmatpush1.msra.mxu0 0.0
        %733 = vmatprep.subr.mxu0 0.0
        %734 = vmatpush1.msra.mxu0 0.0
        %735 = vmatprep.mubr.f32.mxu0 0.0
        %736 = vmatmul.mubr.f32.gmra.mrb[0].mxu0 %v459
        %v737 = vpop.f32.mrb[0].mxu0
        %v738 = vadd.f32 %v453, %v737
        %v739 = vpop.f32.mrb[0].mxu0
        %740 = vdwg.mxu0
        %742 = vrot.lane.b32.xlu0 %v528, 120
        %v743 = vpop.permute.xlu0 %742
        %vm744 = vcmask 64512
        %v745 = vsel %vm744, %v528, 0
        %v747 = vsel %vm744, %v743, 0
        %749 = vmatprep.subr.mxu0 0.0
        %750 = vmatpush1.xpose.msra.mxu0 %v747
        %751 = vmatprep.subr.mxu0 0.0
        %752 = vmatpush1.xpose.msra.mxu0 0.0
        %753 = vmatprep.subr.mxu0 0.0
        %754 = vmatpush1.xpose.msra.mxu0 0.0
        %755 = vmatprep.subr.mxu0 0.0
        %756 = vmatpush1.xpose.msra.mxu0 0.0
        %757 = vmatprep.subr.mxu0 0.0
        %758 = vmatpush1.xpose.msra.mxu0 0.0
        %759 = vmatprep.subr.mxu0 0.0
        %760 = vmatpush1.xpose.msra.mxu0 0.0
        %761 = vmatprep.subr.mxu0 0.0
        %762 = vmatpush1.xpose.msra.mxu0 0.0
        %763 = vmatprep.subr.mxu0 0.0
        %764 = vmatpush1.xpose.msra.mxu0 0.0
        %765 = vmatprep.subr.mxu0 0.0
        %766 = vmatpush1.xpose.msra.mxu0 0.0
        %767 = vmatprep.subr.mxu0 0.0
        %768 = vmatpush1.xpose.msra.mxu0 0.0
        %769 = vmatprep.subr.mxu0 0.0
        %770 = vmatpush1.xpose.msra.mxu0 0.0
        %771 = vmatprep.subr.mxu0 0.0
        %772 = vmatpush1.xpose.msra.mxu0 0.0
        %773 = vmatprep.subr.mxu0 0.0
        %774 = vmatpush1.xpose.msra.mxu0 0.0
        %775 = vmatprep.subr.mxu0 0.0
        %776 = vmatpush1.xpose.msra.mxu0 0.0
        %777 = vmatprep.subr.mxu0 0.0
        %778 = vmatpush1.xpose.msra.mxu0 0.0
        %779 = vmatprep.subr.mxu0 0.0
        %780 = vmatpush1.xpose.msra.mxu0 0.0
        %781 = vmatprep.subr.mxu0 0.0
        %782 = vmatpush1.xpose.msra.mxu0 0.0
        %783 = vmatprep.subr.mxu0 0.0
        %784 = vmatpush1.xpose.msra.mxu0 0.0
        %785 = vmatprep.subr.mxu0 0.0
        %786 = vmatpush1.xpose.msra.mxu0 0.0
        %787 = vmatprep.subr.mxu0 0.0
        %788 = vmatpush1.xpose.msra.mxu0 0.0
        %789 = vmatprep.subr.mxu0 0.0
        %790 = vmatpush1.xpose.msra.mxu0 0.0
        %791 = vmatprep.subr.mxu0 0.0
        %792 = vmatpush1.xpose.msra.mxu0 0.0
        %793 = vmatprep.subr.mxu0 0.0
        %794 = vmatpush1.xpose.msra.mxu0 0.0
        %795 = vmatprep.subr.mxu0 0.0
        %796 = vmatpush1.xpose.msra.mxu0 0.0
        %797 = vmatprep.subr.mxu0 0.0
        %798 = vmatpush1.xpose.msra.mxu0 0.0
        %799 = vmatprep.subr.mxu0 0.0
        %800 = vmatpush1.xpose.msra.mxu0 0.0
        %801 = vmatprep.subr.mxu0 0.0
        %802 = vmatpush1.xpose.msra.mxu0 0.0
        %803 = vmatprep.subr.mxu0 0.0
        %804 = vmatpush1.xpose.msra.mxu0 0.0
        %805 = vmatprep.subr.mxu0 0.0
        %806 = vmatpush1.xpose.msra.mxu0 0.0
        %807 = vmatprep.subr.mxu0 0.0
        %808 = vmatpush1.xpose.msra.mxu0 0.0
        %809 = vmatprep.subr.mxu0 0.0
        %810 = vmatpush1.xpose.msra.mxu0 0.0
        %811 = vmatprep.subr.mxu0 0.0
        %812 = vmatpush1.xpose.msra.mxu0 0.0
        %813 = vmatprep.mubr.f32.mxu0 0.0
        %814 = vmatmul.mubr.f32.gmra.mrb[0].mxu0 %v745
        %v815 = vpop.f32.mrb[0].mxu0
        %v816 = vadd.f32 0.0, %v815
        %v817 = vpop.f32.mrb[0].mxu0
        %818 = vdwg.mxu0
        %820 = vrot.lane.b32.xlu0 %v598, 120
        %v821 = vpop.permute.xlu0 %820
        %v822 = vsel %vm744, %v598, 0
        %v824 = vsel %vm744, %v821, 0
        %826 = vmatprep.subr.mxu0 0.0
        %827 = vmatpush1.xpose.msra.mxu0 %v824
        %828 = vmatprep.subr.mxu0 0.0
        %829 = vmatpush1.xpose.msra.mxu0 0.0
        %830 = vmatprep.subr.mxu0 0.0
        %831 = vmatpush1.xpose.msra.mxu0 0.0
        %832 = vmatprep.subr.mxu0 0.0
        %833 = vmatpush1.xpose.msra.mxu0 0.0
        %834 = vmatprep.subr.mxu0 0.0
        %835 = vmatpush1.xpose.msra.mxu0 0.0
        %836 = vmatprep.subr.mxu0 0.0
        %837 = vmatpush1.xpose.msra.mxu0 0.0
        %838 = vmatprep.subr.mxu0 0.0
        %839 = vmatpush1.xpose.msra.mxu0 0.0
        %840 = vmatprep.subr.mxu0 0.0
        %841 = vmatpush1.xpose.msra.mxu0 0.0
        %842 = vmatprep.subr.mxu0 0.0
        %843 = vmatpush1.xpose.msra.mxu0 0.0
        %844 = vmatprep.subr.mxu0 0.0
        %845 = vmatpush1.xpose.msra.mxu0 0.0
        %846 = vmatprep.subr.mxu0 0.0
        %847 = vmatpush1.xpose.msra.mxu0 0.0
        %848 = vmatprep.subr.mxu0 0.0
        %849 = vmatpush1.xpose.msra.mxu0 0.0
        %850 = vmatprep.subr.mxu0 0.0
        %851 = vmatpush1.xpose.msra.mxu0 0.0
        %852 = vmatprep.subr.mxu0 0.0
        %853 = vmatpush1.xpose.msra.mxu0 0.0
        %854 = vmatprep.subr.mxu0 0.0
        %855 = vmatpush1.xpose.msra.mxu0 0.0
        %856 = vmatprep.subr.mxu0 0.0
        %857 = vmatpush1.xpose.msra.mxu0 0.0
        %858 = vmatprep.subr.mxu0 0.0
        %859 = vmatpush1.xpose.msra.mxu0 0.0
        %860 = vmatprep.subr.mxu0 0.0
        %861 = vmatpush1.xpose.msra.mxu0 0.0
        %862 = vmatprep.subr.mxu0 0.0
        %863 = vmatpush1.xpose.msra.mxu0 0.0
        %864 = vmatprep.subr.mxu0 0.0
        %865 = vmatpush1.xpose.msra.mxu0 0.0
        %866 = vmatprep.subr.mxu0 0.0
        %867 = vmatpush1.xpose.msra.mxu0 0.0
        %868 = vmatprep.subr.mxu0 0.0
        %869 = vmatpush1.xpose.msra.mxu0 0.0
        %870 = vmatprep.subr.mxu0 0.0
        %871 = vmatpush1.xpose.msra.mxu0 0.0
        %872 = vmatprep.subr.mxu0 0.0
        %873 = vmatpush1.xpose.msra.mxu0 0.0
        %874 = vmatprep.subr.mxu0 0.0
        %875 = vmatpush1.xpose.msra.mxu0 0.0
        %876 = vmatprep.subr.mxu0 0.0
        %877 = vmatpush1.xpose.msra.mxu0 0.0
        %878 = vmatprep.subr.mxu0 0.0
        %879 = vmatpush1.xpose.msra.mxu0 0.0
        %880 = vmatprep.subr.mxu0 0.0
        %881 = vmatpush1.xpose.msra.mxu0 0.0
        %882 = vmatprep.subr.mxu0 0.0
        %883 = vmatpush1.xpose.msra.mxu0 0.0
        %884 = vmatprep.subr.mxu0 0.0
        %885 = vmatpush1.xpose.msra.mxu0 0.0
        %886 = vmatprep.subr.mxu0 0.0
        %887 = vmatpush1.xpose.msra.mxu0 0.0
        %888 = vmatprep.subr.mxu0 0.0
        %889 = vmatpush1.xpose.msra.mxu0 0.0
        %890 = vmatprep.mubr.f32.mxu0 0.0
        %891 = vmatmul.mubr.f32.gmra.mrb[0].mxu0 %v822
        %v892 = vpop.f32.mrb[0].mxu0
        %v893 = vadd.f32 0.0, %v892
        %v894 = vpop.f32.mrb[0].mxu0
        %895 = vdwg.mxu0
        %897 = vrot.lane.b32.xlu0 %v668, 120
        %v898 = vpop.permute.xlu0 %897
        %v899 = vsel %vm744, %v668, 0
        %v901 = vsel %vm744, %v898, 0
        %903 = vmatprep.subr.mxu0 0.0
        %904 = vmatpush1.xpose.msra.mxu0 %v901
        %905 = vmatprep.subr.mxu0 0.0
        %906 = vmatpush1.xpose.msra.mxu0 0.0
        %907 = vmatprep.subr.mxu0 0.0
        %908 = vmatpush1.xpose.msra.mxu0 0.0
        %909 = vmatprep.subr.mxu0 0.0
        %910 = vmatpush1.xpose.msra.mxu0 0.0
        %911 = vmatprep.subr.mxu0 0.0
        %912 = vmatpush1.xpose.msra.mxu0 0.0
        %913 = vmatprep.subr.mxu0 0.0
        %914 = vmatpush1.xpose.msra.mxu0 0.0
        %915 = vmatprep.subr.mxu0 0.0
        %916 = vmatpush1.xpose.msra.mxu0 0.0
        %917 = vmatprep.subr.mxu0 0.0
        %918 = vmatpush1.xpose.msra.mxu0 0.0
        %919 = vmatprep.subr.mxu0 0.0
        %920 = vmatpush1.xpose.msra.mxu0 0.0
        %921 = vmatprep.subr.mxu0 0.0
        %922 = vmatpush1.xpose.msra.mxu0 0.0
        %923 = vmatprep.subr.mxu0 0.0
        %924 = vmatpush1.xpose.msra.mxu0 0.0
        %925 = vmatprep.subr.mxu0 0.0
        %926 = vmatpush1.xpose.msra.mxu0 0.0
        %927 = vmatprep.subr.mxu0 0.0
        %928 = vmatpush1.xpose.msra.mxu0 0.0
        %929 = vmatprep.subr.mxu0 0.0
        %930 = vmatpush1.xpose.msra.mxu0 0.0
        %931 = vmatprep.subr.mxu0 0.0
        %932 = vmatpush1.xpose.msra.mxu0 0.0
        %933 = vmatprep.subr.mxu0 0.0
        %934 = vmatpush1.xpose.msra.mxu0 0.0
        %935 = vmatprep.subr.mxu0 0.0
        %936 = vmatpush1.xpose.msra.mxu0 0.0
        %937 = vmatprep.subr.mxu0 0.0
        %938 = vmatpush1.xpose.msra.mxu0 0.0
        %939 = vmatprep.subr.mxu0 0.0
        %940 = vmatpush1.xpose.msra.mxu0 0.0
        %941 = vmatprep.subr.mxu0 0.0
        %942 = vmatpush1.xpose.msra.mxu0 0.0
        %943 = vmatprep.subr.mxu0 0.0
        %944 = vmatpush1.xpose.msra.mxu0 0.0
        %945 = vmatprep.subr.mxu0 0.0
        %946 = vmatpush1.xpose.msra.mxu0 0.0
        %947 = vmatprep.subr.mxu0 0.0
        %948 = vmatpush1.xpose.msra.mxu0 0.0
        %949 = vmatprep.subr.mxu0 0.0
        %950 = vmatpush1.xpose.msra.mxu0 0.0
        %951 = vmatprep.subr.mxu0 0.0
        %952 = vmatpush1.xpose.msra.mxu0 0.0
        %953 = vmatprep.subr.mxu0 0.0
        %954 = vmatpush1.xpose.msra.mxu0 0.0
        %955 = vmatprep.subr.mxu0 0.0
        %956 = vmatpush1.xpose.msra.mxu0 0.0
        %957 = vmatprep.subr.mxu0 0.0
        %958 = vmatpush1.xpose.msra.mxu0 0.0
        %959 = vmatprep.subr.mxu0 0.0
        %960 = vmatpush1.xpose.msra.mxu0 0.0
        %961 = vmatprep.subr.mxu0 0.0
        %962 = vmatpush1.xpose.msra.mxu0 0.0
        %963 = vmatprep.subr.mxu0 0.0
        %964 = vmatpush1.xpose.msra.mxu0 0.0
        %965 = vmatprep.subr.mxu0 0.0
        %966 = vmatpush1.xpose.msra.mxu0 0.0
        %967 = vmatprep.mubr.f32.mxu0 0.0
        %968 = vmatmul.mubr.f32.gmra.mrb[0].mxu0 %v899
        %v969 = vpop.f32.mrb[0].mxu0
        %v970 = vadd.f32 0.0, %v969
        %v971 = vpop.f32.mrb[0].mxu0
        %972 = vdwg.mxu0
        %974 = vrot.lane.b32.xlu0 %v738, 120
        %v975 = vpop.permute.xlu0 %974
        %v976 = vsel %vm744, %v738, 0
        %v978 = vsel %vm744, %v975, 0
        %980 = vmatprep.subr.mxu0 0.0
        %981 = vmatpush1.xpose.msra.mxu0 %v978
        %982 = vmatprep.subr.mxu0 0.0
        %983 = vmatpush1.xpose.msra.mxu0 0.0
        %984 = vmatprep.subr.mxu0 0.0
        %985 = vmatpush1.xpose.msra.mxu0 0.0
        %986 = vmatprep.subr.mxu0 0.0
        %987 = vmatpush1.xpose.msra.mxu0 0.0
        %988 = vmatprep.subr.mxu0 0.0
        %989 = vmatpush1.xpose.msra.mxu0 0.0
        %990 = vmatprep.subr.mxu0 0.0
        %991 = vmatpush1.xpose.msra.mxu0 0.0
        %992 = vmatprep.subr.mxu0 0.0
        %993 = vmatpush1.xpose.msra.mxu0 0.0
        %994 = vmatprep.subr.mxu0 0.0
        %995 = vmatpush1.xpose.msra.mxu0 0.0
        %996 = vmatprep.subr.mxu0 0.0
        %997 = vmatpush1.xpose.msra.mxu0 0.0
        %998 = vmatprep.subr.mxu0 0.0
        %999 = vmatpush1.xpose.msra.mxu0 0.0
        %1000 = vmatprep.subr.mxu0 0.0
        %1001 = vmatpush1.xpose.msra.mxu0 0.0
        %1002 = vmatprep.subr.mxu0 0.0
        %1003 = vmatpush1.xpose.msra.mxu0 0.0
        %1004 = vmatprep.subr.mxu0 0.0
        %1005 = vmatpush1.xpose.msra.mxu0 0.0
        %1006 = vmatprep.subr.mxu0 0.0
        %1007 = vmatpush1.xpose.msra.mxu0 0.0
        %1008 = vmatprep.subr.mxu0 0.0
        %1009 = vmatpush1.xpose.msra.mxu0 0.0
        %1010 = vmatprep.subr.mxu0 0.0
        %1011 = vmatpush1.xpose.msra.mxu0 0.0
        %1012 = vmatprep.subr.mxu0 0.0
        %1013 = vmatpush1.xpose.msra.mxu0 0.0
        %1014 = vmatprep.subr.mxu0 0.0
        %1015 = vmatpush1.xpose.msra.mxu0 0.0
        %1016 = vmatprep.subr.mxu0 0.0
        %1017 = vmatpush1.xpose.msra.mxu0 0.0
        %1018 = vmatprep.subr.mxu0 0.0
        %1019 = vmatpush1.xpose.msra.mxu0 0.0
        %1020 = vmatprep.subr.mxu0 0.0
        %1021 = vmatpush1.xpose.msra.mxu0 0.0
        %1022 = vmatprep.subr.mxu0 0.0
        %1023 = vmatpush1.xpose.msra.mxu0 0.0
        %1024 = vmatprep.subr.mxu0 0.0
        %1025 = vmatpush1.xpose.msra.mxu0 0.0
        %1026 = vmatprep.subr.mxu0 0.0
        %1027 = vmatpush1.xpose.msra.mxu0 0.0
        %1028 = vmatprep.subr.mxu0 0.0
        %1029 = vmatpush1.xpose.msra.mxu0 0.0
        %1030 = vmatprep.subr.mxu0 0.0
        %1031 = vmatpush1.xpose.msra.mxu0 0.0
        %1032 = vmatprep.subr.mxu0 0.0
        %1033 = vmatpush1.xpose.msra.mxu0 0.0
        %1034 = vmatprep.subr.mxu0 0.0
        %1035 = vmatpush1.xpose.msra.mxu0 0.0
        %1036 = vmatprep.subr.mxu0 0.0
        %1037 = vmatpush1.xpose.msra.mxu0 0.0
        %1038 = vmatprep.subr.mxu0 0.0
        %1039 = vmatpush1.xpose.msra.mxu0 0.0
        %1040 = vmatprep.subr.mxu0 0.0
        %1041 = vmatpush1.xpose.msra.mxu0 0.0
        %1042 = vmatprep.subr.mxu0 0.0
        %1043 = vmatpush1.xpose.msra.mxu0 0.0
        %1044 = vmatprep.mubr.f32.mxu0 0.0
        %1045 = vmatmul.mubr.f32.gmra.mrb[0].mxu0 %v976
        %v1046 = vpop.f32.mrb[0].mxu0
        %v1047 = vadd.f32 0.0, %v1046
        %v1048 = vpop.f32.mrb[0].mxu0
        %1049 = vdwg.mxu0
        %v1050 = vmul.f32 %v816, 0.35355338
        %v1051 = vmul.f32 %v893, 0.35355338
        %v1052 = vmul.f32 %v970, 0.35355338
        %v1053 = vmul.f32 %v1047, 0.35355338
        %v1054 = vsel %vm744, %v1050, -inf
        %1055 = vmax.xlane.f32.xlu0 %v1054
        %v1056 = vpop.xlane.xlu0 %1055
        %v1057 = vsel %vm744, %v1051, -inf
        %1058 = vmax.xlane.f32.xlu0 %v1057
        %v1059 = vpop.xlane.xlu0 %1058
        %v1060 = vsel %vm744, %v1052, -inf
        %1061 = vmax.xlane.f32.xlu0 %v1060
        %v1062 = vpop.xlane.xlu0 %1061
        %v1063 = vsel %vm744, %v1053, -inf
        %1064 = vmax.xlane.f32.xlu0 %v1063
        %v1065 = vpop.xlane.xlu0 %1064
        %v1066 = vsub.f32 %v1050, %v1056
        %v1067 = vsub.f32 %v1051, %v1059
        %v1068 = vsub.f32 %v1052, %v1062
        %v1069 = vsub.f32 %v1053, %v1065
        %v1070 = vmul.f32 %v1066, 1.442695
        %v1071 = vpow.pop %v1070
        %v1072 = vmul.f32 %v1067, 1.442695
        %v1073 = vpow.pop %v1072
        %v1074 = vmul.f32 %v1068, 1.442695
        %v1075 = vpow.pop %v1074
        %v1076 = vmul.f32 %v1069, 1.442695
        %v1077 = vpow.pop %v1076
        %v1078 = vsel %vm744, %v1071, 0.0
        %1079 = vadd.xlane.f32.xlu0 %v1078
        %v1080 = vpop.xlane.xlu0 %1079
        %v1081 = vsel %vm744, %v1073, 0.0
        %1082 = vadd.xlane.f32.xlu0 %v1081
        %v1083 = vpop.xlane.xlu0 %1082
        %v1084 = vsel %vm744, %v1075, 0.0
        %1085 = vadd.xlane.f32.xlu0 %v1084
        %v1086 = vpop.xlane.xlu0 %1085
        %v1087 = vsel %vm744, %v1077, 0.0
        %1088 = vadd.xlane.f32.xlu0 %v1087
        %v1089 = vpop.xlane.xlu0 %1088
        %1090 = vrot.lane.b32.xlu0 %v528, 112
        %v1091 = vpop.permute.xlu0 %1090
        %v1094 = vsel %vm744, %v1071, 0
        %1096 = vmatprep.subr.mxu0 0.0
        %1097 = vmatpush1.msra.mxu0 %v1091
        %1098 = vmatprep.subr.mxu0 0.0
        %1099 = vmatpush1.msra.mxu0 0.0
        %1100 = vmatprep.subr.mxu0 0.0
        %1101 = vmatpush1.msra.mxu0 0.0
        %1102 = vmatprep.subr.mxu0 0.0
        %1103 = vmatpush1.msra.mxu0 0.0
        %1104 = vmatprep.subr.mxu0 0.0
        %1105 = vmatpush1.msra.mxu0 0.0
        %1106 = vmatprep.subr.mxu0 0.0
        %1107 = vmatpush1.msra.mxu0 0.0
        %1108 = vmatprep.subr.mxu0 0.0
        %1109 = vmatpush1.msra.mxu0 0.0
        %1110 = vmatprep.subr.mxu0 0.0
        %1111 = vmatpush1.msra.mxu0 0.0
        %1112 = vmatprep.subr.mxu0 0.0
        %1113 = vmatpush1.msra.mxu0 0.0
        %1114 = vmatprep.subr.mxu0 0.0
        %1115 = vmatpush1.msra.mxu0 0.0
        %1116 = vmatprep.subr.mxu0 0.0
        %1117 = vmatpush1.msra.mxu0 0.0
        %1118 = vmatprep.subr.mxu0 0.0
        %1119 = vmatpush1.msra.mxu0 0.0
        %1120 = vmatprep.subr.mxu0 0.0
        %1121 = vmatpush1.msra.mxu0 0.0
        %1122 = vmatprep.subr.mxu0 0.0
        %1123 = vmatpush1.msra.mxu0 0.0
        %1124 = vmatprep.subr.mxu0 0.0
        %1125 = vmatpush1.msra.mxu0 0.0
        %1126 = vmatprep.subr.mxu0 0.0
        %1127 = vmatpush1.msra.mxu0 0.0
        %1128 = vmatprep.subr.mxu0 0.0
        %1129 = vmatpush1.msra.mxu0 0.0
        %1130 = vmatprep.subr.mxu0 0.0
        %1131 = vmatpush1.msra.mxu0 0.0
        %1132 = vmatprep.subr.mxu0 0.0
        %1133 = vmatpush1.msra.mxu0 0.0
        %1134 = vmatprep.subr.mxu0 0.0
        %1135 = vmatpush1.msra.mxu0 0.0
        %1136 = vmatprep.subr.mxu0 0.0
        %1137 = vmatpush1.msra.mxu0 0.0
        %1138 = vmatprep.subr.mxu0 0.0
        %1139 = vmatpush1.msra.mxu0 0.0
        %1140 = vmatprep.subr.mxu0 0.0
        %1141 = vmatpush1.msra.mxu0 0.0
        %1142 = vmatprep.subr.mxu0 0.0
        %1143 = vmatpush1.msra.mxu0 0.0
        %1144 = vmatprep.subr.mxu0 0.0
        %1145 = vmatpush1.msra.mxu0 0.0
        %1146 = vmatprep.subr.mxu0 0.0
        %1147 = vmatpush1.msra.mxu0 0.0
        %1148 = vmatprep.subr.mxu0 0.0
        %1149 = vmatpush1.msra.mxu0 0.0
        %1150 = vmatprep.subr.mxu0 0.0
        %1151 = vmatpush1.msra.mxu0 0.0
        %1152 = vmatprep.subr.mxu0 0.0
        %1153 = vmatpush1.msra.mxu0 0.0
        %1154 = vmatprep.subr.mxu0 0.0
        %1155 = vmatpush1.msra.mxu0 0.0
        %1156 = vmatprep.subr.mxu0 0.0
        %1157 = vmatpush1.msra.mxu0 0.0
        %1158 = vmatprep.subr.mxu0 0.0
        %1159 = vmatpush1.msra.mxu0 0.0
        %1160 = vmatprep.mubr.f32.mxu0 0.0
        %1161 = vmatmul.mubr.f32.gmra.mrb[0].mxu0 %v1094
        %v1162 = vpop.f32.mrb[0].mxu0
        %v1163 = vadd.f32 0.0, %v1162
        %v1164 = vpop.f32.mrb[0].mxu0
        %1165 = vdwg.mxu0
        %1166 = vrot.lane.b32.xlu0 %v598, 112
        %v1167 = vpop.permute.xlu0 %1166
        %v1170 = vsel %vm744, %v1073, 0
        %1172 = vmatprep.subr.mxu0 0.0
        %1173 = vmatpush1.msra.mxu0 %v1167
        %1174 = vmatprep.subr.mxu0 0.0
        %1175 = vmatpush1.msra.mxu0 0.0
        %1176 = vmatprep.subr.mxu0 0.0
        %1177 = vmatpush1.msra.mxu0 0.0
        %1178 = vmatprep.subr.mxu0 0.0
        %1179 = vmatpush1.msra.mxu0 0.0
        %1180 = vmatprep.subr.mxu0 0.0
        %1181 = vmatpush1.msra.mxu0 0.0
        %1182 = vmatprep.subr.mxu0 0.0
        %1183 = vmatpush1.msra.mxu0 0.0
        %1184 = vmatprep.subr.mxu0 0.0
        %1185 = vmatpush1.msra.mxu0 0.0
        %1186 = vmatprep.subr.mxu0 0.0
        %1187 = vmatpush1.msra.mxu0 0.0
        %1188 = vmatprep.subr.mxu0 0.0
        %1189 = vmatpush1.msra.mxu0 0.0
        %1190 = vmatprep.subr.mxu0 0.0
        %1191 = vmatpush1.msra.mxu0 0.0
        %1192 = vmatprep.subr.mxu0 0.0
        %1193 = vmatpush1.msra.mxu0 0.0
        %1194 = vmatprep.subr.mxu0 0.0
        %1195 = vmatpush1.msra.mxu0 0.0
        %1196 = vmatprep.subr.mxu0 0.0
        %1197 = vmatpush1.msra.mxu0 0.0
        %1198 = vmatprep.subr.mxu0 0.0
        %1199 = vmatpush1.msra.mxu0 0.0
        %1200 = vmatprep.subr.mxu0 0.0
        %1201 = vmatpush1.msra.mxu0 0.0
        %1202 = vmatprep.subr.mxu0 0.0
        %1203 = vmatpush1.msra.mxu0 0.0
        %1204 = vmatprep.subr.mxu0 0.0
        %1205 = vmatpush1.msra.mxu0 0.0
        %1206 = vmatprep.subr.mxu0 0.0
        %1207 = vmatpush1.msra.mxu0 0.0
        %1208 = vmatprep.subr.mxu0 0.0
        %1209 = vmatpush1.msra.mxu0 0.0
        %1210 = vmatprep.subr.mxu0 0.0
        %1211 = vmatpush1.msra.mxu0 0.0
        %1212 = vmatprep.subr.mxu0 0.0
        %1213 = vmatpush1.msra.mxu0 0.0
        %1214 = vmatprep.subr.mxu0 0.0
        %1215 = vmatpush1.msra.mxu0 0.0
        %1216 = vmatprep.subr.mxu0 0.0
        %1217 = vmatpush1.msra.mxu0 0.0
        %1218 = vmatprep.subr.mxu0 0.0
        %1219 = vmatpush1.msra.mxu0 0.0
        %1220 = vmatprep.subr.mxu0 0.0
        %1221 = vmatpush1.msra.mxu0 0.0
        %1222 = vmatprep.subr.mxu0 0.0
        %1223 = vmatpush1.msra.mxu0 0.0
        %1224 = vmatprep.subr.mxu0 0.0
        %1225 = vmatpush1.msra.mxu0 0.0
        %1226 = vmatprep.subr.mxu0 0.0
        %1227 = vmatpush1.msra.mxu0 0.0
        %1228 = vmatprep.subr.mxu0 0.0
        %1229 = vmatpush1.msra.mxu0 0.0
        %1230 = vmatprep.subr.mxu0 0.0
        %1231 = vmatpush1.msra.mxu0 0.0
        %1232 = vmatprep.subr.mxu0 0.0
        %1233 = vmatpush1.msra.mxu0 0.0
        %1234 = vmatprep.subr.mxu0 0.0
        %1235 = vmatpush1.msra.mxu0 0.0
        %1236 = vmatprep.mubr.f32.mxu0 0.0
        %1237 = vmatmul.mubr.f32.gmra.mrb[0].mxu0 %v1170
        %v1238 = vpop.f32.mrb[0].mxu0
        %v1239 = vadd.f32 0.0, %v1238
        %v1240 = vpop.f32.mrb[0].mxu0
        %1241 = vdwg.mxu0
        %1242 = vrot.lane.b32.xlu0 %v668, 112
        %v1243 = vpop.permute.xlu0 %1242
        %v1246 = vsel %vm744, %v1075, 0
        %1248 = vmatprep.subr.mxu0 0.0
        %1249 = vmatpush1.msra.mxu0 %v1243
        %1250 = vmatprep.subr.mxu0 0.0
        %1251 = vmatpush1.msra.mxu0 0.0
        %1252 = vmatprep.subr.mxu0 0.0
        %1253 = vmatpush1.msra.mxu0 0.0
        %1254 = vmatprep.subr.mxu0 0.0
        %1255 = vmatpush1.msra.mxu0 0.0
        %1256 = vmatprep.subr.mxu0 0.0
        %1257 = vmatpush1.msra.mxu0 0.0
        %1258 = vmatprep.subr.mxu0 0.0
        %1259 = vmatpush1.msra.mxu0 0.0
        %1260 = vmatprep.subr.mxu0 0.0
        %1261 = vmatpush1.msra.mxu0 0.0
        %1262 = vmatprep.subr.mxu0 0.0
        %1263 = vmatpush1.msra.mxu0 0.0
        %1264 = vmatprep.subr.mxu0 0.0
        %1265 = vmatpush1.msra.mxu0 0.0
        %1266 = vmatprep.subr.mxu0 0.0
        %1267 = vmatpush1.msra.mxu0 0.0
        %1268 = vmatprep.subr.mxu0 0.0
        %1269 = vmatpush1.msra.mxu0 0.0
        %1270 = vmatprep.subr.mxu0 0.0
        %1271 = vmatpush1.msra.mxu0 0.0
        %1272 = vmatprep.subr.mxu0 0.0
        %1273 = vmatpush1.msra.mxu0 0.0
        %1274 = vmatprep.subr.mxu0 0.0
        %1275 = vmatpush1.msra.mxu0 0.0
        %1276 = vmatprep.subr.mxu0 0.0
        %1277 = vmatpush1.msra.mxu0 0.0
        %1278 = vmatprep.subr.mxu0 0.0
        %1279 = vmatpush1.msra.mxu0 0.0
        %1280 = vmatprep.subr.mxu0 0.0
        %1281 = vmatpush1.msra.mxu0 0.0
        %1282 = vmatprep.subr.mxu0 0.0
        %1283 = vmatpush1.msra.mxu0 0.0
        %1284 = vmatprep.subr.mxu0 0.0
        %1285 = vmatpush1.msra.mxu0 0.0
        %1286 = vmatprep.subr.mxu0 0.0
        %1287 = vmatpush1.msra.mxu0 0.0
        %1288 = vmatprep.subr.mxu0 0.0
        %1289 = vmatpush1.msra.mxu0 0.0
        %1290 = vmatprep.subr.mxu0 0.0
        %1291 = vmatpush1.msra.mxu0 0.0
        %1292 = vmatprep.subr.mxu0 0.0
        %1293 = vmatpush1.msra.mxu0 0.0
        %1294 = vmatprep.subr.mxu0 0.0
        %1295 = vmatpush1.msra.mxu0 0.0
        %1296 = vmatprep.subr.mxu0 0.0
        %1297 = vmatpush1.msra.mxu0 0.0
        %1298 = vmatprep.subr.mxu0 0.0
        %1299 = vmatpush1.msra.mxu0 0.0
        %1300 = vmatprep.subr.mxu0 0.0
        %1301 = vmatpush1.msra.mxu0 0.0
        %1302 = vmatprep.subr.mxu0 0.0
        %1303 = vmatpush1.msra.mxu0 0.0
        %1304 = vmatprep.subr.mxu0 0.0
        %1305 = vmatpush1.msra.mxu0 0.0
        %1306 = vmatprep.subr.mxu0 0.0
        %1307 = vmatpush1.msra.mxu0 0.0
        %1308 = vmatprep.subr.mxu0 0.0
        %1309 = vmatpush1.msra.mxu0 0.0
        %1310 = vmatprep.subr.mxu0 0.0
        %1311 = vmatpush1.msra.mxu0 0.0
        %1312 = vmatprep.mubr.f32.mxu0 0.0
        %1313 = vmatmul.mubr.f32.gmra.mrb[0].mxu0 %v1246
        %v1314 = vpop.f32.mrb[0].mxu0
        %v1315 = vadd.f32 0.0, %v1314
        %v1316 = vpop.f32.mrb[0].mxu0
        %1317 = vdwg.mxu0
        %1318 = vrot.lane.b32.xlu0 %v738, 112
        %v1319 = vpop.permute.xlu0 %1318
        %v1322 = vsel %vm744, %v1077, 0
        %1324 = vmatprep.subr.mxu0 0.0
        %1325 = vmatpush1.msra.mxu0 %v1319
        %1326 = vmatprep.subr.mxu0 0.0
        %1327 = vmatpush1.msra.mxu0 0.0
        %1328 = vmatprep.subr.mxu0 0.0
        %1329 = vmatpush1.msra.mxu0 0.0
        %1330 = vmatprep.subr.mxu0 0.0
        %1331 = vmatpush1.msra.mxu0 0.0
        %1332 = vmatprep.subr.mxu0 0.0
        %1333 = vmatpush1.msra.mxu0 0.0
        %1334 = vmatprep.subr.mxu0 0.0
        %1335 = vmatpush1.msra.mxu0 0.0
        %1336 = vmatprep.subr.mxu0 0.0
        %1337 = vmatpush1.msra.mxu0 0.0
        %1338 = vmatprep.subr.mxu0 0.0
        %1339 = vmatpush1.msra.mxu0 0.0
        %1340 = vmatprep.subr.mxu0 0.0
        %1341 = vmatpush1.msra.mxu0 0.0
        %1342 = vmatprep.subr.mxu0 0.0
        %1343 = vmatpush1.msra.mxu0 0.0
        %1344 = vmatprep.subr.mxu0 0.0
        %1345 = vmatpush1.msra.mxu0 0.0
        %1346 = vmatprep.subr.mxu0 0.0
        %1347 = vmatpush1.msra.mxu0 0.0
        %1348 = vmatprep.subr.mxu0 0.0
        %1349 = vmatpush1.msra.mxu0 0.0
        %1350 = vmatprep.subr.mxu0 0.0
        %1351 = vmatpush1.msra.mxu0 0.0
        %1352 = vmatprep.subr.mxu0 0.0
        %1353 = vmatpush1.msra.mxu0 0.0
        %1354 = vmatprep.subr.mxu0 0.0
        %1355 = vmatpush1.msra.mxu0 0.0
        %1356 = vmatprep.subr.mxu0 0.0
        %1357 = vmatpush1.msra.mxu0 0.0
        %1358 = vmatprep.subr.mxu0 0.0
        %1359 = vmatpush1.msra.mxu0 0.0
        %1360 = vmatprep.subr.mxu0 0.0
        %1361 = vmatpush1.msra.mxu0 0.0
        %1362 = vmatprep.subr.mxu0 0.0
        %1363 = vmatpush1.msra.mxu0 0.0
        %1364 = vmatprep.subr.mxu0 0.0
        %1365 = vmatpush1.msra.mxu0 0.0
        %1366 = vmatprep.subr.mxu0 0.0
        %1367 = vmatpush1.msra.mxu0 0.0
        %1368 = vmatprep.subr.mxu0 0.0
        %1369 = vmatpush1.msra.mxu0 0.0
        %1370 = vmatprep.subr.mxu0 0.0
        %1371 = vmatpush1.msra.mxu0 0.0
        %1372 = vmatprep.subr.mxu0 0.0
        %1373 = vmatpush1.msra.mxu0 0.0
        %1374 = vmatprep.subr.mxu0 0.0
        %1375 = vmatpush1.msra.mxu0 0.0
        %1376 = vmatprep.subr.mxu0 0.0
        %1377 = vmatpush1.msra.mxu0 0.0
        %1378 = vmatprep.subr.mxu0 0.0
        %1379 = vmatpush1.msra.mxu0 0.0
        %1380 = vmatprep.subr.mxu0 0.0
        %1381 = vmatpush1.msra.mxu0 0.0
        %1382 = vmatprep.subr.mxu0 0.0
        %1383 = vmatpush1.msra.mxu0 0.0
        %1384 = vmatprep.subr.mxu0 0.0
        %1385 = vmatpush1.msra.mxu0 0.0
        %1386 = vmatprep.subr.mxu0 0.0
        %1387 = vmatpush1.msra.mxu0 0.0
        %1388 = vmatprep.mubr.f32.mxu0 0.0
        %1389 = vmatmul.mubr.f32.gmra.mrb[0].mxu0 %v1322
        %v1390 = vpop.f32.mrb[0].mxu0
        %v1391 = vadd.f32 0.0, %v1390
        %v1392 = vpop.f32.mrb[0].mxu0
        %1393 = vdwg.mxu0
        %v1394 = vrcp.pop %v1080
        %v1395 = vrcp.pop %v1083
        %v1396 = vrcp.pop %v1086
        %v1397 = vrcp.pop %v1089
        %v1398 = vmul.f32 %v1163, %v1394
        %v1399 = vmul.f32 %v1239, %v1395
        %v1400 = vmul.f32 %v1315, %v1396
        %v1401 = vmul.f32 %v1391, %v1397
        %1402 = vst.msk [vmem:[#allocation2] sm:$0xff] %vm744, %v1398
        %1404 = vrot.lane.b32.xlu0 %v1399, 8
        %v1405 = vpop.permute.xlu0 %1404
        %vm1407 = vcmask 130112
        %1408 = vst.msk [vmem:[#allocation2] sm:$0xff] %vm1407, %v1405
        %1410 = vrot.lane.b32.xlu0 %v1400, 16
        %v1411 = vpop.permute.xlu0 %1410
        %vm1413 = vcmask 195712
        %1414 = vst.msk [vmem:[#allocation2] sm:$0xff] %vm1413, %v1411
        %1416 = vrot.lane.b32.xlu0 %v1401, 24
        %v1417 = vpop.permute.xlu0 %1416
        %vm1419 = vcmask 261312
        %1420 = vst.msk [vmem:[#allocation2] sm:$0xff] %vm1419, %v1417
        %v1421 = vld [vmem:[#allocation2] sm:$0xff]
        %v1422 = vadd.f32 %v1421, %v413
        %v1423 = vld [vmem:[%s5] sm:$0x1]
        %v1424 = vld [vmem:[%s6] sm:$0x1]
        %v1425 = vsel %vm385, %v1422, 0.0
        %1426 = vadd.xlane.f32.xlu0 %v1425
        %v1427 = vpop.xlane.xlu0 %1426
        %v1428 = vmul.f32 %v1427, %v389
        %v1429 = vsub.f32 %v1422, %v1428
        %v1430 = vmul.f32 %v1429, %v1429
        %v1431 = vsel %vm385, %v1430, 0.0
        %1432 = vadd.xlane.f32.xlu0 %v1431
        %v1433 = vpop.xlane.xlu0 %1432
        %v1434 = vmul.f32 %v1433, %v389
        %v1435 = vadd.f32 %v1434, 1e-05
        %v1436 = vrsqrt.pop %v1435
        %v1437 = vmul.f32 %v1429, %v1436
        %v1439 = vlaneseq
        %v1440 = vshrl.u32 %v1439, 7
        %v1441 = vsub.s32 0, %v1440
        %v1442 = vrot.slane %v1423, %v1441
        %v1444 = vmul.f32 %v1437, %v1442
        %v1446 = vlaneseq
        %v1447 = vshrl.u32 %v1446, 7
        %v1448 = vsub.s32 0, %v1447
        %v1449 = vrot.slane %v1424, %v1448
        %v1451 = vadd.f32 %v1444, %v1449
        %v1452 = vld [vmem:[%s7] sm:$0xff]
        %v1453 = vld [vmem:[%s7 + $0x8] sm:$0xff]
        %v1454 = vld [vmem:[%s7 + $0x10] sm:$0xff]
        %v1455 = vld [vmem:[%s7 + $0x18] sm:$0xff]
        %v1456 = vld [vmem:[%s8] sm:$0x1]
        %v1458 = vlaneseq
        %v1459 = vshrl.u32 %v1458, 7
        %v1460 = vsub.s32 0, %v1459
        %v1461 = vrot.slane %v1456, %v1460
        %v1464 = vsel %vm385, %v1451, 0
        %1466 = vmatprep.subr.mxu0 0.0
        %1467 = vmatpush1.msra.mxu0 %v1452
        %1468 = vmatprep.subr.mxu0 0.0
        %1469 = vmatpush1.msra.mxu0 %v1453
        %1470 = vmatprep.subr.mxu0 0.0
        %1471 = vmatpush1.msra.mxu0 %v1454
        %1472 = vmatprep.subr.mxu0 0.0
        %1473 = vmatpush1.msra.mxu0 %v1455
        %1474 = vmatprep.subr.mxu0 0.0
        %1475 = vmatpush1.msra.mxu0 0.0
        %1476 = vmatprep.subr.mxu0 0.0
        %1477 = vmatpush1.msra.mxu0 0.0
        %1478 = vmatprep.subr.mxu0 0.0
        %1479 = vmatpush1.msra.mxu0 0.0
        %1480 = vmatprep.subr.mxu0 0.0
        %1481 = vmatpush1.msra.mxu0 0.0
        %1482 = vmatprep.subr.mxu0 0.0
        %1483 = vmatpush1.msra.mxu0 0.0
        %1484 = vmatprep.subr.mxu0 0.0
        %1485 = vmatpush1.msra.mxu0 0.0
        %1486 = vmatprep.subr.mxu0 0.0
        %1487 = vmatpush1.msra.mxu0 0.0
        %1488 = vmatprep.subr.mxu0 0.0
        %1489 = vmatpush1.msra.mxu0 0.0
        %1490 = vmatprep.subr.mxu0 0.0
        %1491 = vmatpush1.msra.mxu0 0.0
        %1492 = vmatprep.subr.mxu0 0.0
        %1493 = vmatpush1.msra.mxu0 0.0
        %1494 = vmatprep.subr.mxu0 0.0
        %1495 = vmatpush1.msra.mxu0 0.0
        %1496 = vmatprep.subr.mxu0 0.0
        %1497 = vmatpush1.msra.mxu0 0.0
        %1498 = vmatprep.subr.mxu0 0.0
        %1499 = vmatpush1.msra.mxu0 0.0
        %1500 = vmatprep.subr.mxu0 0.0
        %1501 = vmatpush1.msra.mxu0 0.0
        %1502 = vmatprep.subr.mxu0 0.0
        %1503 = vmatpush1.msra.mxu0 0.0
        %1504 = vmatprep.subr.mxu0 0.0
        %1505 = vmatpush1.msra.mxu0 0.0
        %1506 = vmatprep.subr.mxu0 0.0
        %1507 = vmatpush1.msra.mxu0 0.0
        %1508 = vmatprep.subr.mxu0 0.0
        %1509 = vmatpush1.msra.mxu0 0.0
        %1510 = vmatprep.subr.mxu0 0.0
        %1511 = vmatpush1.msra.mxu0 0.0
        %1512 = vmatprep.subr.mxu0 0.0
        %1513 = vmatpush1.msra.mxu0 0.0
        %1514 = vmatprep.subr.mxu0 0.0
        %1515 = vmatpush1.msra.mxu0 0.0
        %1516 = vmatprep.subr.mxu0 0.0
        %1517 = vmatpush1.msra.mxu0 0.0
        %1518 = vmatprep.subr.mxu0 0.0
        %1519 = vmatpush1.msra.mxu0 0.0
        %1520 = vmatprep.subr.mxu0 0.0
        %1521 = vmatpush1.msra.mxu0 0.0
        %1522 = vmatprep.subr.mxu0 0.0
        %1523 = vmatpush1.msra.mxu0 0.0
        %1524 = vmatprep.subr.mxu0 0.0
        %1525 = vmatpush1.msra.mxu0 0.0
        %1526 = vmatprep.subr.mxu0 0.0
        %1527 = vmatpush1.msra.mxu0 0.0
        %1528 = vmatprep.subr.mxu0 0.0
        %1529 = vmatpush1.msra.mxu0 0.0
        %1530 = vmatprep.mubr.f32.mxu0 0.0
        %1531 = vmatmul.mubr.f32.gmra.mrb[0].mxu0 %v1464
        %v1532 = vpop.f32.mrb[0].mxu0
        %v1533 = vadd.f32 %v1461, %v1532
        %v1534 = vpop.f32.mrb[0].mxu0
        %1535 = vdwg.mxu0
        %v1536 = vmul.f32 %v1533, 0.5
        %v1537 = vmul.f32 %v1533, 0.70710677
        %v1538 = verf.f32.pop %v1537
        %v1539 = vadd.f32 %v1538, 1.0
        %v1540 = vmul.f32 %v1536, %v1539
        %v1541 = vld [vmem:[%s9] sm:$0xff]
        %v1542 = vld [vmem:[%s9 + $0x8] sm:$0xff]
        %v1543 = vld [vmem:[%s9 + $0x10] sm:$0xff]
        %v1544 = vld [vmem:[%s9 + $0x18] sm:$0xff]
        %v1545 = vld [vmem:[%s9 + $0x20] sm:$0xff]
        %v1546 = vld [vmem:[%s9 + $0x28] sm:$0xff]
        %v1547 = vld [vmem:[%s9 + $0x30] sm:$0xff]
        %v1548 = vld [vmem:[%s9 + $0x38] sm:$0xff]
        %v1549 = vld [vmem:[%s10] sm:$0x1]
        %v1551 = vlaneseq
        %v1552 = vshrl.u32 %v1551, 7
        %v1553 = vsub.s32 0, %v1552
        %v1554 = vrot.slane %v1549, %v1553
        %vm1556 = vcmask 523264
        %v1558 = vsel %vm1556, %v1540, 0
        %1560 = vmatprep.subr.mxu0 0.0
        %1561 = vmatpush1.msra.mxu0 %v1541
        %1562 = vmatprep.subr.mxu0 0.0
        %1563 = vmatpush1.msra.mxu0 %v1542
        %1564 = vmatprep.subr.mxu0 0.0
        %1565 = vmatpush1.msra.mxu0 %v1543
        %1566 = vmatprep.subr.mxu0 0.0
        %1567 = vmatpush1.msra.mxu0 %v1544
        %1568 = vmatprep.subr.mxu0 0.0
        %1569 = vmatpush1.msra.mxu0 %v1545
        %1570 = vmatprep.subr.mxu0 0.0
        %1571 = vmatpush1.msra.mxu0 %v1546
        %1572 = vmatprep.subr.mxu0 0.0
        %1573 = vmatpush1.msra.mxu0 %v1547
        %1574 = vmatprep.subr.mxu0 0.0
        %1575 = vmatpush1.msra.mxu0 %v1548
        %1576 = vmatprep.subr.mxu0 0.0
        %1577 = vmatpush1.msra.mxu0 0.0
        %1578 = vmatprep.subr.mxu0 0.0
        %1579 = vmatpush1.msra.mxu0 0.0
        %1580 = vmatprep.subr.mxu0 0.0
        %1581 = vmatpush1.msra.mxu0 0.0
        %1582 = vmatprep.subr.mxu0 0.0
        %1583 = vmatpush1.msra.mxu0 0.0
        %1584 = vmatprep.subr.mxu0 0.0
        %1585 = vmatpush1.msra.mxu0 0.0
        %1586 = vmatprep.subr.mxu0 0.0
        %1587 = vmatpush1.msra.mxu0 0.0
        %1588 = vmatprep.subr.mxu0 0.0
        %1589 = vmatpush1.msra.mxu0 0.0
        %1590 = vmatprep.subr.mxu0 0.0
        %1591 = vmatpush1.msra.mxu0 0.0
        %1592 = vmatprep.subr.mxu0 0.0
        %1593 = vmatpush1.msra.mxu0 0.0
        %1594 = vmatprep.subr.mxu0 0.0
        %1595 = vmatpush1.msra.mxu0 0.0
        %1596 = vmatprep.subr.mxu0 0.0
        %1597 = vmatpush1.msra.mxu0 0.0
        %1598 = vmatprep.subr.mxu0 0.0
        %1599 = vmatpush1.msra.mxu0 0.0
        %1600 = vmatprep.subr.mxu0 0.0
        %1601 = vmatpush1.msra.mxu0 0.0
        %1602 = vmatprep.subr.mxu0 0.0
        %1603 = vmatpush1.msra.mxu0 0.0
        %1604 = vmatprep.subr.mxu0 0.0
        %1605 = vmatpush1.msra.mxu0 0.0
        %1606 = vmatprep.subr.mxu0 0.0
        %1607 = vmatpush1.msra.mxu0 0.0
        %1608 = vmatprep.subr.mxu0 0.0
        %1609 = vmatpush1.msra.mxu0 0.0
        %1610 = vmatprep.subr.mxu0 0.0
        %1611 = vmatpush1.msra.mxu0 0.0
        %1612 = vmatprep.subr.mxu0 0.0
        %1613 = vmatpush1.msra.mxu0 0.0
        %1614 = vmatprep.subr.mxu0 0.0
        %1615 = vmatpush1.msra.mxu0 0.0
        %1616 = vmatprep.subr.mxu0 0.0
        %1617 = vmatpush1.msra.mxu0 0.0
        %1618 = vmatprep.subr.mxu0 0.0
        %1619 = vmatpush1.msra.mxu0 0.0
        %1620 = vmatprep.subr.mxu0 0.0
        %1621 = vmatpush1.msra.mxu0 0.0
        %1622 = vmatprep.subr.mxu0 0.0
        %1623 = vmatpush1.msra.mxu0 0.0
        %1624 = vmatprep.mubr.f32.mxu0 0.0
        %1625 = vmatmul.mubr.f32.gmra.mrb[0].mxu0 %v1558
        %v1626 = vpop.f32.mrb[0].mxu0
        %v1627 = vadd.f32 %v1554, %v1626
        %v1628 = vpop.f32.mrb[0].mxu0
        %1629 = vdwg.mxu0
        %v1630 = vmul.f32 %v1627, 0.5
        %v1631 = vmul.f32 %v1627, 0.70710677
        %v1632 = verf.f32.pop %v1631
        %v1633 = vadd.f32 %v1632, 1.0
        %v1634 = vmul.f32 %v1630, %v1633
        %v1635 = vadd.f32 %v1634, %v1451
        %1636 = vst.msk [vmem:[%s377] sm:$0xff] %vm385, %v1635
        %s1637 = sand.u32 %s269, 1
        %s1638 = scalar_lea.sflag [#allocation4], %s1637
        %s1639 = sand.u32 %s269, 1
        %s1640 = smul.addr %s1639, 8
        %s1641 = scalar_lea.vmem [#allocation3], %s1640
        // Predicated region
        $region65: #{tpu_custom_call.1} parent=63 // pred_check
          %p1642 = pneg %p279
        $region66: #{tpu_custom_call.1} parent=63 // pred_check_branch
          %1644 = sbr.rel (%p1642) target = $region68
        $region67: #{tpu_custom_call.1} parent=63 // pred_region
          %s1646 = ssub.s32 128, 128
          %1647 = vsyncadd %s1638, %s1646
          %s1648 = smul.addr %s25, 128
          %s1649 = scalar_lea.hbm %s11, %s1648
          %s1651 = sshll.u32 %s1641, 4
          %s1652 = int_to_ptr.vmem [resolvable:$true] %s1651
          %1654 = dma.vmem_to_hbm [thread:$0]  %s1652, 128, %s1649, %s1638
        $region68: #{tpu_custom_call.1} parent=63 // pred_fallthru
          _
      $region64: #{tpu_custom_call.1} parent=5 // pred_fallthru
        _
      %p1655 = scmp.le.s32.totalorder 2, %s20
      // Predicated region
      $region69: #{tpu_custom_call.1} parent=5 // pred_check
        %p1656 = pneg %p1655
      $region70: #{tpu_custom_call.1} parent=5 // pred_check_branch
        %1658 = sbr.rel (%p1656) target = $region72
      $region71: #{tpu_custom_call.1} parent=5 // pred_region
        %s1659 = ssub.s32 %s20, 2
        // Predicated region
        $region73: #{tpu_custom_call.1} parent=71 // pred_check
          %p1660 = pneg %p285
        $region74: #{tpu_custom_call.1} parent=71 // pred_check_branch
          %1662 = sbr.rel (%p1660) target = $region76
        $region75: #{tpu_custom_call.1} parent=71 // pred_region
          %s1663 = sand.u32 %s270, 1
          %s1664 = scalar_lea.sflag [#allocation4], %s1663
          %s1665 = sand.u32 %s270, 1
          %s1666 = smul.addr %s1665, 8
          %s1667 = scalar_lea.vmem [#allocation3], %s1666
          %1668 = dma.done %s1664, 128
        $region76: #{tpu_custom_call.1} parent=71 // pred_fallthru
          _
      $region72: #{tpu_custom_call.1} parent=5 // pred_fallthru
        _
    $region6: #{tpu_custom_call.1} parent=1 // loop_footer
      %s24 = sadd.s32 1, %s20
    $region7: #{tpu_custom_call.1} parent=1 // loop_footer_branch
      %19 = sbr.rel target = $region3
    $region8: #{tpu_custom_call.1} parent=1 // loop_exit
      _
    %1669 = vsyncpa [#allocation4], 1
    %s1670 = scalar_lea.sflag [#allocation4], 1
    %1671 = vsyncpa %s1670, 1

</llo_original>
